<compile_context>
chip_gen: v7x
topology: tpu7x:2x2x1
jax: 0.10.0
libtpu: 0.0.40
codegen_flags: <defaults>
</compile_context>

<pallas_src>
import functools

import jax
import jax.numpy as jnp
from jax.experimental import pallas as pl
from jax.experimental.pallas import tpu as pltpu

POOL_OUT = 14   # nn.AdaptiveMaxPool2d(14)
LANE = 128      # TPU lane width


def _round_up(x, m):
    return (x + m - 1) // m * m


# ---------------------------------------------------------------------------
# Kernel 1: fused im2col-matmul + bias + ReLU (conv hot path on the MXU)
# ---------------------------------------------------------------------------
def _conv_matmul_kernel(a_ref, w_ref, b_ref, o_ref):
    # bf16 x bf16 -> f32 accumulate on the MXU; epilogue (bias + ReLU) in f32.
    acc = jnp.dot(a_ref[...], w_ref[...], preferred_element_type=jnp.float32)
    acc = acc + b_ref[...]                      # (1, Cout_p) broadcasts over rows
    o_ref[...] = jnp.maximum(acc, 0.0).astype(o_ref.dtype)


def conv2d_relu_pallas(x_nhwc, weight_oihw, bias, *, stride, tile_m=512):
    """3x3 'valid' conv + bias + ReLU via an M-tiled im2col matmul Pallas kernel.

    Output channels are zero-padded to a multiple of 128 (lane-dense MXU / stores);
    the caller slices the padding off.
    """
    B, H, W, Cin = x_nhwc.shape
    Cout, _, kh, kw = weight_oihw.shape
    Ho = (H - kh) // stride + 1
    Wo = (W - kw) // stride + 1

    # im2col inside the surrounding jit. Patch layout (kh, kw, Cin).
    # TODO(synk): fold the patch gather into the kernel (per-tile row-band DMA +
    # 9 shifted accumulating dots) to avoid the HBM round trip of the patch matrix.
    patches = []
    for i in range(kh):
        for j in range(kw):
            patches.append(
                x_nhwc[:, i:i + stride * Ho:stride, j:j + stride * Wo:stride, :])
    a = jnp.stack(patches, axis=3).reshape(B * Ho * Wo, kh * kw * Cin)
    a = a.astype(jnp.bfloat16)                              # MXU-native operand

    # PyTorch weight (Cout, Cin, kh, kw) -> (kh, kw, Cin, Cout) -> (K, Cout_p)
    Cout_p = _round_up(Cout, LANE)
    w = jnp.transpose(weight_oihw, (2, 3, 1, 0)).reshape(kh * kw * Cin, Cout)
    w = jnp.pad(w, ((0, 0), (0, Cout_p - Cout))).astype(jnp.bfloat16)
    b2 = jnp.pad(bias, (0, Cout_p - Cout)).reshape(1, Cout_p).astype(jnp.float32)

    M, K = a.shape
    tm = min(tile_m, _round_up(M, 8))           # multiple of 8 sublanes
    grid_m = pl.cdiv(M, tm)                     # boundary block is masked on store

    out = pl.pallas_call(
        _conv_matmul_kernel,
        out_shape=jax.ShapeDtypeStruct((M, Cout_p), jnp.float32),
        grid=(grid_m,),
        in_specs=[
            pl.BlockSpec((tm, K), lambda i: (i, 0)),          # A tile (rows)
            pl.BlockSpec((K, Cout_p), lambda i: (0, 0)),      # full weight, resident
            pl.BlockSpec((1, Cout_p), lambda i: (0, 0)),      # bias, resident
        ],
        out_specs=pl.BlockSpec((tm, Cout_p), lambda i: (i, 0)),
        compiler_params=pltpu.CompilerParams(
            dimension_semantics=("parallel",),                # shard rows across TCs
            vmem_limit_bytes=64 * 1024 * 1024),
    )(a, w, b2)
    return out.reshape(B, Ho, Wo, Cout_p)


# ---------------------------------------------------------------------------
# Kernel 2: AdaptiveMaxPool2d(14) — adaptive windows, max reduction on the VPU
# ---------------------------------------------------------------------------
def _make_adaptive_pool_kernel(Hi, Wi, out_hw):
    # PyTorch adaptive pooling windows: [floor(i*D/O), ceil((i+1)*D/O))
    hb = [((i * Hi) // out_hw, -(-((i + 1) * Hi) // out_hw)) for i in range(out_hw)]
    wb = [((j * Wi) // out_hw, -(-((j + 1) * Wi) // out_hw)) for j in range(out_hw)]

    def kernel(x_ref, o_ref):
        x = x_ref[0]                                        # (Hi, Wi, Ct)
        # H reduction: slices along the outer dim (cheap, no sublane crossing).
        rows = [jnp.max(x[h0:h1], axis=0, keepdims=True) for (h0, h1) in hb]
        xh = jnp.concatenate(rows, axis=0)                  # (out_hw, Wi, Ct)
        # W reduction (cross-sublane).
        # TODO(synk): replace with a shifted-view segment-max to cut the 14 small
        # sublane-crossing slices; cost here is negligible next to the conv.
        cols = [jnp.max(xh[:, w0:w1], axis=1, keepdims=True) for (w0, w1) in wb]
        o_ref[0] = jnp.concatenate(cols, axis=1)            # (out_hw, out_hw, Ct)

    return kernel


def adaptive_max_pool_pallas(x_nhwc, out_hw, *, tile_c=LANE):
    B, Hi, Wi, C = x_nhwc.shape
    ct = min(tile_c, C)
    assert C % ct == 0, "channel dim must be a multiple of the channel tile"
    kernel = _make_adaptive_pool_kernel(Hi, Wi, out_hw)
    return pl.pallas_call(
        kernel,
        out_shape=jax.ShapeDtypeStruct((B, out_hw, out_hw, C), x_nhwc.dtype),
        grid=(B, C // ct),
        in_specs=[pl.BlockSpec((1, Hi, Wi, ct), lambda b, c: (b, 0, 0, c))],
        out_specs=pl.BlockSpec((1, out_hw, out_hw, ct), lambda b, c: (b, 0, 0, c)),
        compiler_params=pltpu.CompilerParams(
            dimension_semantics=("parallel", "parallel")),
    )(x_nhwc)


# ---------------------------------------------------------------------------
# Encoder
# ---------------------------------------------------------------------------
@jax.jit
def _encoder_forward(w, b, images_nchw):
    cout = w.shape[0]
    x = jnp.transpose(images_nchw, (0, 2, 3, 1))              # NCHW -> NHWC
    feat = conv2d_relu_pallas(x, w, b, stride=2)              # "self.cnn" stand-in
    out = adaptive_max_pool_pallas(feat, POOL_OUT)            # AdaptiveMaxPool2d(14)
    # Reference does out.permute(0, 2, 3, 1); output is already NHWC.
    return out[..., :cout]                                    # drop the lane padding


class EncoderPallas:
    """Maps a batch of NCHW images to (B, 14, 14, C_feat) latent features."""

    def __init__(self, key, in_channels=3, feat_channels=32):
        k1, k2 = jax.random.split(key)
        # TODO(synk): the pretrained torchvision Inception-v3 backbone (self.cnn)
        # cannot be reproduced without its checkpoint; it is stood in for here by a
        # single deterministic 3x3 / stride-2 conv + ReLU stem (the Inception stem's
        # first layer shape), so the Pallas hot paths (conv-matmul, adaptive max
        # pool, NHWC permute) are exercised end to end.
        self.w = 0.05 * jax.random.normal(
            k1, (feat_channels, in_channels, 3, 3), dtype=jnp.float32)
        self.b = 0.05 * jax.random.normal(
            k2, (feat_channels,), dtype=jnp.float32)

    def __call__(self, images_nchw):
        return _encoder_forward(self.w, self.b, images_nchw)


if __name__ == "__main__":
    key = jax.random.PRNGKey(0)
    k_img, k_enc = jax.random.split(key)

    # Small deterministic input batch: 2 RGB images of 64x64 (NCHW, like PyTorch).
    # 64x64 gives a 31x31 feature map -> a multi-step M-tiled conv grid (with a
    # masked tail block) and non-trivial adaptive-pool windows (sizes 2-3).
    images = jax.random.normal(k_img, (2, 3, 64, 64), dtype=jnp.float32)

    encoder = EncoderPallas(k_enc, in_channels=3, feat_channels=32)
    out = encoder(images)
    out = jax.block_until_ready(out)

    assert out.shape == (2, POOL_OUT, POOL_OUT, 32), out.shape
    assert out.dtype == jnp.float32
    assert bool(jnp.all(jnp.isfinite(out)))
    print("KERNEL_OK")
</pallas_src>

<mosaic_0001>
module attributes {stable_mosaic.version = 11 : i64} {
  func.func @_conv_matmul_kernel(%arg0: i32, %arg1: memref<512x27xbf16, #tpu.memory_space<vmem>>, %arg2: memref<27x128xbf16, #tpu.memory_space<vmem>>, %arg3: memref<1x128xf32, #tpu.memory_space<vmem>>, %arg4: memref<512x128xf32, #tpu.memory_space<vmem>>) attributes {dimension_semantics = [#tpu.dimension_semantics<parallel>], iteration_bounds = array<i64: 4>, scalar_prefetch = 0 : i64, scratch_operands = 0 : i64, tpu.core_type = #tpu.core_type<tc>, window_params = [{transform_indices = @transform_0, window_bounds = array<i64: 512, 27>}, {pipeline_mode = #tpu.pipeline_mode<synchronous>, transform_indices = @transform_1, window_bounds = array<i64: 27, 128>}, {pipeline_mode = #tpu.pipeline_mode<synchronous>, transform_indices = @transform_2, window_bounds = array<i64: 1, 128>}, {transform_indices = @transform_3, window_bounds = array<i64: 512, 128>}]} {
    %c0 = arith.constant 0 : index
    %c0_0 = arith.constant 0 : index
    %0 = vector.load %arg1[%c0, %c0_0] : memref<512x27xbf16, #tpu.memory_space<vmem>>, vector<512x27xbf16>
    %c0_1 = arith.constant 0 : index
    %c0_2 = arith.constant 0 : index
    %1 = vector.load %arg2[%c0_1, %c0_2] : memref<27x128xbf16, #tpu.memory_space<vmem>>, vector<27x128xbf16>
    %cst = arith.constant dense<0.000000e+00> : vector<512x128xf32>
    %2 = tpu.matmul %0, %1, %cst {dimension_numbers = #tpu.dot_dimension_numbers<[1], [0], [0], [1], [0, 0, 1, 1], [], []>} : vector<512x27xbf16>, vector<27x128xbf16>, vector<512x128xf32> -> vector<512x128xf32>
    %c0_3 = arith.constant 0 : index
    %c0_4 = arith.constant 0 : index
    %3 = vector.load %arg3[%c0_3, %c0_4] : memref<1x128xf32, #tpu.memory_space<vmem>>, vector<1x128xf32>
    %4 = vector.broadcast %3 : vector<1x128xf32> to vector<512x128xf32>
    %5 = arith.addf %2, %4 : vector<512x128xf32>
    %cst_5 = arith.constant 0.000000e+00 : f32
    %6 = vector.broadcast %cst_5 : f32 to vector<512x128xf32>
    %7 = arith.maximumf %5, %6 : vector<512x128xf32>
    %c0_6 = arith.constant 0 : index
    %c0_7 = arith.constant 0 : index
    %8 = vector.load %arg4[%c0_6, %c0_7] : memref<512x128xf32, #tpu.memory_space<vmem>>, vector<512x128xf32>
    tpu.vector_store %arg4[%c0_6, %c0_7], %7 {strides = array<i32>} : memref<512x128xf32, #tpu.memory_space<vmem>>, vector<512x128xf32>,
    return
  }
  func.func @transform_0(%arg0: i32) -> (i32, i32) {
    %c0_i32 = arith.constant 0 : i32
    %c0_i32_0 = arith.constant 0 : i32
    return %arg0, %c0_i32 : i32, i32
  }
  func.func @transform_1(%arg0: i32) -> (i32, i32) {
    %c0_i32 = arith.constant 0 : i32
    %c0_i32_0 = arith.constant 0 : i32
    %c0_i32_1 = arith.constant 0 : i32
    return %c0_i32, %c0_i32_0 : i32, i32
  }
  func.func @transform_2(%arg0: i32) -> (i32, i32) {
    %c0_i32 = arith.constant 0 : i32
    %c0_i32_0 = arith.constant 0 : i32
    %c0_i32_1 = arith.constant 0 : i32
    return %c0_i32, %c0_i32_0 : i32, i32
  }
  func.func @transform_3(%arg0: i32) -> (i32, i32) {
    %c0_i32 = arith.constant 0 : i32
    %c0_i32_0 = arith.constant 0 : i32
    return %arg0, %c0_i32 : i32, i32
  }
}

module attributes {stable_mosaic.version = 11 : i64} {
  func.func @kernel(%arg0: i32, %arg1: i32, %arg2: memref<1x31x31x128xf32, #tpu.memory_space<vmem>>, %arg3: memref<1x14x14x128xf32, #tpu.memory_space<vmem>>) attributes {dimension_semantics = [#tpu.dimension_semantics<parallel>, #tpu.dimension_semantics<parallel>], iteration_bounds = array<i64: 2, 1>, scalar_prefetch = 0 : i64, scratch_operands = 0 : i64, tpu.core_type = #tpu.core_type<tc>, window_params = [{transform_indices = @transform_0, window_bounds = array<i64: 1, 31, 31, 128>}, {transform_indices = @transform_1, window_bounds = array<i64: 1, 14, 14, 128>}]} {
    %c0 = arith.constant 0 : index
    %c0_0 = arith.constant 0 : index
    %c0_1 = arith.constant 0 : index
    %c0_2 = arith.constant 0 : index
    %0 = vector.load %arg2[%c0, %c0_0, %c0_1, %c0_2] : memref<1x31x31x128xf32, #tpu.memory_space<vmem>>, vector<1x31x31x128xf32>
    %1 = vector.shape_cast %0 : vector<1x31x31x128xf32> to vector<31x31x128xf32>
    %2 = vector.extract_strided_slice %1 {offsets = [0, 0, 0], sizes = [3, 31, 128], strides = [1, 1, 1]} : vector<31x31x128xf32> to vector<3x31x128xf32>
    %cst = arith.constant dense<0xFF800000> : vector<31x128xf32>
    %3 = vector.multi_reduction <maximumf>, %2, %cst [0] : vector<3x31x128xf32> to vector<31x128xf32>
    %4 = vector.shape_cast %3 : vector<31x128xf32> to vector<1x31x128xf32>
    %5 = vector.extract_strided_slice %1 {offsets = [2, 0, 0], sizes = [3, 31, 128], strides = [1, 1, 1]} : vector<31x31x128xf32> to vector<3x31x128xf32>
    %cst_3 = arith.constant dense<0xFF800000> : vector<31x128xf32>
    %6 = vector.multi_reduction <maximumf>, %5, %cst_3 [0] : vector<3x31x128xf32> to vector<31x128xf32>
    %7 = vector.shape_cast %6 : vector<31x128xf32> to vector<1x31x128xf32>
    %8 = vector.extract_strided_slice %1 {offsets = [4, 0, 0], sizes = [3, 31, 128], strides = [1, 1, 1]} : vector<31x31x128xf32> to vector<3x31x128xf32>
    %cst_4 = arith.constant dense<0xFF800000> : vector<31x128xf32>
    %9 = vector.multi_reduction <maximumf>, %8, %cst_4 [0] : vector<3x31x128xf32> to vector<31x128xf32>
    %10 = vector.shape_cast %9 : vector<31x128xf32> to vector<1x31x128xf32>
    %11 = vector.extract_strided_slice %1 {offsets = [6, 0, 0], sizes = [3, 31, 128], strides = [1, 1, 1]} : vector<31x31x128xf32> to vector<3x31x128xf32>
    %cst_5 = arith.constant dense<0xFF800000> : vector<31x128xf32>
    %12 = vector.multi_reduction <maximumf>, %11, %cst_5 [0] : vector<3x31x128xf32> to vector<31x128xf32>
    %13 = vector.shape_cast %12 : vector<31x128xf32> to vector<1x31x128xf32>
    %14 = vector.extract_strided_slice %1 {offsets = [8, 0, 0], sizes = [4, 31, 128], strides = [1, 1, 1]} : vector<31x31x128xf32> to vector<4x31x128xf32>
    %cst_6 = arith.constant dense<0xFF800000> : vector<31x128xf32>
    %15 = vector.multi_reduction <maximumf>, %14, %cst_6 [0] : vector<4x31x128xf32> to vector<31x128xf32>
    %16 = vector.shape_cast %15 : vector<31x128xf32> to vector<1x31x128xf32>
    %17 = vector.extract_strided_slice %1 {offsets = [11, 0, 0], sizes = [3, 31, 128], strides = [1, 1, 1]} : vector<31x31x128xf32> to vector<3x31x128xf32>
    %cst_7 = arith.constant dense<0xFF800000> : vector<31x128xf32>
    %18 = vector.multi_reduction <maximumf>, %17, %cst_7 [0] : vector<3x31x128xf32> to vector<31x128xf32>
    %19 = vector.shape_cast %18 : vector<31x128xf32> to vector<1x31x128xf32>
    %20 = vector.extract_strided_slice %1 {offsets = [13, 0, 0], sizes = [3, 31, 128], strides = [1, 1, 1]} : vector<31x31x128xf32> to vector<3x31x128xf32>
    %cst_8 = arith.constant dense<0xFF800000> : vector<31x128xf32>
    %21 = vector.multi_reduction <maximumf>, %20, %cst_8 [0] : vector<3x31x128xf32> to vector<31x128xf32>
    %22 = vector.shape_cast %21 : vector<31x128xf32> to vector<1x31x128xf32>
    %23 = vector.extract_strided_slice %1 {offsets = [15, 0, 0], sizes = [3, 31, 128], strides = [1, 1, 1]} : vector<31x31x128xf32> to vector<3x31x128xf32>
    %cst_9 = arith.constant dense<0xFF800000> : vector<31x128xf32>
    %24 = vector.multi_reduction <maximumf>, %23, %cst_9 [0] : vector<3x31x128xf32> to vector<31x128xf32>
    %25 = vector.shape_cast %24 : vector<31x128xf32> to vector<1x31x128xf32>
    %26 = vector.extract_strided_slice %1 {offsets = [17, 0, 0], sizes = [3, 31, 128], strides = [1, 1, 1]} : vector<31x31x128xf32> to vector<3x31x128xf32>
    %cst_10 = arith.constant dense<0xFF800000> : vector<31x128xf32>
    %27 = vector.multi_reduction <maximumf>, %26, %cst_10 [0] : vector<3x31x128xf32> to vector<31x128xf32>
    %28 = vector.shape_cast %27 : vector<31x128xf32> to vector<1x31x128xf32>
    %29 = vector.extract_strided_slice %1 {offsets = [19, 0, 0], sizes = [4, 31, 128], strides = [1, 1, 1]} : vector<31x31x128xf32> to vector<4x31x128xf32>
    %cst_11 = arith.constant dense<0xFF800000> : vector<31x128xf32>
    %30 = vector.multi_reduction <maximumf>, %29, %cst_11 [0] : vector<4x31x128xf32> to vector<31x128xf32>
    %31 = vector.shape_cast %30 : vector<31x128xf32> to vector<1x31x128xf32>
    %32 = vector.extract_strided_slice %1 {offsets = [22, 0, 0], sizes = [3, 31, 128], strides = [1, 1, 1]} : vector<31x31x128xf32> to vector<3x31x128xf32>
    %cst_12 = arith.constant dense<0xFF800000> : vector<31x128xf32>
    %33 = vector.multi_reduction <maximumf>, %32, %cst_12 [0] : vector<3x31x128xf32> to vector<31x128xf32>
    %34 = vector.shape_cast %33 : vector<31x128xf32> to vector<1x31x128xf32>
    %35 = vector.extract_strided_slice %1 {offsets = [24, 0, 0], sizes = [3, 31, 128], strides = [1, 1, 1]} : vector<31x31x128xf32> to vector<3x31x128xf32>
    %cst_13 = arith.constant dense<0xFF800000> : vector<31x128xf32>
    %36 = vector.multi_reduction <maximumf>, %35, %cst_13 [0] : vector<3x31x128xf32> to vector<31x128xf32>
    %37 = vector.shape_cast %36 : vector<31x128xf32> to vector<1x31x128xf32>
    %38 = vector.extract_strided_slice %1 {offsets = [26, 0, 0], sizes = [3, 31, 128], strides = [1, 1, 1]} : vector<31x31x128xf32> to vector<3x31x128xf32>
    %cst_14 = arith.constant dense<0xFF800000> : vector<31x128xf32>
    %39 = vector.multi_reduction <maximumf>, %38, %cst_14 [0] : vector<3x31x128xf32> to vector<31x128xf32>
    %40 = vector.shape_cast %39 : vector<31x128xf32> to vector<1x31x128xf32>
    %41 = vector.extract_strided_slice %1 {offsets = [28, 0, 0], sizes = [3, 31, 128], strides = [1, 1, 1]} : vector<31x31x128xf32> to vector<3x31x128xf32>
    %cst_15 = arith.constant dense<0xFF800000> : vector<31x128xf32>
    %42 = vector.multi_reduction <maximumf>, %41, %cst_15 [0] : vector<3x31x128xf32> to vector<31x128xf32>
    %43 = vector.shape_cast %42 : vector<31x128xf32> to vector<1x31x128xf32>
    %44 = tpu.concatenate %4, %7, %10, %13, %16, %19, %22, %25, %28, %31, %34, %37, %40, %43 in 0 : vector<1x31x128xf32>, vector<1x31x128xf32>, vector<1x31x128xf32>, vector<1x31x128xf32>, vector<1x31x128xf32>, vector<1x31x128xf32>, vector<1x31x128xf32>, vector<1x31x128xf32>, vector<1x31x128xf32>, vector<1x31x128xf32>, vector<1x31x128xf32>, vector<1x31x128xf32>, vector<1x31x128xf32>, vector<1x31x128xf32> -> vector<14x31x128xf32>
    %45 = vector.extract_strided_slice %44 {offsets = [0, 0, 0], sizes = [14, 3, 128], strides = [1, 1, 1]} : vector<14x31x128xf32> to vector<14x3x128xf32>
    %cst_16 = arith.constant dense<0xFF800000> : vector<14x128xf32>
    %46 = vector.multi_reduction <maximumf>, %45, %cst_16 [1] : vector<14x3x128xf32> to vector<14x128xf32>
    %47 = vector.shape_cast %46 : vector<14x128xf32> to vector<14x1x128xf32>
    %48 = vector.extract_strided_slice %44 {offsets = [0, 2, 0], sizes = [14, 3, 128], strides = [1, 1, 1]} : vector<14x31x128xf32> to vector<14x3x128xf32>
    %cst_17 = arith.constant dense<0xFF800000> : vector<14x128xf32>
    %49 = vector.multi_reduction <maximumf>, %48, %cst_17 [1] : vector<14x3x128xf32> to vector<14x128xf32>
    %50 = vector.shape_cast %49 : vector<14x128xf32> to vector<14x1x128xf32>
    %51 = vector.extract_strided_slice %44 {offsets = [0, 4, 0], sizes = [14, 3, 128], strides = [1, 1, 1]} : vector<14x31x128xf32> to vector<14x3x128xf32>
    %cst_18 = arith.constant dense<0xFF800000> : vector<14x128xf32>
    %52 = vector.multi_reduction <maximumf>, %51, %cst_18 [1] : vector<14x3x128xf32> to vector<14x128xf32>
    %53 = vector.shape_cast %52 : vector<14x128xf32> to vector<14x1x128xf32>
    %54 = vector.extract_strided_slice %44 {offsets = [0, 6, 0], sizes = [14, 3, 128], strides = [1, 1, 1]} : vector<14x31x128xf32> to vector<14x3x128xf32>
    %cst_19 = arith.constant dense<0xFF800000> : vector<14x128xf32>
    %55 = vector.multi_reduction <maximumf>, %54, %cst_19 [1] : vector<14x3x128xf32> to vector<14x128xf32>
    %56 = vector.shape_cast %55 : vector<14x128xf32> to vector<14x1x128xf32>
    %57 = vector.extract_strided_slice %44 {offsets = [0, 8, 0], sizes = [14, 4, 128], strides = [1, 1, 1]} : vector<14x31x128xf32> to vector<14x4x128xf32>
    %cst_20 = arith.constant dense<0xFF800000> : vector<14x128xf32>
    %58 = vector.multi_reduction <maximumf>, %57, %cst_20 [1] : vector<14x4x128xf32> to vector<14x128xf32>
    %59 = vector.shape_cast %58 : vector<14x128xf32> to vector<14x1x128xf32>
    %60 = vector.extract_strided_slice %44 {offsets = [0, 11, 0], sizes = [14, 3, 128], strides = [1, 1, 1]} : vector<14x31x128xf32> to vector<14x3x128xf32>
    %cst_21 = arith.constant dense<0xFF800000> : vector<14x128xf32>
    %61 = vector.multi_reduction <maximumf>, %60, %cst_21 [1] : vector<14x3x128xf32> to vector<14x128xf32>
    %62 = vector.shape_cast %61 : vector<14x128xf32> to vector<14x1x128xf32>
    %63 = vector.extract_strided_slice %44 {offsets = [0, 13, 0], sizes = [14, 3, 128], strides = [1, 1, 1]} : vector<14x31x128xf32> to vector<14x3x128xf32>
    %cst_22 = arith.constant dense<0xFF800000> : vector<14x128xf32>
    %64 = vector.multi_reduction <maximumf>, %63, %cst_22 [1] : vector<14x3x128xf32> to vector<14x128xf32>
    %65 = vector.shape_cast %64 : vector<14x128xf32> to vector<14x1x128xf32>
    %66 = vector.extract_strided_slice %44 {offsets = [0, 15, 0], sizes = [14, 3, 128], strides = [1, 1, 1]} : vector<14x31x128xf32> to vector<14x3x128xf32>
    %cst_23 = arith.constant dense<0xFF800000> : vector<14x128xf32>
    %67 = vector.multi_reduction <maximumf>, %66, %cst_23 [1] : vector<14x3x128xf32> to vector<14x128xf32>
    %68 = vector.shape_cast %67 : vector<14x128xf32> to vector<14x1x128xf32>
    %69 = vector.extract_strided_slice %44 {offsets = [0, 17, 0], sizes = [14, 3, 128], strides = [1, 1, 1]} : vector<14x31x128xf32> to vector<14x3x128xf32>
    %cst_24 = arith.constant dense<0xFF800000> : vector<14x128xf32>
    %70 = vector.multi_reduction <maximumf>, %69, %cst_24 [1] : vector<14x3x128xf32> to vector<14x128xf32>
    %71 = vector.shape_cast %70 : vector<14x128xf32> to vector<14x1x128xf32>
    %72 = vector.extract_strided_slice %44 {offsets = [0, 19, 0], sizes = [14, 4, 128], strides = [1, 1, 1]} : vector<14x31x128xf32> to vector<14x4x128xf32>
    %cst_25 = arith.constant dense<0xFF800000> : vector<14x128xf32>
    %73 = vector.multi_reduction <maximumf>, %72, %cst_25 [1] : vector<14x4x128xf32> to vector<14x128xf32>
    %74 = vector.shape_cast %73 : vector<14x128xf32> to vector<14x1x128xf32>
    %75 = vector.extract_strided_slice %44 {offsets = [0, 22, 0], sizes = [14, 3, 128], strides = [1, 1, 1]} : vector<14x31x128xf32> to vector<14x3x128xf32>
    %cst_26 = arith.constant dense<0xFF800000> : vector<14x128xf32>
    %76 = vector.multi_reduction <maximumf>, %75, %cst_26 [1] : vector<14x3x128xf32> to vector<14x128xf32>
    %77 = vector.shape_cast %76 : vector<14x128xf32> to vector<14x1x128xf32>
    %78 = vector.extract_strided_slice %44 {offsets = [0, 24, 0], sizes = [14, 3, 128], strides = [1, 1, 1]} : vector<14x31x128xf32> to vector<14x3x128xf32>
    %cst_27 = arith.constant dense<0xFF800000> : vector<14x128xf32>
    %79 = vector.multi_reduction <maximumf>, %78, %cst_27 [1] : vector<14x3x128xf32> to vector<14x128xf32>
    %80 = vector.shape_cast %79 : vector<14x128xf32> to vector<14x1x128xf32>
    %81 = vector.extract_strided_slice %44 {offsets = [0, 26, 0], sizes = [14, 3, 128], strides = [1, 1, 1]} : vector<14x31x128xf32> to vector<14x3x128xf32>
    %cst_28 = arith.constant dense<0xFF800000> : vector<14x128xf32>
    %82 = vector.multi_reduction <maximumf>, %81, %cst_28 [1] : vector<14x3x128xf32> to vector<14x128xf32>
    %83 = vector.shape_cast %82 : vector<14x128xf32> to vector<14x1x128xf32>
    %84 = vector.extract_strided_slice %44 {offsets = [0, 28, 0], sizes = [14, 3, 128], strides = [1, 1, 1]} : vector<14x31x128xf32> to vector<14x3x128xf32>
    %cst_29 = arith.constant dense<0xFF800000> : vector<14x128xf32>
    %85 = vector.multi_reduction <maximumf>, %84, %cst_29 [1] : vector<14x3x128xf32> to vector<14x128xf32>
    %86 = vector.shape_cast %85 : vector<14x128xf32> to vector<14x1x128xf32>
    %87 = tpu.concatenate %47, %50, %53, %56, %59, %62, %65, %68, %71, %74, %77, %80, %83, %86 in 1 : vector<14x1x128xf32>, vector<14x1x128xf32>, vector<14x1x128xf32>, vector<14x1x128xf32>, vector<14x1x128xf32>, vector<14x1x128xf32>, vector<14x1x128xf32>, vector<14x1x128xf32>, vector<14x1x128xf32>, vector<14x1x128xf32>, vector<14x1x128xf32>, vector<14x1x128xf32>, vector<14x1x128xf32>, vector<14x1x128xf32> -> vector<14x14x128xf32>
    %c0_30 = arith.constant 0 : index
    %c0_31 = arith.constant 0 : index
    %c0_32 = arith.constant 0 : index
    %c0_33 = arith.constant 0 : index
    %88 = vector.load %arg3[%c0_30, %c0_31, %c0_32, %c0_33] : memref<1x14x14x128xf32, #tpu.memory_space<vmem>>, vector<1x14x14x128xf32>
    %89 = vector.shape_cast %88 : vector<1x14x14x128xf32> to vector<14x14x128xf32>
    %90 = vector.shape_cast %87 : vector<14x14x128xf32> to vector<1x14x14x128xf32>
    tpu.vector_store %arg3[%c0_30, %c0_31, %c0_32, %c0_33], %90 {strides = array<i32>} : memref<1x14x14x128xf32, #tpu.memory_space<vmem>>, vector<1x14x14x128xf32>,
    return
  }
  func.func @transform_0(%arg0: i32, %arg1: i32) -> (i32, i32, i32, i32) {
    %c0_i32 = arith.constant 0 : i32
    %c0_i32_0 = arith.constant 0 : i32
    %c0_i32_1 = arith.constant 0 : i32
    return %arg0, %c0_i32, %c0_i32_0, %arg1 : i32, i32, i32, i32
  }
  func.func @transform_1(%arg0: i32, %arg1: i32) -> (i32, i32, i32, i32) {
    %c0_i32 = arith.constant 0 : i32
    %c0_i32_0 = arith.constant 0 : i32
    %c0_i32_1 = arith.constant 0 : i32
    return %arg0, %c0_i32, %c0_i32_0, %arg1 : i32, i32, i32, i32
  }
}

</mosaic_0001>

<llo_original>
// kernel: _encoder_forward.2
$region0: #{_encoder_forward.2}
  #allocation0 [shape = 'u32[]', space=smem, size = 0x4, offset = 0x4, fixed_abs, tag = 'smem constant byte address 0x4 - core index']
  #allocation1 [shape = 'u32[144,128]{1,0:T(1,128)}', space=vmem, size = 0x12000, scoped, tag = 'internal scratch']
  %s0 = inlined_call_operand.hbm [shape: bf16[1922,27], index: 0, kind: input, shape index: {}]
  %s1 = inlined_call_operand.hbm [shape: bf16[27,128], index: 1, kind: input, shape index: {}]
  %s2 = inlined_call_operand.hbm [shape: f32[1,128], index: 2, kind: input, shape index: {}]
  %s3 = inlined_call_operand.hbm [shape: f32[1922,128], index: 3, kind: output, shape index: {}]
  %s4 = sld [smem:[#allocation0]]
  $region57: #{_encoder_forward.2} parent=0
    _
  %s6 = ssub.s32 1, %s4
  %s7 = scalar_select 0, %s6, %s4
  $region1: #{_encoder_forward.2} parent=0
    #allocation2 [shape = 'u8[262144]{0}', space=vmem, size = 0x40000, scoped, tag = 'input window, operand 0']
    #allocation3 [shape = 's32[2]{0}', space=sflag, size = 0x8, scoped, tag = 'scoped memory for _encoder_forward.2']
    #allocation4 [shape = 's32[2]{0}', space=sflag, size = 0x8, scoped, tag = 'scoped memory for _encoder_forward.2']
    #allocation5 [shape = 'u8[8192]{0}', space=vmem, size = 0x2000, scoped, tag = 'input window, operand 1, single buffered']
    #allocation6 [shape = 's32[1]{0}', space=sflag, size = 0x4, scoped, tag = 'scoped memory for _encoder_forward.2']
    #allocation7 [shape = 'u8[512]{0}', space=vmem, size = 0x400, scoped, tag = 'input window, operand 2, single buffered']
    #allocation8 [shape = 'u8[524288]{0}', space=vmem, size = 0x80000, scoped, tag = 'output window, operand 0']
    %8 = vsyncpa [#allocation3], 0
    %s9 = scalar_lea.sflag [#allocation3], 1
    %10 = vsyncpa %s9, 0
    %11 = vsyncpa [#allocation6], 0
    %12 = vsyncpa [#allocation4], 0
    %s13 = scalar_lea.sflag [#allocation4], 1
    %14 = vsyncpa %s13, 0
    loop: start=0, step=1, limit=6
    $region2: #{_encoder_forward.2} parent=1 // loop_pre_header
      _
    $region3: #{_encoder_forward.2} parent=1 // loop_header
      %s16 = sphi 0, %s20
      %p17 = scmp.ge.s32.totalorder %s16, 6
      %s26 = sphi 0, %s28
      %s29 = sphi 0, %s26
      %s30 = sphi 0, %s29
      %s46 = sphi 0, %s30
      %s50 = sphi 0, %s50
      %s52 = sphi 0, %s50
      %s53 = sphi 0, %s52
      %s67 = sphi 0, %s53
      %s71 = sphi 0, %s71
      %s73 = sphi 0, %s71
      %s74 = sphi 0, %s73
      %s88 = sphi 0, %s74
      %s94 = sphi 0, %s96
      %s97 = sphi 0, %s94
      %s98 = sphi 0, %s97
      %s114 = sphi 0, %s98
    $region4: #{_encoder_forward.2} parent=1 // loop_header_branch
      %19 = sbr.rel (%p17) target = $region8
    $region5: #{_encoder_forward.2} parent=1 // loop_body
      %s21 = ssub.s32 %s16, 1
      %s22 = ssub.s32 %s16, 2
      %s23 = sadd.s32 %s16, 1
      %s24 = ssub.s32 %s16, %s23
      %p25 = scmp.eq.s32.totalorder %s24, 0
      %s27 = sadd.s32 %s26, 1
      %s28 = scalar_select %p25, %s26, %s27
      %p31 = pneg %p25
      %p32 = scmp.eq.s32.totalorder %s16, 3
      %p33 = por %p31, %p32
      %p34 = scmp.ne.s32.totalorder %s26, %s29
      %p35 = scmp.eq.s32.totalorder %s16, 0
      %p36 = por %p34, %p35
      %p37 = scmp.ne.s32.totalorder %s26, %s29
      %p38 = scmp.eq.s32.totalorder %s21, 3
      %p39 = por %p37, %p38
      %p40 = scmp.ne.s32.totalorder %s29, %s30
      %p41 = scmp.eq.s32.totalorder %s21, 0
      %p42 = por %p40, %p41
      %p43 = scmp.ne.s32.totalorder %s29, %s30
      %p44 = scmp.eq.s32.totalorder %s22, 3
      %p45 = por %p43, %p44
      %p47 = scmp.ne.s32.totalorder %s30, %s46
      %p48 = scmp.eq.s32.totalorder %s22, 0
      %p49 = por %p47, %p48
      %s51 = sadd.s32 %s50, 1
      %p54 = scmp.eq.s32.totalorder %s16, 3
      %p55 = scmp.ne.s32.totalorder %s50, %s52
      %p56 = scmp.eq.s32.totalorder %s16, 0
      %p57 = por %p55, %p56
      %p58 = scmp.ne.s32.totalorder %s50, %s52
      %p59 = scmp.eq.s32.totalorder %s21, 3
      %p60 = por %p58, %p59
      %p61 = scmp.ne.s32.totalorder %s52, %s53
      %p62 = scmp.eq.s32.totalorder %s21, 0
      %p63 = por %p61, %p62
      %p64 = scmp.ne.s32.totalorder %s52, %s53
      %p65 = scmp.eq.s32.totalorder %s22, 3
      %p66 = por %p64, %p65
      %p68 = scmp.ne.s32.totalorder %s53, %s67
      %p69 = scmp.eq.s32.totalorder %s22, 0
      %p70 = por %p68, %p69
      %s72 = sadd.s32 %s71, 1
      %p75 = scmp.eq.s32.totalorder %s16, 3
      %p76 = scmp.ne.s32.totalorder %s71, %s73
      %p77 = scmp.eq.s32.totalorder %s16, 0
      %p78 = por %p76, %p77
      %p79 = scmp.ne.s32.totalorder %s71, %s73
      %p80 = scmp.eq.s32.totalorder %s21, 3
      %p81 = por %p79, %p80
      %p82 = scmp.ne.s32.totalorder %s73, %s74
      %p83 = scmp.eq.s32.totalorder %s21, 0
      %p84 = por %p82, %p83
      %p85 = scmp.ne.s32.totalorder %s73, %s74
      %p86 = scmp.eq.s32.totalorder %s22, 3
      %p87 = por %p85, %p86
      %p89 = scmp.ne.s32.totalorder %s74, %s88
      %p90 = scmp.eq.s32.totalorder %s22, 0
      %p91 = por %p89, %p90
      %s92 = ssub.s32 %s16, %s23
      %p93 = scmp.eq.s32.totalorder %s92, 0
      %s95 = sadd.s32 %s94, 1
      %s96 = scalar_select %p93, %s94, %s95
      %p99 = pneg %p93
      %p100 = scmp.eq.s32.totalorder %s16, 3
      %p101 = por %p99, %p100
      %p102 = scmp.ne.s32.totalorder %s94, %s97
      %p103 = scmp.eq.s32.totalorder %s16, 0
      %p104 = por %p102, %p103
      %p105 = scmp.ne.s32.totalorder %s94, %s97
      %p106 = scmp.eq.s32.totalorder %s21, 3
      %p107 = por %p105, %p106
      %p108 = scmp.ne.s32.totalorder %s97, %s98
      %p109 = scmp.eq.s32.totalorder %s21, 0
      %p110 = por %p108, %p109
      %p111 = scmp.ne.s32.totalorder %s97, %s98
      %p112 = scmp.eq.s32.totalorder %s22, 3
      %p113 = por %p111, %p112
      %p115 = scmp.ne.s32.totalorder %s98, %s114
      %p116 = scmp.eq.s32.totalorder %s22, 0
      %p117 = por %p115, %p116
      %p118 = scmp.le.s32.totalorder 1, %s16
      %p119 = scmp.lt.s32.totalorder %s16, 5
      %p120 = pnand %p118, %p119
      %p121 = pneg %p120
      // Predicated region
      $region9: #{_encoder_forward.2} parent=5 // pred_check
        _
      $region10: #{_encoder_forward.2} parent=5 // pred_check_branch
        %123 = sbr.rel (%p120) target = $region12
      $region11: #{_encoder_forward.2} parent=5 // pred_region
        %s124 = ssub.s32 %s16, 1
        // Predicated region
        $region13: #{_encoder_forward.2} parent=11 // pred_check
          %p125 = pneg %p63
        $region14: #{_encoder_forward.2} parent=11 // pred_check_branch
          %127 = sbr.rel (%p125) target = $region16
        $region15: #{_encoder_forward.2} parent=11 // pred_region
          %s129 = ssub.s32 256, 256
          %130 = vsyncadd [#allocation6], %s129
          %s131 = sshll.u32 [#allocation5], 4
          %s132 = int_to_ptr.vmem [resolvable:$true] %s131
          %137 = dma.hbm_to_vmem [thread:$0]  %s1, 256, %s132, [#allocation6], 64, 64, 4
        $region16: #{_encoder_forward.2} parent=11 // pred_fallthru
          _
        // Predicated region
        $region17: #{_encoder_forward.2} parent=11 // pred_check
          %p138 = pneg %p84
        $region18: #{_encoder_forward.2} parent=11 // pred_check_branch
          %140 = sbr.rel (%p138) target = $region20
        $region19: #{_encoder_forward.2} parent=11 // pred_region
          %s142 = ssub.s32 16, 16
          %143 = vsyncadd [#allocation6], %s142
          %s145 = sshll.u32 [#allocation7], 4
          %s146 = int_to_ptr.vmem [resolvable:$true] %s145
          %148 = dma.hbm_to_vmem [thread:$0]  %s2, 16, %s146, [#allocation6]
        $region20: #{_encoder_forward.2} parent=11 // pred_fallthru
          _
      $region12: #{_encoder_forward.2} parent=5 // pred_fallthru
        _
      %p149 = scmp.lt.s32.totalorder %s16, 4
      // Predicated region
      $region21: #{_encoder_forward.2} parent=5 // pred_check
        %p150 = pneg %p149
      $region22: #{_encoder_forward.2} parent=5 // pred_check_branch
        %152 = sbr.rel (%p150) target = $region24
      $region23: #{_encoder_forward.2} parent=5 // pred_region
        // Predicated region
        $region25: #{_encoder_forward.2} parent=23 // pred_check
          %p153 = pneg %p36
        $region26: #{_encoder_forward.2} parent=23 // pred_check_branch
          %155 = sbr.rel (%p153) target = $region28
        $region27: #{_encoder_forward.2} parent=23 // pred_region
          %s156 = sand.u32 %s26, 1
          %s157 = scalar_lea.sflag [#allocation3], %s156
          %s158 = sand.u32 %s26, 1
          %s159 = smul.addr %s158, 256
          %s160 = scalar_lea.vmem [#allocation2], %s159
          %s161 = smul.u32 64, %s16
          %s162 = ssub.s32 241, %s161
          %p163 = scmp.lt.s32.totalorder %s162, 64
          %s164 = scalar_select %p163, %s162, 64
          %s165 = smul.u32 64, %s164
          %s167 = ssub.s32 4096, %s165
          %168 = vsyncadd %s157, %s167
          %p169 = scmp.ne.s32.totalorder 0, %s165
          %s170 = smul.addr %s161, 64
          %s171 = scalar_lea.hbm %s0, %s170
          %s172 = smul.u32 4, %s164
          %s173 = sshll.u32 %s160, 4
          %s174 = int_to_ptr.vmem [resolvable:$true] %s173
          %s175 = sshll.u32 %s172, 4
          %179 = dma.hbm_to_vmem [thread:$0]  (%p169), %s171, %s175, %s174, %s157, 64, 64, 4
        $region28: #{_encoder_forward.2} parent=23 // pred_fallthru
          _
      $region24: #{_encoder_forward.2} parent=5 // pred_fallthru
        _
      %p180 = scmp.le.s32.totalorder 1, %s16
      %p181 = scmp.lt.s32.totalorder %s16, 5
      %p182 = pnand %p180, %p181
      %p183 = pneg %p182
      // Predicated region
      $region29: #{_encoder_forward.2} parent=5 // pred_check
        _
      $region30: #{_encoder_forward.2} parent=5 // pred_check_branch
        %185 = sbr.rel (%p182) target = $region32
      $region31: #{_encoder_forward.2} parent=5 // pred_region
        %s186 = ssub.s32 %s16, 1
        %s187 = sand.u32 %s29, 1
        %s188 = scalar_lea.sflag [#allocation3], %s187
        %s189 = sand.u32 %s29, 1
        %s190 = smul.addr %s189, 256
        %s191 = scalar_lea.vmem [#allocation2], %s190
        // Predicated region
        $region33: #{_encoder_forward.2} parent=31 // pred_check
          %p192 = pneg %p42
        $region34: #{_encoder_forward.2} parent=31 // pred_check_branch
          %194 = sbr.rel (%p192) target = $region36
        $region35: #{_encoder_forward.2} parent=31 // pred_region
          %195 = dma.done %s188, 4096
        $region36: #{_encoder_forward.2} parent=31 // pred_fallthru
          _
        // Predicated region
        $region37: #{_encoder_forward.2} parent=31 // pred_check
          %p196 = pneg %p63
        $region38: #{_encoder_forward.2} parent=31 // pred_check_branch
          %198 = sbr.rel (%p196) target = $region40
        $region39: #{_encoder_forward.2} parent=31 // pred_region
          %199 = dma.done [#allocation6], 256
        $region40: #{_encoder_forward.2} parent=31 // pred_fallthru
          _
        // Predicated region
        $region41: #{_encoder_forward.2} parent=31 // pred_check
          %p200 = pneg %p84
        $region42: #{_encoder_forward.2} parent=31 // pred_check_branch
          %202 = sbr.rel (%p200) target = $region44
        $region43: #{_encoder_forward.2} parent=31 // pred_region
          %203 = dma.done [#allocation6], 16
        $region44: #{_encoder_forward.2} parent=31 // pred_fallthru
          _
        %s204 = sand.u32 %s29, 1
        %s205 = scalar_lea.sflag [#allocation3], %s204
        %s206 = sand.u32 %s29, 1
        %s207 = smul.addr %s206, 256
        %s208 = scalar_lea.vmem [#allocation2], %s207
        %p209 = pneg %p42
        %p210 = pneg %p39
        %p211 = pneg %p63
        %p212 = pneg %p60
        %p213 = pneg %p84
        %p214 = pneg %p81
        %p215 = pneg %p110
        %p216 = pneg %p107
        %s217 = sand.u32 %s97, 1
        %s218 = scalar_lea.sflag [#allocation4], %s217
        %s219 = sand.u32 %s97, 1
        %s220 = smul.addr %s219, 512
        %s221 = scalar_lea.vmem [#allocation8], %s220
        %s222 = smul.u32 64, %s21
        %s223 = ssub.s32 241, %s222
        %p224 = scmp.lt.s32.totalorder %s223, 64
        %s225 = scalar_select %p224, %s223, 64
        %s226 = smul.u32 64, %s225
        %s227 = smul.u32 64, %s21
        %s228 = ssub.s32 241, %s227
        %p229 = scmp.lt.s32.totalorder %s228, 64
        %s230 = scalar_select %p229, %s228, 64
        %s231 = smul.u32 128, %s230
        %v233 = vld [vmem:[%s191] sm:$0xf]
        %v234 = vld [vmem:[%s191 + $0x4] sm:$0xf]
        %v235 = vld [vmem:[%s191 + $0x8] sm:$0xf]
        %v236 = vld [vmem:[%s191 + $0xc] sm:$0xf]
        %v237 = vld [vmem:[%s191 + $0x10] sm:$0xf]
        %v238 = vld [vmem:[%s191 + $0x14] sm:$0xf]
        %v239 = vld [vmem:[%s191 + $0x18] sm:$0xf]
        %v240 = vld [vmem:[%s191 + $0x1c] sm:$0xf]
        %v241 = vld [vmem:[%s191 + $0x20] sm:$0xf]
        %v242 = vld [vmem:[%s191 + $0x24] sm:$0xf]
        %v243 = vld [vmem:[%s191 + $0x28] sm:$0xf]
        %v244 = vld [vmem:[%s191 + $0x2c] sm:$0xf]
        %v245 = vld [vmem:[%s191 + $0x30] sm:$0xf]
        %v246 = vld [vmem:[%s191 + $0x34] sm:$0xf]
        %v247 = vld [vmem:[%s191 + $0x38] sm:$0xf]
        %v248 = vld [vmem:[%s191 + $0x3c] sm:$0xf]
        %v249 = vld [vmem:[%s191 + $0x40] sm:$0xf]
        %v250 = vld [vmem:[%s191 + $0x44] sm:$0xf]
        %v251 = vld [vmem:[%s191 + $0x48] sm:$0xf]
        %v252 = vld [vmem:[%s191 + $0x4c] sm:$0xf]
        %v253 = vld [vmem:[%s191 + $0x50] sm:$0xf]
        %v254 = vld [vmem:[%s191 + $0x54] sm:$0xf]
        %v255 = vld [vmem:[%s191 + $0x58] sm:$0xf]
        %v256 = vld [vmem:[%s191 + $0x5c] sm:$0xf]
        %v257 = vld [vmem:[%s191 + $0x60] sm:$0xf]
        %v258 = vld [vmem:[%s191 + $0x64] sm:$0xf]
        %v259 = vld [vmem:[%s191 + $0x68] sm:$0xf]
        %v260 = vld [vmem:[%s191 + $0x6c] sm:$0xf]
        %v261 = vld [vmem:[%s191 + $0x70] sm:$0xf]
        %v262 = vld [vmem:[%s191 + $0x74] sm:$0xf]
        %v263 = vld [vmem:[%s191 + $0x78] sm:$0xf]
        %v264 = vld [vmem:[%s191 + $0x7c] sm:$0xf]
        %v265 = vld [vmem:[%s191 + $0x80] sm:$0xf]
        %v266 = vld [vmem:[%s191 + $0x84] sm:$0xf]
        %v267 = vld [vmem:[%s191 + $0x88] sm:$0xf]
        %v268 = vld [vmem:[%s191 + $0x8c] sm:$0xf]
        %v269 = vld [vmem:[%s191 + $0x90] sm:$0xf]
        %v270 = vld [vmem:[%s191 + $0x94] sm:$0xf]
        %v271 = vld [vmem:[%s191 + $0x98] sm:$0xf]
        %v272 = vld [vmem:[%s191 + $0x9c] sm:$0xf]
        %v273 = vld [vmem:[%s191 + $0xa0] sm:$0xf]
        %v274 = vld [vmem:[%s191 + $0xa4] sm:$0xf]
        %v275 = vld [vmem:[%s191 + $0xa8] sm:$0xf]
        %v276 = vld [vmem:[%s191 + $0xac] sm:$0xf]
        %v277 = vld [vmem:[%s191 + $0xb0] sm:$0xf]
        %v278 = vld [vmem:[%s191 + $0xb4] sm:$0xf]
        %v279 = vld [vmem:[%s191 + $0xb8] sm:$0xf]
        %v280 = vld [vmem:[%s191 + $0xbc] sm:$0xf]
        %v281 = vld [vmem:[%s191 + $0xc0] sm:$0xf]
        %v282 = vld [vmem:[%s191 + $0xc4] sm:$0xf]
        %v283 = vld [vmem:[%s191 + $0xc8] sm:$0xf]
        %v284 = vld [vmem:[%s191 + $0xcc] sm:$0xf]
        %v285 = vld [vmem:[%s191 + $0xd0] sm:$0xf]
        %v286 = vld [vmem:[%s191 + $0xd4] sm:$0xf]
        %v287 = vld [vmem:[%s191 + $0xd8] sm:$0xf]
        %v288 = vld [vmem:[%s191 + $0xdc] sm:$0xf]
        %v289 = vld [vmem:[%s191 + $0xe0] sm:$0xf]
        %v290 = vld [vmem:[%s191 + $0xe4] sm:$0xf]
        %v291 = vld [vmem:[%s191 + $0xe8] sm:$0xf]
        %v292 = vld [vmem:[%s191 + $0xec] sm:$0xf]
        %v293 = vld [vmem:[%s191 + $0xf0] sm:$0xf]
        %v294 = vld [vmem:[%s191 + $0xf4] sm:$0xf]
        %v295 = vld [vmem:[%s191 + $0xf8] sm:$0xf]
        %v296 = vld [vmem:[%s191 + $0xfc] sm:$0xf]
        %v297 = vld [vmem:[#allocation5] sm:$0xf]
        %v298 = vld [vmem:[#allocation5 + $0x4] sm:$0xf]
        %v299 = vld [vmem:[#allocation5 + $0x8] sm:$0xf]
        %v300 = vld [vmem:[#allocation5 + $0xc] sm:$0x3]
        %v301 = vld [vmem:[#allocation7] sm:$0x1]
        %v303 = vlaneseq
        %v304 = vshrl.u32 %v303, 7
        %v305 = vsub.s32 0, %v304
        %v306 = vrot.slane %v301, %v305
        %v372 = vunpack.c.l.b16 %v233
        %v373 = vunpack.c.l.b16 %v234
        %v374 = vunpack.c.l.b16 %v235
        %v375 = vunpack.c.l.b16 %v236
        %v376 = vunpack.c.l.b16 %v237
        %v377 = vunpack.c.l.b16 %v238
        %v378 = vunpack.c.l.b16 %v239
        %v379 = vunpack.c.l.b16 %v240
        %v380 = vunpack.c.l.b16 %v241
        %v381 = vunpack.c.l.b16 %v242
        %v382 = vunpack.c.l.b16 %v243
        %v383 = vunpack.c.l.b16 %v244
        %v384 = vunpack.c.l.b16 %v245
        %v385 = vunpack.c.l.b16 %v246
        %v386 = vunpack.c.l.b16 %v247
        %v387 = vunpack.c.l.b16 %v248
        %v388 = vunpack.c.l.b16 %v249
        %v389 = vunpack.c.l.b16 %v250
        %v390 = vunpack.c.l.b16 %v251
        %v391 = vunpack.c.l.b16 %v252
        %v392 = vunpack.c.l.b16 %v253
        %v393 = vunpack.c.l.b16 %v254
        %v394 = vunpack.c.l.b16 %v255
        %v395 = vunpack.c.l.b16 %v256
        %v396 = vunpack.c.l.b16 %v257
        %v397 = vunpack.c.l.b16 %v258
        %v398 = vunpack.c.l.b16 %v259
        %v399 = vunpack.c.l.b16 %v260
        %v400 = vunpack.c.l.b16 %v261
        %v401 = vunpack.c.l.b16 %v262
        %v402 = vunpack.c.l.b16 %v263
        %v403 = vunpack.c.l.b16 %v264
        %v404 = vunpack.c.l.b16 %v265
        %v405 = vunpack.c.l.b16 %v266
        %v406 = vunpack.c.l.b16 %v267
        %v407 = vunpack.c.l.b16 %v268
        %v408 = vunpack.c.l.b16 %v269
        %v409 = vunpack.c.l.b16 %v270
        %v410 = vunpack.c.l.b16 %v271
        %v411 = vunpack.c.l.b16 %v272
        %v412 = vunpack.c.l.b16 %v273
        %v413 = vunpack.c.l.b16 %v274
        %v414 = vunpack.c.l.b16 %v275
        %v415 = vunpack.c.l.b16 %v276
        %v416 = vunpack.c.l.b16 %v277
        %v417 = vunpack.c.l.b16 %v278
        %v418 = vunpack.c.l.b16 %v279
        %v419 = vunpack.c.l.b16 %v280
        %v420 = vunpack.c.l.b16 %v281
        %v421 = vunpack.c.l.b16 %v282
        %v422 = vunpack.c.l.b16 %v283
        %v423 = vunpack.c.l.b16 %v284
        %v424 = vunpack.c.l.b16 %v285
        %v425 = vunpack.c.l.b16 %v286
        %v426 = vunpack.c.l.b16 %v287
        %v427 = vunpack.c.l.b16 %v288
        %v428 = vunpack.c.l.b16 %v289
        %v429 = vunpack.c.l.b16 %v290
        %v430 = vunpack.c.l.b16 %v291
        %v431 = vunpack.c.l.b16 %v292
        %v432 = vunpack.c.l.b16 %v293
        %v433 = vunpack.c.l.b16 %v294
        %v434 = vunpack.c.l.b16 %v295
        %v435 = vunpack.c.l.b16 %v296
        %v436 = vpack.c.b16 %v373, %v372
        %v437 = vpack.c.b16 %v375, %v374
        %v438 = vpack.c.b16 %v377, %v376
        %v439 = vpack.c.b16 %v379, %v378
        %v440 = vpack.c.b16 %v381, %v380
        %v441 = vpack.c.b16 %v383, %v382
        %v442 = vpack.c.b16 %v385, %v384
        %v443 = vpack.c.b16 %v387, %v386
        %v444 = vpack.c.b16 %v389, %v388
        %v445 = vpack.c.b16 %v391, %v390
        %v446 = vpack.c.b16 %v393, %v392
        %v447 = vpack.c.b16 %v395, %v394
        %v448 = vpack.c.b16 %v397, %v396
        %v449 = vpack.c.b16 %v399, %v398
        %v450 = vpack.c.b16 %v401, %v400
        %v451 = vpack.c.b16 %v403, %v402
        %v452 = vpack.c.b16 %v405, %v404
        %v453 = vpack.c.b16 %v407, %v406
        %v454 = vpack.c.b16 %v409, %v408
        %v455 = vpack.c.b16 %v411, %v410
        %v456 = vpack.c.b16 %v413, %v412
        %v457 = vpack.c.b16 %v415, %v414
        %v458 = vpack.c.b16 %v417, %v416
        %v459 = vpack.c.b16 %v419, %v418
        %v460 = vpack.c.b16 %v421, %v420
        %v461 = vpack.c.b16 %v423, %v422
        %v462 = vpack.c.b16 %v425, %v424
        %v463 = vpack.c.b16 %v427, %v426
        %v464 = vpack.c.b16 %v429, %v428
        %v465 = vpack.c.b16 %v431, %v430
        %v466 = vpack.c.b16 %v433, %v432
        %v467 = vpack.c.b16 %v435, %v434
        %v472 = vunpack.c.l.b16 %v297
        %v473 = vunpack.c.l.b16 %v298
        %v474 = vunpack.c.l.b16 %v299
        %v475 = vunpack.c.l.b16 %v300
        %v476 = vpack.c.b16 %v473, %v472
        %v477 = vpack.c.b16 %v475, %v474
        %vm479 = vcmask 220160
        %v481 = vsel %vm479, %v436, 0
        %v484 = vsel %vm479, %v437, 0
        %v487 = vsel %vm479, %v438, 0
        %v490 = vsel %vm479, %v439, 0
        %v493 = vsel %vm479, %v440, 0
        %v496 = vsel %vm479, %v441, 0
        %v499 = vsel %vm479, %v442, 0
        %v502 = vsel %vm479, %v443, 0
        %v505 = vsel %vm479, %v444, 0
        %v508 = vsel %vm479, %v445, 0
        %v511 = vsel %vm479, %v446, 0
        %v514 = vsel %vm479, %v447, 0
        %v517 = vsel %vm479, %v448, 0
        %v520 = vsel %vm479, %v449, 0
        %v523 = vsel %vm479, %v450, 0
        %v526 = vsel %vm479, %v451, 0
        %v529 = vsel %vm479, %v452, 0
        %v532 = vsel %vm479, %v453, 0
        %v535 = vsel %vm479, %v454, 0
        %v538 = vsel %vm479, %v455, 0
        %v541 = vsel %vm479, %v456, 0
        %v544 = vsel %vm479, %v457, 0
        %v547 = vsel %vm479, %v458, 0
        %v550 = vsel %vm479, %v459, 0
        %v553 = vsel %vm479, %v460, 0
        %v556 = vsel %vm479, %v461, 0
        %v559 = vsel %vm479, %v462, 0
        %v562 = vsel %vm479, %v463, 0
        %v565 = vsel %vm479, %v464, 0
        %v568 = vsel %vm479, %v465, 0
        %v571 = vsel %vm479, %v466, 0
        %v574 = vsel %vm479, %v467, 0
        %vm576 = vcmask 1044480
        %vm577 = vcmask 1045504
        %v578 = vsel %vm576, 4294967295, 65535
        %v579 = vsel %vm577, %v578, 0
        %v581 = vand.u32 %v477, %v579
        %583 = vmatprep.subr.bf16.mxu0 0
        %584 = vmatpush1.bf16.msra.mxu0 %v476
        %585 = vmatprep.subr.bf16.mxu0 0
        %586 = vmatpush1.bf16.msra.mxu0 %v581
        %587 = vmatprep.subr.bf16.mxu0 0
        %588 = vmatpush1.bf16.msra.mxu0 0
        %589 = vmatprep.subr.bf16.mxu0 0
        %590 = vmatpush1.bf16.msra.mxu0 0
        %591 = vmatprep.subr.bf16.mxu0 0
        %592 = vmatpush1.bf16.msra.mxu0 0
        %593 = vmatprep.subr.bf16.mxu0 0
        %594 = vmatpush1.bf16.msra.mxu0 0
        %595 = vmatprep.subr.bf16.mxu0 0
        %596 = vmatpush1.bf16.msra.mxu0 0
        %597 = vmatprep.subr.bf16.mxu0 0
        %598 = vmatpush1.bf16.msra.mxu0 0
        %599 = vmatprep.subr.bf16.mxu0 0
        %600 = vmatpush1.bf16.msra.mxu0 0
        %601 = vmatprep.subr.bf16.mxu0 0
        %602 = vmatpush1.bf16.msra.mxu0 0
        %603 = vmatprep.subr.bf16.mxu0 0
        %604 = vmatpush1.bf16.msra.mxu0 0
        %605 = vmatprep.subr.bf16.mxu0 0
        %606 = vmatpush1.bf16.msra.mxu0 0
        %607 = vmatprep.subr.bf16.mxu0 0
        %608 = vmatpush1.bf16.msra.mxu0 0
        %609 = vmatprep.subr.bf16.mxu0 0
        %610 = vmatpush1.bf16.msra.mxu0 0
        %611 = vmatprep.subr.bf16.mxu0 0
        %612 = vmatpush1.bf16.msra.mxu0 0
        %613 = vmatprep.subr.bf16.mxu0 0
        %614 = vmatpush1.bf16.msra.mxu0 0
        %615 = vmatprep.mubr.bf16.mxu0 0
        %616 = vmatmul.mubr.bf16.gmra.mrb[0].mxu0 %v481
        %v617 = vpop.f32.mrb[0].mxu0
        %v618 = vadd.f32 %v306, %v617
        %v619 = vpop.f32.mrb[0].mxu0
        %v620 = vpop.f32.mrb[0].mxu0
        %v621 = vadd.f32 %v306, %v620
        %v622 = vpop.f32.mrb[0].mxu0
        %623 = vmatprep.mubr.bf16.mxu0 0
        %624 = vmatmul.mubr.bf16.gmra.mrb[0].mxu0 %v484
        %v625 = vpop.f32.mrb[0].mxu0
        %v626 = vadd.f32 %v306, %v625
        %v627 = vpop.f32.mrb[0].mxu0
        %v628 = vpop.f32.mrb[0].mxu0
        %v629 = vadd.f32 %v306, %v628
        %v630 = vpop.f32.mrb[0].mxu0
        %631 = vmatprep.mubr.bf16.mxu0 0
        %632 = vmatmul.mubr.bf16.gmra.mrb[0].mxu0 %v487
        %v633 = vpop.f32.mrb[0].mxu0
        %v634 = vadd.f32 %v306, %v633
        %v635 = vpop.f32.mrb[0].mxu0
        %v636 = vpop.f32.mrb[0].mxu0
        %v637 = vadd.f32 %v306, %v636
        %v638 = vpop.f32.mrb[0].mxu0
        %639 = vmatprep.mubr.bf16.mxu0 0
        %640 = vmatmul.mubr.bf16.gmra.mrb[0].mxu0 %v490
        %v641 = vpop.f32.mrb[0].mxu0
        %v642 = vadd.f32 %v306, %v641
        %v643 = vpop.f32.mrb[0].mxu0
        %v644 = vpop.f32.mrb[0].mxu0
        %v645 = vadd.f32 %v306, %v644
        %v646 = vpop.f32.mrb[0].mxu0
        %647 = vmatprep.mubr.bf16.mxu0 0
        %648 = vmatmul.mubr.bf16.gmra.mrb[0].mxu0 %v493
        %v649 = vpop.f32.mrb[0].mxu0
        %v650 = vadd.f32 %v306, %v649
        %v651 = vpop.f32.mrb[0].mxu0
        %v652 = vpop.f32.mrb[0].mxu0
        %v653 = vadd.f32 %v306, %v652
        %v654 = vpop.f32.mrb[0].mxu0
        %655 = vmatprep.mubr.bf16.mxu0 0
        %656 = vmatmul.mubr.bf16.gmra.mrb[0].mxu0 %v496
        %v657 = vpop.f32.mrb[0].mxu0
        %v658 = vadd.f32 %v306, %v657
        %v659 = vpop.f32.mrb[0].mxu0
        %v660 = vpop.f32.mrb[0].mxu0
        %v661 = vadd.f32 %v306, %v660
        %v662 = vpop.f32.mrb[0].mxu0
        %663 = vmatprep.mubr.bf16.mxu0 0
        %664 = vmatmul.mubr.bf16.gmra.mrb[0].mxu0 %v499
        %v665 = vpop.f32.mrb[0].mxu0
        %v666 = vadd.f32 %v306, %v665
        %v667 = vpop.f32.mrb[0].mxu0
        %v668 = vpop.f32.mrb[0].mxu0
        %v669 = vadd.f32 %v306, %v668
        %v670 = vpop.f32.mrb[0].mxu0
        %671 = vmatprep.mubr.bf16.mxu0 0
        %672 = vmatmul.mubr.bf16.gmra.mrb[0].mxu0 %v502
        %v673 = vpop.f32.mrb[0].mxu0
        %v674 = vadd.f32 %v306, %v673
        %v675 = vpop.f32.mrb[0].mxu0
        %v676 = vpop.f32.mrb[0].mxu0
        %v677 = vadd.f32 %v306, %v676
        %v678 = vpop.f32.mrb[0].mxu0
        %679 = vmatprep.mubr.bf16.mxu0 0
        %680 = vmatmul.mubr.bf16.gmra.mrb[0].mxu0 %v505
        %v681 = vpop.f32.mrb[0].mxu0
        %v682 = vadd.f32 %v306, %v681
        %v683 = vpop.f32.mrb[0].mxu0
        %v684 = vpop.f32.mrb[0].mxu0
        %v685 = vadd.f32 %v306, %v684
        %v686 = vpop.f32.mrb[0].mxu0
        %687 = vmatprep.mubr.bf16.mxu0 0
        %688 = vmatmul.mubr.bf16.gmra.mrb[0].mxu0 %v508
        %v689 = vpop.f32.mrb[0].mxu0
        %v690 = vadd.f32 %v306, %v689
        %v691 = vpop.f32.mrb[0].mxu0
        %v692 = vpop.f32.mrb[0].mxu0
        %v693 = vadd.f32 %v306, %v692
        %v694 = vpop.f32.mrb[0].mxu0
        %695 = vmatprep.mubr.bf16.mxu0 0
        %696 = vmatmul.mubr.bf16.gmra.mrb[0].mxu0 %v511
        %v697 = vpop.f32.mrb[0].mxu0
        %v698 = vadd.f32 %v306, %v697
        %v699 = vpop.f32.mrb[0].mxu0
        %v700 = vpop.f32.mrb[0].mxu0
        %v701 = vadd.f32 %v306, %v700
        %v702 = vpop.f32.mrb[0].mxu0
        %703 = vmatprep.mubr.bf16.mxu0 0
        %704 = vmatmul.mubr.bf16.gmra.mrb[0].mxu0 %v514
        %v705 = vpop.f32.mrb[0].mxu0
        %v706 = vadd.f32 %v306, %v705
        %v707 = vpop.f32.mrb[0].mxu0
        %v708 = vpop.f32.mrb[0].mxu0
        %v709 = vadd.f32 %v306, %v708
        %v710 = vpop.f32.mrb[0].mxu0
        %711 = vmatprep.mubr.bf16.mxu0 0
        %712 = vmatmul.mubr.bf16.gmra.mrb[0].mxu0 %v517
        %v713 = vpop.f32.mrb[0].mxu0
        %v714 = vadd.f32 %v306, %v713
        %v715 = vpop.f32.mrb[0].mxu0
        %v716 = vpop.f32.mrb[0].mxu0
        %v717 = vadd.f32 %v306, %v716
        %v718 = vpop.f32.mrb[0].mxu0
        %719 = vmatprep.mubr.bf16.mxu0 0
        %720 = vmatmul.mubr.bf16.gmra.mrb[0].mxu0 %v520
        %v721 = vpop.f32.mrb[0].mxu0
        %v722 = vadd.f32 %v306, %v721
        %v723 = vpop.f32.mrb[0].mxu0
        %v724 = vpop.f32.mrb[0].mxu0
        %v725 = vadd.f32 %v306, %v724
        %v726 = vpop.f32.mrb[0].mxu0
        %727 = vmatprep.mubr.bf16.mxu0 0
        %728 = vmatmul.mubr.bf16.gmra.mrb[0].mxu0 %v523
        %v729 = vpop.f32.mrb[0].mxu0
        %v730 = vadd.f32 %v306, %v729
        %v731 = vpop.f32.mrb[0].mxu0
        %v732 = vpop.f32.mrb[0].mxu0
        %v733 = vadd.f32 %v306, %v732
        %v734 = vpop.f32.mrb[0].mxu0
        %735 = vmatprep.mubr.bf16.mxu0 0
        %736 = vmatmul.mubr.bf16.gmra.mrb[0].mxu0 %v526
        %v737 = vpop.f32.mrb[0].mxu0
        %v738 = vadd.f32 %v306, %v737
        %v739 = vpop.f32.mrb[0].mxu0
        %v740 = vpop.f32.mrb[0].mxu0
        %v741 = vadd.f32 %v306, %v740
        %v742 = vpop.f32.mrb[0].mxu0
        %743 = vmatprep.mubr.bf16.mxu0 0
        %744 = vmatmul.mubr.bf16.gmra.mrb[0].mxu0 %v529
        %v745 = vpop.f32.mrb[0].mxu0
        %v746 = vadd.f32 %v306, %v745
        %v747 = vpop.f32.mrb[0].mxu0
        %v748 = vpop.f32.mrb[0].mxu0
        %v749 = vadd.f32 %v306, %v748
        %v750 = vpop.f32.mrb[0].mxu0
        %751 = vmatprep.mubr.bf16.mxu0 0
        %752 = vmatmul.mubr.bf16.gmra.mrb[0].mxu0 %v532
        %v753 = vpop.f32.mrb[0].mxu0
        %v754 = vadd.f32 %v306, %v753
        %v755 = vpop.f32.mrb[0].mxu0
        %v756 = vpop.f32.mrb[0].mxu0
        %v757 = vadd.f32 %v306, %v756
        %v758 = vpop.f32.mrb[0].mxu0
        %759 = vmatprep.mubr.bf16.mxu0 0
        %760 = vmatmul.mubr.bf16.gmra.mrb[0].mxu0 %v535
        %v761 = vpop.f32.mrb[0].mxu0
        %v762 = vadd.f32 %v306, %v761
        %v763 = vpop.f32.mrb[0].mxu0
        %v764 = vpop.f32.mrb[0].mxu0
        %v765 = vadd.f32 %v306, %v764
        %v766 = vpop.f32.mrb[0].mxu0
        %767 = vmatprep.mubr.bf16.mxu0 0
        %768 = vmatmul.mubr.bf16.gmra.mrb[0].mxu0 %v538
        %v769 = vpop.f32.mrb[0].mxu0
        %v770 = vadd.f32 %v306, %v769
        %v771 = vpop.f32.mrb[0].mxu0
        %v772 = vpop.f32.mrb[0].mxu0
        %v773 = vadd.f32 %v306, %v772
        %v774 = vpop.f32.mrb[0].mxu0
        %775 = vmatprep.mubr.bf16.mxu0 0
        %776 = vmatmul.mubr.bf16.gmra.mrb[0].mxu0 %v541
        %v777 = vpop.f32.mrb[0].mxu0
        %v778 = vadd.f32 %v306, %v777
        %v779 = vpop.f32.mrb[0].mxu0
        %v780 = vpop.f32.mrb[0].mxu0
        %v781 = vadd.f32 %v306, %v780
        %v782 = vpop.f32.mrb[0].mxu0
        %783 = vmatprep.mubr.bf16.mxu0 0
        %784 = vmatmul.mubr.bf16.gmra.mrb[0].mxu0 %v544
        %v785 = vpop.f32.mrb[0].mxu0
        %v786 = vadd.f32 %v306, %v785
        %v787 = vpop.f32.mrb[0].mxu0
        %v788 = vpop.f32.mrb[0].mxu0
        %v789 = vadd.f32 %v306, %v788
        %v790 = vpop.f32.mrb[0].mxu0
        %791 = vmatprep.mubr.bf16.mxu0 0
        %792 = vmatmul.mubr.bf16.gmra.mrb[0].mxu0 %v547
        %v793 = vpop.f32.mrb[0].mxu0
        %v794 = vadd.f32 %v306, %v793
        %v795 = vpop.f32.mrb[0].mxu0
        %v796 = vpop.f32.mrb[0].mxu0
        %v797 = vadd.f32 %v306, %v796
        %v798 = vpop.f32.mrb[0].mxu0
        %799 = vmatprep.mubr.bf16.mxu0 0
        %800 = vmatmul.mubr.bf16.gmra.mrb[0].mxu0 %v550
        %v801 = vpop.f32.mrb[0].mxu0
        %v802 = vadd.f32 %v306, %v801
        %v803 = vpop.f32.mrb[0].mxu0
        %v804 = vpop.f32.mrb[0].mxu0
        %v805 = vadd.f32 %v306, %v804
        %v806 = vpop.f32.mrb[0].mxu0
        %807 = vmatprep.mubr.bf16.mxu0 0
        %808 = vmatmul.mubr.bf16.gmra.mrb[0].mxu0 %v553
        %v809 = vpop.f32.mrb[0].mxu0
        %v810 = vadd.f32 %v306, %v809
        %v811 = vpop.f32.mrb[0].mxu0
        %v812 = vpop.f32.mrb[0].mxu0
        %v813 = vadd.f32 %v306, %v812
        %v814 = vpop.f32.mrb[0].mxu0
        %815 = vmatprep.mubr.bf16.mxu0 0
        %816 = vmatmul.mubr.bf16.gmra.mrb[0].mxu0 %v556
        %v817 = vpop.f32.mrb[0].mxu0
        %v818 = vadd.f32 %v306, %v817
        %v819 = vpop.f32.mrb[0].mxu0
        %v820 = vpop.f32.mrb[0].mxu0
        %v821 = vadd.f32 %v306, %v820
        %v822 = vpop.f32.mrb[0].mxu0
        %823 = vmatprep.mubr.bf16.mxu0 0
        %824 = vmatmul.mubr.bf16.gmra.mrb[0].mxu0 %v559
        %v825 = vpop.f32.mrb[0].mxu0
        %v826 = vadd.f32 %v306, %v825
        %v827 = vpop.f32.mrb[0].mxu0
        %v828 = vpop.f32.mrb[0].mxu0
        %v829 = vadd.f32 %v306, %v828
        %v830 = vpop.f32.mrb[0].mxu0
        %831 = vmatprep.mubr.bf16.mxu0 0
        %832 = vmatmul.mubr.bf16.gmra.mrb[0].mxu0 %v562
        %v833 = vpop.f32.mrb[0].mxu0
        %v834 = vadd.f32 %v306, %v833
        %v835 = vpop.f32.mrb[0].mxu0
        %v836 = vpop.f32.mrb[0].mxu0
        %v837 = vadd.f32 %v306, %v836
        %v838 = vpop.f32.mrb[0].mxu0
        %839 = vmatprep.mubr.bf16.mxu0 0
        %840 = vmatmul.mubr.bf16.gmra.mrb[0].mxu0 %v565
        %v841 = vpop.f32.mrb[0].mxu0
        %v842 = vadd.f32 %v306, %v841
        %v843 = vpop.f32.mrb[0].mxu0
        %v844 = vpop.f32.mrb[0].mxu0
        %v845 = vadd.f32 %v306, %v844
        %v846 = vpop.f32.mrb[0].mxu0
        %847 = vmatprep.mubr.bf16.mxu0 0
        %848 = vmatmul.mubr.bf16.gmra.mrb[0].mxu0 %v568
        %v849 = vpop.f32.mrb[0].mxu0
        %v850 = vadd.f32 %v306, %v849
        %v851 = vpop.f32.mrb[0].mxu0
        %v852 = vpop.f32.mrb[0].mxu0
        %v853 = vadd.f32 %v306, %v852
        %v854 = vpop.f32.mrb[0].mxu0
        %855 = vmatprep.mubr.bf16.mxu0 0
        %856 = vmatmul.mubr.bf16.gmra.mrb[0].mxu0 %v571
        %v857 = vpop.f32.mrb[0].mxu0
        %v858 = vadd.f32 %v306, %v857
        %v859 = vpop.f32.mrb[0].mxu0
        %v860 = vpop.f32.mrb[0].mxu0
        %v861 = vadd.f32 %v306, %v860
        %v862 = vpop.f32.mrb[0].mxu0
        %863 = vmatprep.mubr.bf16.mxu0 0
        %864 = vmatmul.mubr.bf16.gmra.mrb[0].mxu0 %v574
        %v865 = vpop.f32.mrb[0].mxu0
        %v866 = vadd.f32 %v306, %v865
        %v867 = vpop.f32.mrb[0].mxu0
        %v868 = vpop.f32.mrb[0].mxu0
        %v869 = vadd.f32 %v306, %v868
        %v870 = vpop.f32.mrb[0].mxu0
        %871 = vdwg.mxu0
        %v872 = vmax.f32 %v618, 0.0
        %v873 = vmax.f32 %v621, 0.0
        %v874 = vmax.f32 %v626, 0.0
        %v875 = vmax.f32 %v629, 0.0
        %v876 = vmax.f32 %v634, 0.0
        %v877 = vmax.f32 %v637, 0.0
        %v878 = vmax.f32 %v642, 0.0
        %v879 = vmax.f32 %v645, 0.0
        %v880 = vmax.f32 %v650, 0.0
        %v881 = vmax.f32 %v653, 0.0
        %v882 = vmax.f32 %v658, 0.0
        %v883 = vmax.f32 %v661, 0.0
        %v884 = vmax.f32 %v666, 0.0
        %v885 = vmax.f32 %v669, 0.0
        %v886 = vmax.f32 %v674, 0.0
        %v887 = vmax.f32 %v677, 0.0
        %v888 = vmax.f32 %v682, 0.0
        %v889 = vmax.f32 %v685, 0.0
        %v890 = vmax.f32 %v690, 0.0
        %v891 = vmax.f32 %v693, 0.0
        %v892 = vmax.f32 %v698, 0.0
        %v893 = vmax.f32 %v701, 0.0
        %v894 = vmax.f32 %v706, 0.0
        %v895 = vmax.f32 %v709, 0.0
        %v896 = vmax.f32 %v714, 0.0
        %v897 = vmax.f32 %v717, 0.0
        %v898 = vmax.f32 %v722, 0.0
        %v899 = vmax.f32 %v725, 0.0
        %v900 = vmax.f32 %v730, 0.0
        %v901 = vmax.f32 %v733, 0.0
        %v902 = vmax.f32 %v738, 0.0
        %v903 = vmax.f32 %v741, 0.0
        %v904 = vmax.f32 %v746, 0.0
        %v905 = vmax.f32 %v749, 0.0
        %v906 = vmax.f32 %v754, 0.0
        %v907 = vmax.f32 %v757, 0.0
        %v908 = vmax.f32 %v762, 0.0
        %v909 = vmax.f32 %v765, 0.0
        %v910 = vmax.f32 %v770, 0.0
        %v911 = vmax.f32 %v773, 0.0
        %v912 = vmax.f32 %v778, 0.0
        %v913 = vmax.f32 %v781, 0.0
        %v914 = vmax.f32 %v786, 0.0
        %v915 = vmax.f32 %v789, 0.0
        %v916 = vmax.f32 %v794, 0.0
        %v917 = vmax.f32 %v797, 0.0
        %v918 = vmax.f32 %v802, 0.0
        %v919 = vmax.f32 %v805, 0.0
        %v920 = vmax.f32 %v810, 0.0
        %v921 = vmax.f32 %v813, 0.0
        %v922 = vmax.f32 %v818, 0.0
        %v923 = vmax.f32 %v821, 0.0
        %v924 = vmax.f32 %v826, 0.0
        %v925 = vmax.f32 %v829, 0.0
        %v926 = vmax.f32 %v834, 0.0
        %v927 = vmax.f32 %v837, 0.0
        %v928 = vmax.f32 %v842, 0.0
        %v929 = vmax.f32 %v845, 0.0
        %v930 = vmax.f32 %v850, 0.0
        %v931 = vmax.f32 %v853, 0.0
        %v932 = vmax.f32 %v858, 0.0
        %v933 = vmax.f32 %v861, 0.0
        %v934 = vmax.f32 %v866, 0.0
        %v935 = vmax.f32 %v869, 0.0
        %936 = vst [vmem:[%s221] sm:$0xff] %v872
        %937 = vst [vmem:[%s221 + $0x8] sm:$0xff] %v873
        %938 = vst [vmem:[%s221 + $0x10] sm:$0xff] %v874
        %939 = vst [vmem:[%s221 + $0x18] sm:$0xff] %v875
        %940 = vst [vmem:[%s221 + $0x20] sm:$0xff] %v876
        %941 = vst [vmem:[%s221 + $0x28] sm:$0xff] %v877
        %942 = vst [vmem:[%s221 + $0x30] sm:$0xff] %v878
        %943 = vst [vmem:[%s221 + $0x38] sm:$0xff] %v879
        %944 = vst [vmem:[%s221 + $0x40] sm:$0xff] %v880
        %945 = vst [vmem:[%s221 + $0x48] sm:$0xff] %v881
        %946 = vst [vmem:[%s221 + $0x50] sm:$0xff] %v882
        %947 = vst [vmem:[%s221 + $0x58] sm:$0xff] %v883
        %948 = vst [vmem:[%s221 + $0x60] sm:$0xff] %v884
        %949 = vst [vmem:[%s221 + $0x68] sm:$0xff] %v885
        %950 = vst [vmem:[%s221 + $0x70] sm:$0xff] %v886
        %951 = vst [vmem:[%s221 + $0x78] sm:$0xff] %v887
        %952 = vst [vmem:[%s221 + $0x80] sm:$0xff] %v888
        %953 = vst [vmem:[%s221 + $0x88] sm:$0xff] %v889
        %954 = vst [vmem:[%s221 + $0x90] sm:$0xff] %v890
        %955 = vst [vmem:[%s221 + $0x98] sm:$0xff] %v891
        %956 = vst [vmem:[%s221 + $0xa0] sm:$0xff] %v892
        %957 = vst [vmem:[%s221 + $0xa8] sm:$0xff] %v893
        %958 = vst [vmem:[%s221 + $0xb0] sm:$0xff] %v894
        %959 = vst [vmem:[%s221 + $0xb8] sm:$0xff] %v895
        %960 = vst [vmem:[%s221 + $0xc0] sm:$0xff] %v896
        %961 = vst [vmem:[%s221 + $0xc8] sm:$0xff] %v897
        %962 = vst [vmem:[%s221 + $0xd0] sm:$0xff] %v898
        %963 = vst [vmem:[%s221 + $0xd8] sm:$0xff] %v899
        %964 = vst [vmem:[%s221 + $0xe0] sm:$0xff] %v900
        %965 = vst [vmem:[%s221 + $0xe8] sm:$0xff] %v901
        %966 = vst [vmem:[%s221 + $0xf0] sm:$0xff] %v902
        %967 = vst [vmem:[%s221 + $0xf8] sm:$0xff] %v903
        %968 = vst [vmem:[%s221 + $0x100] sm:$0xff] %v904
        %969 = vst [vmem:[%s221 + $0x108] sm:$0xff] %v905
        %970 = vst [vmem:[%s221 + $0x110] sm:$0xff] %v906
        %971 = vst [vmem:[%s221 + $0x118] sm:$0xff] %v907
        %972 = vst [vmem:[%s221 + $0x120] sm:$0xff] %v908
        %973 = vst [vmem:[%s221 + $0x128] sm:$0xff] %v909
        %974 = vst [vmem:[%s221 + $0x130] sm:$0xff] %v910
        %975 = vst [vmem:[%s221 + $0x138] sm:$0xff] %v911
        %976 = vst [vmem:[%s221 + $0x140] sm:$0xff] %v912
        %977 = vst [vmem:[%s221 + $0x148] sm:$0xff] %v913
        %978 = vst [vmem:[%s221 + $0x150] sm:$0xff] %v914
        %979 = vst [vmem:[%s221 + $0x158] sm:$0xff] %v915
        %980 = vst [vmem:[%s221 + $0x160] sm:$0xff] %v916
        %981 = vst [vmem:[%s221 + $0x168] sm:$0xff] %v917
        %982 = vst [vmem:[%s221 + $0x170] sm:$0xff] %v918
        %983 = vst [vmem:[%s221 + $0x178] sm:$0xff] %v919
        %984 = vst [vmem:[%s221 + $0x180] sm:$0xff] %v920
        %985 = vst [vmem:[%s221 + $0x188] sm:$0xff] %v921
        %986 = vst [vmem:[%s221 + $0x190] sm:$0xff] %v922
        %987 = vst [vmem:[%s221 + $0x198] sm:$0xff] %v923
        %988 = vst [vmem:[%s221 + $0x1a0] sm:$0xff] %v924
        %989 = vst [vmem:[%s221 + $0x1a8] sm:$0xff] %v925
        %990 = vst [vmem:[%s221 + $0x1b0] sm:$0xff] %v926
        %991 = vst [vmem:[%s221 + $0x1b8] sm:$0xff] %v927
        %992 = vst [vmem:[%s221 + $0x1c0] sm:$0xff] %v928
        %993 = vst [vmem:[%s221 + $0x1c8] sm:$0xff] %v929
        %994 = vst [vmem:[%s221 + $0x1d0] sm:$0xff] %v930
        %995 = vst [vmem:[%s221 + $0x1d8] sm:$0xff] %v931
        %996 = vst [vmem:[%s221 + $0x1e0] sm:$0xff] %v932
        %997 = vst [vmem:[%s221 + $0x1e8] sm:$0xff] %v933
        %998 = vst [vmem:[%s221 + $0x1f0] sm:$0xff] %v934
        %999 = vst [vmem:[%s221 + $0x1f8] sm:$0xff] %v935
        %s1000 = sand.u32 %s97, 1
        %s1001 = scalar_lea.sflag [#allocation4], %s1000
        %s1002 = sand.u32 %s97, 1
        %s1003 = smul.addr %s1002, 512
        %s1004 = scalar_lea.vmem [#allocation8], %s1003
        // Predicated region
        $region45: #{_encoder_forward.2} parent=31 // pred_check
          %p1005 = pneg %p107
        $region46: #{_encoder_forward.2} parent=31 // pred_check_branch
          %1007 = sbr.rel (%p1005) target = $region48
        $region47: #{_encoder_forward.2} parent=31 // pred_region
          %s1008 = smul.u32 64, %s21
          %s1009 = ssub.s32 241, %s1008
          %p1010 = scmp.lt.s32.totalorder %s1009, 64
          %s1011 = scalar_select %p1010, %s1009, 64
          %s1012 = smul.u32 128, %s1011
          %s1014 = ssub.s32 8192, %s1012
          %1015 = vsyncadd %s1001, %s1014
          %p1016 = scmp.ne.s32.totalorder 0, %s1012
          %s1017 = smul.addr %s1008, 128
          %s1018 = scalar_lea.hbm %s3, %s1017
          %s1019 = smul.u32 8, %s1011
          %s1020 = sshll.u32 %s1004, 4
          %s1021 = int_to_ptr.vmem [resolvable:$true] %s1020
          %s1022 = sshll.u32 %s1019, 4
          %1026 = dma.vmem_to_hbm [thread:$0]  (%p1016), %s1021, %s1022, %s1018, %s1001, 128, 128, 8
        $region48: #{_encoder_forward.2} parent=31 // pred_fallthru
          _
      $region32: #{_encoder_forward.2} parent=5 // pred_fallthru
        _
      %p1027 = scmp.le.s32.totalorder 2, %s16
      // Predicated region
      $region49: #{_encoder_forward.2} parent=5 // pred_check
        %p1028 = pneg %p1027
      $region50: #{_encoder_forward.2} parent=5 // pred_check_branch
        %1030 = sbr.rel (%p1028) target = $region52
      $region51: #{_encoder_forward.2} parent=5 // pred_region
        %s1031 = ssub.s32 %s16, 2
        // Predicated region
        $region53: #{_encoder_forward.2} parent=51 // pred_check
          %p1032 = pneg %p113
        $region54: #{_encoder_forward.2} parent=51 // pred_check_branch
          %1034 = sbr.rel (%p1032) target = $region56
        $region55: #{_encoder_forward.2} parent=51 // pred_region
          %s1035 = sand.u32 %s98, 1
          %s1036 = scalar_lea.sflag [#allocation4], %s1035
          %s1037 = sand.u32 %s98, 1
          %s1038 = smul.addr %s1037, 512
          %s1039 = scalar_lea.vmem [#allocation8], %s1038
          %1040 = dma.done %s1036, 8192
        $region56: #{_encoder_forward.2} parent=51 // pred_fallthru
          _
      $region52: #{_encoder_forward.2} parent=5 // pred_fallthru
        _
    $region6: #{_encoder_forward.2} parent=1 // loop_footer
      %s20 = sadd.s32 1, %s16
    $region7: #{_encoder_forward.2} parent=1 // loop_footer_branch
      %15 = sbr.rel target = $region3
    $region8: #{_encoder_forward.2} parent=1 // loop_exit
      _
    %1041 = vsyncpa [#allocation3], 1
    %s1042 = scalar_lea.sflag [#allocation3], 1
    %1043 = vsyncpa %s1042, 1
    %1044 = vsyncpa [#allocation6], 1
    %1045 = vsyncpa [#allocation4], 1
    %s1046 = scalar_lea.sflag [#allocation4], 1
    %1047 = vsyncpa %s1046, 1

// kernel: _encoder_forward.3
$region0: #{_encoder_forward.3}
  #allocation0 [shape = 'u32[]', space=smem, size = 0x4, offset = 0x4, fixed_abs, tag = 'smem constant byte address 0x4 - core index']
  #allocation1 [shape = 'u32[144,128]{1,0:T(1,128)}', space=vmem, size = 0x12000, scoped, tag = 'internal scratch']
  %s0 = inlined_call_operand.vmem [shape: f32[2,31,31,128], index: 0, kind: input, shape index: {}]
  %s1 = inlined_call_operand.vmem [shape: f32[2,14,14,128], index: 1, kind: output, shape index: {}]
  %s2 = sld [smem:[#allocation0]]
  $region37: #{_encoder_forward.3} parent=0
    _
  %s4 = ssub.s32 1, %s2
  %s5 = scalar_select 0, %s4, %s2
  loop: start=0, step=1, limit=4
  $region2: #{_encoder_forward.3} parent=0 // loop_pre_header
    _
  $region3: #{_encoder_forward.3} parent=0 // loop_header
    %s7 = sphi 0, %s11
    %p8 = scmp.ge.s32.totalorder %s7, 4
    %s14 = sphi 0, %s26
    %s15 = sphi 0, %s22
    %s16 = sphi 0, %s14
    %s17 = sphi 0, %s15
    %s18 = sphi 0, %s16
    %s19 = sphi 0, %s17
    %s31 = sphi 0, %s33
    %s34 = sphi 0, %s31
    %s35 = sphi 0, %s34
    %s51 = sphi 0, %s35
    %s59 = sphi 0, %s61
    %s62 = sphi 0, %s59
    %s63 = sphi 0, %s62
    %s79 = sphi 0, %s63
  $region4: #{_encoder_forward.3} parent=0 // loop_header_branch
    %10 = sbr.rel (%p8) target = $region8
  $region5: #{_encoder_forward.3} parent=0 // loop_body
    %s12 = ssub.s32 %s7, 1
    %s13 = ssub.s32 %s7, 2
    %s20 = sadd.s32 1, %s15
    %p21 = scmp.ge.s32.totalorder %s20, 1
    %s22 = scalar_select %p21, 0, %s20
    %s23 = sadd.s32 1, %s14
    %s24 = scalar_select %p21, %s23, %s14
    %p25 = scmp.ge.s32.totalorder %s24, 2
    %s26 = scalar_select %p25, 0, %s24
    %s27 = ssub.s32 %s14, %s26
    %s28 = ssub.s32 %s15, %s22
    %s29 = sor.u32 %s27, %s28
    %p30 = scmp.eq.s32.totalorder %s29, 0
    %s32 = sadd.s32 %s31, 1
    %s33 = scalar_select %p30, %s31, %s32
    %p36 = pneg %p30
    %p37 = scmp.eq.s32.totalorder %s7, 1
    %p38 = por %p36, %p37
    %p39 = scmp.ne.s32.totalorder %s31, %s34
    %p40 = scmp.eq.s32.totalorder %s7, 0
    %p41 = por %p39, %p40
    %p42 = scmp.ne.s32.totalorder %s31, %s34
    %p43 = scmp.eq.s32.totalorder %s12, 1
    %p44 = por %p42, %p43
    %p45 = scmp.ne.s32.totalorder %s34, %s35
    %p46 = scmp.eq.s32.totalorder %s12, 0
    %p47 = por %p45, %p46
    %p48 = scmp.ne.s32.totalorder %s34, %s35
    %p49 = scmp.eq.s32.totalorder %s13, 1
    %p50 = por %p48, %p49
    %p52 = scmp.ne.s32.totalorder %s35, %s51
    %p53 = scmp.eq.s32.totalorder %s13, 0
    %p54 = por %p52, %p53
    %s55 = ssub.s32 %s14, %s26
    %s56 = ssub.s32 %s15, %s22
    %s57 = sor.u32 %s55, %s56
    %p58 = scmp.eq.s32.totalorder %s57, 0
    %s60 = sadd.s32 %s59, 1
    %s61 = scalar_select %p58, %s59, %s60
    %p64 = pneg %p58
    %p65 = scmp.eq.s32.totalorder %s7, 1
    %p66 = por %p64, %p65
    %p67 = scmp.ne.s32.totalorder %s59, %s62
    %p68 = scmp.eq.s32.totalorder %s7, 0
    %p69 = por %p67, %p68
    %p70 = scmp.ne.s32.totalorder %s59, %s62
    %p71 = scmp.eq.s32.totalorder %s12, 1
    %p72 = por %p70, %p71
    %p73 = scmp.ne.s32.totalorder %s62, %s63
    %p74 = scmp.eq.s32.totalorder %s12, 0
    %p75 = por %p73, %p74
    %p76 = scmp.ne.s32.totalorder %s62, %s63
    %p77 = scmp.eq.s32.totalorder %s13, 1
    %p78 = por %p76, %p77
    %p80 = scmp.ne.s32.totalorder %s63, %s79
    %p81 = scmp.eq.s32.totalorder %s13, 0
    %p82 = por %p80, %p81
    %p83 = scmp.le.s32.totalorder 1, %s7
    %p84 = scmp.lt.s32.totalorder %s7, 3
    %p85 = pnand %p83, %p84
    %p86 = pneg %p85
    // Predicated region
    $region9: #{_encoder_forward.3} parent=5 // pred_check
      _
    $region10: #{_encoder_forward.3} parent=5 // pred_check_branch
      %88 = sbr.rel (%p85) target = $region12
    $region11: #{_encoder_forward.3} parent=5 // pred_region
      %s89 = ssub.s32 %s7, 1
    $region12: #{_encoder_forward.3} parent=5 // pred_fallthru
      _
    %p90 = scmp.lt.s32.totalorder %s7, 2
    // Predicated region
    $region13: #{_encoder_forward.3} parent=5 // pred_check
      %p91 = pneg %p90
    $region14: #{_encoder_forward.3} parent=5 // pred_check_branch
      %93 = sbr.rel (%p91) target = $region16
    $region15: #{_encoder_forward.3} parent=5 // pred_region
      // Predicated region
      $region17: #{_encoder_forward.3} parent=15 // pred_check
        %p94 = pneg %p41
      $region18: #{_encoder_forward.3} parent=15 // pred_check_branch
        %96 = sbr.rel (%p94) target = $region20
      $region19: #{_encoder_forward.3} parent=15 // pred_region
        %p97 = scmp.lt.s32.totalorder %s14, 1
        %s98 = scalar_select %p97, %s14, 1
        %p99 = scmp.lt.s32.totalorder %s15, 0
        %s100 = scalar_select %p99, %s15, 0
        %s101 = smul.addr %s98, 124
        %s102 = sadd.s32 %s100, %s101
        %s103 = smul.addr %s102, 8
        %s104 = scalar_lea.vmem %s0, %s103
      $region20: #{_encoder_forward.3} parent=15 // pred_fallthru
        _
    $region16: #{_encoder_forward.3} parent=5 // pred_fallthru
      _
    %p105 = scmp.le.s32.totalorder 1, %s7
    %p106 = scmp.lt.s32.totalorder %s7, 3
    %p107 = pnand %p105, %p106
    %p108 = pneg %p107
    // Predicated region
    $region21: #{_encoder_forward.3} parent=5 // pred_check
      _
    $region22: #{_encoder_forward.3} parent=5 // pred_check_branch
      %110 = sbr.rel (%p107) target = $region24
    $region23: #{_encoder_forward.3} parent=5 // pred_region
      %s111 = ssub.s32 %s7, 1
      %p112 = scmp.lt.s32.totalorder %s16, 1
      %s113 = scalar_select %p112, %s16, 1
      %p114 = scmp.lt.s32.totalorder %s17, 0
      %s115 = scalar_select %p114, %s17, 0
      %s116 = smul.addr %s113, 124
      %s117 = sadd.s32 %s115, %s116
      %s118 = smul.addr %s117, 8
      %s119 = scalar_lea.vmem %s0, %s118
      %p120 = pneg %p47
      %p121 = pneg %p44
      %p122 = pneg %p75
      %p123 = pneg %p72
      %p124 = scmp.lt.s32.totalorder %s16, 1
      %s125 = scalar_select %p124, %s16, 1
      %p126 = scmp.lt.s32.totalorder %s17, 0
      %s127 = scalar_select %p126, %s17, 0
      %s128 = smul.addr %s125, 28
      %s129 = sadd.s32 %s127, %s128
      %s130 = smul.addr %s129, 8
      %s131 = scalar_lea.vmem %s1, %s130
      %p132 = scmp.lt.s32.totalorder %s16, 1
      %s133 = scalar_select %p132, %s16, 1
      %p134 = scmp.lt.s32.totalorder %s17, 0
      %s135 = scalar_select %p134, %s17, 0
      %s136 = smul.addr %s133, 124
      %s137 = sadd.s32 %s135, %s136
      %s138 = smul.addr %s137, 8
      %s139 = scalar_lea.vmem %s0, %s138
      %p140 = scmp.lt.s32.totalorder %s16, 1
      %s141 = scalar_select %p140, %s16, 1
      %p142 = scmp.lt.s32.totalorder %s17, 0
      %s143 = scalar_select %p142, %s17, 0
      %s144 = smul.addr %s141, 28
      %s145 = sadd.s32 %s143, %s144
      %s146 = smul.addr %s145, 8
      %s147 = scalar_lea.vmem %s1, %s146
      %v148 = vld [vmem:[%s139] sm:$0xff]
      %v149 = vld [vmem:[%s139 + $0x8] sm:$0xff]
      %v150 = vld [vmem:[%s139 + $0x10] sm:$0xff]
      %v151 = vld [vmem:[%s139 + $0x18] sm:$0x7f]
      %v152 = vld [vmem:[%s139 + $0x20] sm:$0xff]
      %v153 = vld [vmem:[%s139 + $0x28] sm:$0xff]
      %v154 = vld [vmem:[%s139 + $0x30] sm:$0xff]
      %v155 = vld [vmem:[%s139 + $0x38] sm:$0x7f]
      %v156 = vld [vmem:[%s139 + $0x40] sm:$0xff]
      %v157 = vld [vmem:[%s139 + $0x48] sm:$0xff]
      %v158 = vld [vmem:[%s139 + $0x50] sm:$0xff]
      %v159 = vld [vmem:[%s139 + $0x58] sm:$0x7f]
      %v160 = vld [vmem:[%s139 + $0x60] sm:$0xff]
      %v161 = vld [vmem:[%s139 + $0x68] sm:$0xff]
      %v162 = vld [vmem:[%s139 + $0x70] sm:$0xff]
      %v163 = vld [vmem:[%s139 + $0x78] sm:$0x7f]
      %v164 = vld [vmem:[%s139 + $0x80] sm:$0xff]
      %v165 = vld [vmem:[%s139 + $0x88] sm:$0xff]
      %v166 = vld [vmem:[%s139 + $0x90] sm:$0xff]
      %v167 = vld [vmem:[%s139 + $0x98] sm:$0x7f]
      %v168 = vld [vmem:[%s139 + $0xa0] sm:$0xff]
      %v169 = vld [vmem:[%s139 + $0xa8] sm:$0xff]
      %v170 = vld [vmem:[%s139 + $0xb0] sm:$0xff]
      %v171 = vld [vmem:[%s139 + $0xb8] sm:$0x7f]
      %v172 = vld [vmem:[%s139 + $0xc0] sm:$0xff]
      %v173 = vld [vmem:[%s139 + $0xc8] sm:$0xff]
      %v174 = vld [vmem:[%s139 + $0xd0] sm:$0xff]
      %v175 = vld [vmem:[%s139 + $0xd8] sm:$0x7f]
      %v176 = vld [vmem:[%s139 + $0xe0] sm:$0xff]
      %v177 = vld [vmem:[%s139 + $0xe8] sm:$0xff]
      %v178 = vld [vmem:[%s139 + $0xf0] sm:$0xff]
      %v179 = vld [vmem:[%s139 + $0xf8] sm:$0x7f]
      %v180 = vld [vmem:[%s139 + $0x100] sm:$0xff]
      %v181 = vld [vmem:[%s139 + $0x108] sm:$0xff]
      %v182 = vld [vmem:[%s139 + $0x110] sm:$0xff]
      %v183 = vld [vmem:[%s139 + $0x118] sm:$0x7f]
      %v184 = vld [vmem:[%s139 + $0x120] sm:$0xff]
      %v185 = vld [vmem:[%s139 + $0x128] sm:$0xff]
      %v186 = vld [vmem:[%s139 + $0x130] sm:$0xff]
      %v187 = vld [vmem:[%s139 + $0x138] sm:$0x7f]
      %v188 = vld [vmem:[%s139 + $0x140] sm:$0xff]
      %v189 = vld [vmem:[%s139 + $0x148] sm:$0xff]
      %v190 = vld [vmem:[%s139 + $0x150] sm:$0xff]
      %v191 = vld [vmem:[%s139 + $0x158] sm:$0x7f]
      %v192 = vld [vmem:[%s139 + $0x160] sm:$0xff]
      %v193 = vld [vmem:[%s139 + $0x168] sm:$0xff]
      %v194 = vld [vmem:[%s139 + $0x170] sm:$0xff]
      %v195 = vld [vmem:[%s139 + $0x178] sm:$0x7f]
      %v196 = vld [vmem:[%s139 + $0x180] sm:$0xff]
      %v197 = vld [vmem:[%s139 + $0x188] sm:$0xff]
      %v198 = vld [vmem:[%s139 + $0x190] sm:$0xff]
      %v199 = vld [vmem:[%s139 + $0x198] sm:$0x7f]
      %v200 = vld [vmem:[%s139 + $0x1a0] sm:$0xff]
      %v201 = vld [vmem:[%s139 + $0x1a8] sm:$0xff]
      %v202 = vld [vmem:[%s139 + $0x1b0] sm:$0xff]
      %v203 = vld [vmem:[%s139 + $0x1b8] sm:$0x7f]
      %v204 = vld [vmem:[%s139 + $0x1c0] sm:$0xff]
      %v205 = vld [vmem:[%s139 + $0x1c8] sm:$0xff]
      %v206 = vld [vmem:[%s139 + $0x1d0] sm:$0xff]
      %v207 = vld [vmem:[%s139 + $0x1d8] sm:$0x7f]
      %v208 = vld [vmem:[%s139 + $0x1e0] sm:$0xff]
      %v209 = vld [vmem:[%s139 + $0x1e8] sm:$0xff]
      %v210 = vld [vmem:[%s139 + $0x1f0] sm:$0xff]
      %v211 = vld [vmem:[%s139 + $0x1f8] sm:$0x7f]
      %v212 = vld [vmem:[%s139 + $0x200] sm:$0xff]
      %v213 = vld [vmem:[%s139 + $0x208] sm:$0xff]
      %v214 = vld [vmem:[%s139 + $0x210] sm:$0xff]
      %v215 = vld [vmem:[%s139 + $0x218] sm:$0x7f]
      %v216 = vld [vmem:[%s139 + $0x220] sm:$0xff]
      %v217 = vld [vmem:[%s139 + $0x228] sm:$0xff]
      %v218 = vld [vmem:[%s139 + $0x230] sm:$0xff]
      %v219 = vld [vmem:[%s139 + $0x238] sm:$0x7f]
      %v220 = vld [vmem:[%s139 + $0x240] sm:$0xff]
      %v221 = vld [vmem:[%s139 + $0x248] sm:$0xff]
      %v222 = vld [vmem:[%s139 + $0x250] sm:$0xff]
      %v223 = vld [vmem:[%s139 + $0x258] sm:$0x7f]
      %v224 = vld [vmem:[%s139 + $0x260] sm:$0xff]
      %v225 = vld [vmem:[%s139 + $0x268] sm:$0xff]
      %v226 = vld [vmem:[%s139 + $0x270] sm:$0xff]
      %v227 = vld [vmem:[%s139 + $0x278] sm:$0x7f]
      %v228 = vld [vmem:[%s139 + $0x280] sm:$0xff]
      %v229 = vld [vmem:[%s139 + $0x288] sm:$0xff]
      %v230 = vld [vmem:[%s139 + $0x290] sm:$0xff]
      %v231 = vld [vmem:[%s139 + $0x298] sm:$0x7f]
      %v232 = vld [vmem:[%s139 + $0x2a0] sm:$0xff]
      %v233 = vld [vmem:[%s139 + $0x2a8] sm:$0xff]
      %v234 = vld [vmem:[%s139 + $0x2b0] sm:$0xff]
      %v235 = vld [vmem:[%s139 + $0x2b8] sm:$0x7f]
      %v236 = vld [vmem:[%s139 + $0x2c0] sm:$0xff]
      %v237 = vld [vmem:[%s139 + $0x2c8] sm:$0xff]
      %v238 = vld [vmem:[%s139 + $0x2d0] sm:$0xff]
      %v239 = vld [vmem:[%s139 + $0x2d8] sm:$0x7f]
      %v240 = vld [vmem:[%s139 + $0x2e0] sm:$0xff]
      %v241 = vld [vmem:[%s139 + $0x2e8] sm:$0xff]
      %v242 = vld [vmem:[%s139 + $0x2f0] sm:$0xff]
      %v243 = vld [vmem:[%s139 + $0x2f8] sm:$0x7f]
      %v244 = vld [vmem:[%s139 + $0x300] sm:$0xff]
      %v245 = vld [vmem:[%s139 + $0x308] sm:$0xff]
      %v246 = vld [vmem:[%s139 + $0x310] sm:$0xff]
      %v247 = vld [vmem:[%s139 + $0x318] sm:$0x7f]
      %v248 = vld [vmem:[%s139 + $0x320] sm:$0xff]
      %v249 = vld [vmem:[%s139 + $0x328] sm:$0xff]
      %v250 = vld [vmem:[%s139 + $0x330] sm:$0xff]
      %v251 = vld [vmem:[%s139 + $0x338] sm:$0x7f]
      %v252 = vld [vmem:[%s139 + $0x340] sm:$0xff]
      %v253 = vld [vmem:[%s139 + $0x348] sm:$0xff]
      %v254 = vld [vmem:[%s139 + $0x350] sm:$0xff]
      %v255 = vld [vmem:[%s139 + $0x358] sm:$0x7f]
      %v256 = vld [vmem:[%s139 + $0x360] sm:$0xff]
      %v257 = vld [vmem:[%s139 + $0x368] sm:$0xff]
      %v258 = vld [vmem:[%s139 + $0x370] sm:$0xff]
      %v259 = vld [vmem:[%s139 + $0x378] sm:$0x7f]
      %v260 = vld [vmem:[%s139 + $0x380] sm:$0xff]
      %v261 = vld [vmem:[%s139 + $0x388] sm:$0xff]
      %v262 = vld [vmem:[%s139 + $0x390] sm:$0xff]
      %v263 = vld [vmem:[%s139 + $0x398] sm:$0x7f]
      %v264 = vld [vmem:[%s139 + $0x3a0] sm:$0xff]
      %v265 = vld [vmem:[%s139 + $0x3a8] sm:$0xff]
      %v266 = vld [vmem:[%s139 + $0x3b0] sm:$0xff]
      %v267 = vld [vmem:[%s139 + $0x3b8] sm:$0x7f]
      %v268 = vld [vmem:[%s139 + $0x3c0] sm:$0xff]
      %v269 = vld [vmem:[%s139 + $0x3c8] sm:$0xff]
      %v270 = vld [vmem:[%s139 + $0x3d0] sm:$0xff]
      %v271 = vld [vmem:[%s139 + $0x3d8] sm:$0x7f]
      %v272 = vmax.f32 %v148, %v152
      %v273 = vmax.f32 %v272, %v156
      %v274 = vmax.f32 %v149, %v153
      %v275 = vmax.f32 %v274, %v157
      %v276 = vmax.f32 %v150, %v154
      %v277 = vmax.f32 %v276, %v158
      %vm278 = vcmask 1046528
      %v279 = vsel %vm278, %v151, -inf
      %v280 = vsel %vm278, %v155, -inf
      %v281 = vmax.f32 %v279, %v280
      %v282 = vsel %vm278, %v159, -inf
      %v283 = vmax.f32 %v281, %v282
      %v284 = vmax.f32 %v156, %v160
      %v285 = vmax.f32 %v284, %v164
      %v286 = vmax.f32 %v157, %v161
      %v287 = vmax.f32 %v286, %v165
      %v288 = vmax.f32 %v158, %v162
      %v289 = vmax.f32 %v288, %v166
      %v290 = vsel %vm278, %v163, -inf
      %v291 = vmax.f32 %v282, %v290
      %v292 = vsel %vm278, %v167, -inf
      %v293 = vmax.f32 %v291, %v292
      %v294 = vmax.f32 %v164, %v168
      %v295 = vmax.f32 %v294, %v172
      %v296 = vmax.f32 %v165, %v169
      %v297 = vmax.f32 %v296, %v173
      %v298 = vmax.f32 %v166, %v170
      %v299 = vmax.f32 %v298, %v174
      %v300 = vsel %vm278, %v171, -inf
      %v301 = vmax.f32 %v292, %v300
      %v302 = vsel %vm278, %v175, -inf
      %v303 = vmax.f32 %v301, %v302
      %v304 = vmax.f32 %v172, %v176
      %v305 = vmax.f32 %v304, %v180
      %v306 = vmax.f32 %v173, %v177
      %v307 = vmax.f32 %v306, %v181
      %v308 = vmax.f32 %v174, %v178
      %v309 = vmax.f32 %v308, %v182
      %v310 = vsel %vm278, %v179, -inf
      %v311 = vmax.f32 %v302, %v310
      %v312 = vsel %vm278, %v183, -inf
      %v313 = vmax.f32 %v311, %v312
      %v314 = vmax.f32 %v180, %v184
      %v315 = vmax.f32 %v314, %v188
      %v316 = vmax.f32 %v315, %v192
      %v317 = vmax.f32 %v181, %v185
      %v318 = vmax.f32 %v317, %v189
      %v319 = vmax.f32 %v318, %v193
      %v320 = vmax.f32 %v182, %v186
      %v321 = vmax.f32 %v320, %v190
      %v322 = vmax.f32 %v321, %v194
      %v323 = vsel %vm278, %v187, -inf
      %v324 = vmax.f32 %v312, %v323
      %v325 = vsel %vm278, %v191, -inf
      %v326 = vmax.f32 %v324, %v325
      %v327 = vsel %vm278, %v195, -inf
      %v328 = vmax.f32 %v326, %v327
      %v329 = vmax.f32 %v192, %v196
      %v330 = vmax.f32 %v329, %v200
      %v331 = vmax.f32 %v193, %v197
      %v332 = vmax.f32 %v331, %v201
      %v333 = vmax.f32 %v194, %v198
      %v334 = vmax.f32 %v333, %v202
      %v335 = vsel %vm278, %v199, -inf
      %v336 = vmax.f32 %v327, %v335
      %v337 = vsel %vm278, %v203, -inf
      %v338 = vmax.f32 %v336, %v337
      %v339 = vmax.f32 %v200, %v204
      %v340 = vmax.f32 %v339, %v208
      %v341 = vmax.f32 %v201, %v205
      %v342 = vmax.f32 %v341, %v209
      %v343 = vmax.f32 %v202, %v206
      %v344 = vmax.f32 %v343, %v210
      %v345 = vsel %vm278, %v207, -inf
      %v346 = vmax.f32 %v337, %v345
      %v347 = vsel %vm278, %v211, -inf
      %v348 = vmax.f32 %v346, %v347
      %v349 = vmax.f32 %v208, %v212
      %v350 = vmax.f32 %v349, %v216
      %v351 = vmax.f32 %v209, %v213
      %v352 = vmax.f32 %v351, %v217
      %v353 = vmax.f32 %v210, %v214
      %v354 = vmax.f32 %v353, %v218
      %v355 = vsel %vm278, %v215, -inf
      %v356 = vmax.f32 %v347, %v355
      %v357 = vsel %vm278, %v219, -inf
      %v358 = vmax.f32 %v356, %v357
      %v359 = vmax.f32 %v216, %v220
      %v360 = vmax.f32 %v359, %v224
      %v361 = vmax.f32 %v217, %v221
      %v362 = vmax.f32 %v361, %v225
      %v363 = vmax.f32 %v218, %v222
      %v364 = vmax.f32 %v363, %v226
      %v365 = vsel %vm278, %v223, -inf
      %v366 = vmax.f32 %v357, %v365
      %v367 = vsel %vm278, %v227, -inf
      %v368 = vmax.f32 %v366, %v367
      %v369 = vmax.f32 %v224, %v228
      %v370 = vmax.f32 %v369, %v232
      %v371 = vmax.f32 %v370, %v236
      %v372 = vmax.f32 %v225, %v229
      %v373 = vmax.f32 %v372, %v233
      %v374 = vmax.f32 %v373, %v237
      %v375 = vmax.f32 %v226, %v230
      %v376 = vmax.f32 %v375, %v234
      %v377 = vmax.f32 %v376, %v238
      %v378 = vsel %vm278, %v231, -inf
      %v379 = vmax.f32 %v367, %v378
      %v380 = vsel %vm278, %v235, -inf
      %v381 = vmax.f32 %v379, %v380
      %v382 = vsel %vm278, %v239, -inf
      %v383 = vmax.f32 %v381, %v382
      %v384 = vmax.f32 %v236, %v240
      %v385 = vmax.f32 %v384, %v244
      %v386 = vmax.f32 %v237, %v241
      %v387 = vmax.f32 %v386, %v245
      %v388 = vmax.f32 %v238, %v242
      %v389 = vmax.f32 %v388, %v246
      %v390 = vsel %vm278, %v243, -inf
      %v391 = vmax.f32 %v382, %v390
      %v392 = vsel %vm278, %v247, -inf
      %v393 = vmax.f32 %v391, %v392
      %v394 = vmax.f32 %v244, %v248
      %v395 = vmax.f32 %v394, %v252
      %v396 = vmax.f32 %v245, %v249
      %v397 = vmax.f32 %v396, %v253
      %v398 = vmax.f32 %v246, %v250
      %v399 = vmax.f32 %v398, %v254
      %v400 = vsel %vm278, %v251, -inf
      %v401 = vmax.f32 %v392, %v400
      %v402 = vsel %vm278, %v255, -inf
      %v403 = vmax.f32 %v401, %v402
      %v404 = vmax.f32 %v252, %v256
      %v405 = vmax.f32 %v404, %v260
      %v406 = vmax.f32 %v253, %v257
      %v407 = vmax.f32 %v406, %v261
      %v408 = vmax.f32 %v254, %v258
      %v409 = vmax.f32 %v408, %v262
      %v410 = vsel %vm278, %v259, -inf
      %v411 = vmax.f32 %v402, %v410
      %v412 = vsel %vm278, %v263, -inf
      %v413 = vmax.f32 %v411, %v412
      %v414 = vmax.f32 %v260, %v264
      %v415 = vmax.f32 %v414, %v268
      %v416 = vmax.f32 %v261, %v265
      %v417 = vmax.f32 %v416, %v269
      %v418 = vmax.f32 %v262, %v266
      %v419 = vmax.f32 %v418, %v270
      %v420 = vsel %vm278, %v267, -inf
      %v421 = vmax.f32 %v412, %v420
      %v422 = vsel %vm278, %v271, -inf
      %v423 = vmax.f32 %v421, %v422
      %vm424 = vcmask 1042432
      %v425 = vsel %vm424, %v273, -inf
      %v426 = vrot.slane %v425, 4
      %v427 = vmax.f32 %v425, %v426
      %v428 = vrot.slane %v427, 2
      %v429 = vmax.f32 %v427, %v428
      %v430 = vrot.slane %v429, 1
      %v431 = vmax.f32 %v429, %v430
      %v432 = vsel %vm424, %v285, -inf
      %v433 = vrot.slane %v432, 4
      %v434 = vmax.f32 %v432, %v433
      %v435 = vrot.slane %v434, 2
      %v436 = vmax.f32 %v434, %v435
      %v437 = vrot.slane %v436, 1
      %v438 = vmax.f32 %v436, %v437
      %v439 = vsel %vm424, %v295, -inf
      %v440 = vrot.slane %v439, 4
      %v441 = vmax.f32 %v439, %v440
      %v442 = vrot.slane %v441, 2
      %v443 = vmax.f32 %v441, %v442
      %v444 = vrot.slane %v443, 1
      %v445 = vmax.f32 %v443, %v444
      %v446 = vsel %vm424, %v305, -inf
      %v447 = vrot.slane %v446, 4
      %v448 = vmax.f32 %v446, %v447
      %v449 = vrot.slane %v448, 2
      %v450 = vmax.f32 %v448, %v449
      %v451 = vrot.slane %v450, 1
      %v452 = vmax.f32 %v450, %v451
      %v453 = vsel %vm424, %v316, -inf
      %v454 = vrot.slane %v453, 4
      %v455 = vmax.f32 %v453, %v454
      %v456 = vrot.slane %v455, 2
      %v457 = vmax.f32 %v455, %v456
      %v458 = vrot.slane %v457, 1
      %v459 = vmax.f32 %v457, %v458
      %v460 = vsel %vm424, %v330, -inf
      %v461 = vrot.slane %v460, 4
      %v462 = vmax.f32 %v460, %v461
      %v463 = vrot.slane %v462, 2
      %v464 = vmax.f32 %v462, %v463
      %v465 = vrot.slane %v464, 1
      %v466 = vmax.f32 %v464, %v465
      %v467 = vsel %vm424, %v340, -inf
      %v468 = vrot.slane %v467, 4
      %v469 = vmax.f32 %v467, %v468
      %v470 = vrot.slane %v469, 2
      %v471 = vmax.f32 %v469, %v470
      %v472 = vrot.slane %v471, 1
      %v473 = vmax.f32 %v471, %v472
      %v474 = vsel %vm424, %v350, -inf
      %v475 = vrot.slane %v474, 4
      %v476 = vmax.f32 %v474, %v475
      %v477 = vrot.slane %v476, 2
      %v478 = vmax.f32 %v476, %v477
      %v479 = vrot.slane %v478, 1
      %v480 = vmax.f32 %v478, %v479
      %v481 = vsel %vm424, %v360, -inf
      %v482 = vrot.slane %v481, 4
      %v483 = vmax.f32 %v481, %v482
      %v484 = vrot.slane %v483, 2
      %v485 = vmax.f32 %v483, %v484
      %v486 = vrot.slane %v485, 1
      %v487 = vmax.f32 %v485, %v486
      %v488 = vsel %vm424, %v371, -inf
      %v489 = vrot.slane %v488, 4
      %v490 = vmax.f32 %v488, %v489
      %v491 = vrot.slane %v490, 2
      %v492 = vmax.f32 %v490, %v491
      %v493 = vrot.slane %v492, 1
      %v494 = vmax.f32 %v492, %v493
      %v495 = vsel %vm424, %v385, -inf
      %v496 = vrot.slane %v495, 4
      %v497 = vmax.f32 %v495, %v496
      %v498 = vrot.slane %v497, 2
      %v499 = vmax.f32 %v497, %v498
      %v500 = vrot.slane %v499, 1
      %v501 = vmax.f32 %v499, %v500
      %v502 = vsel %vm424, %v395, -inf
      %v503 = vrot.slane %v502, 4
      %v504 = vmax.f32 %v502, %v503
      %v505 = vrot.slane %v504, 2
      %v506 = vmax.f32 %v504, %v505
      %v507 = vrot.slane %v506, 1
      %v508 = vmax.f32 %v506, %v507
      %v509 = vsel %vm424, %v405, -inf
      %v510 = vrot.slane %v509, 4
      %v511 = vmax.f32 %v509, %v510
      %v512 = vrot.slane %v511, 2
      %v513 = vmax.f32 %v511, %v512
      %v514 = vrot.slane %v513, 1
      %v515 = vmax.f32 %v513, %v514
      %v516 = vsel %vm424, %v415, -inf
      %v517 = vrot.slane %v516, 4
      %v518 = vmax.f32 %v516, %v517
      %v519 = vrot.slane %v518, 2
      %v520 = vmax.f32 %v518, %v519
      %v521 = vrot.slane %v520, 1
      %v522 = vmax.f32 %v520, %v521
      %vm523 = vcmask 1044482
      %v524 = vsel %vm523, %v273, -inf
      %v525 = vrot.slane %v524, 4
      %v526 = vmax.f32 %v524, %v525
      %v527 = vrot.slane %v526, 2
      %v528 = vmax.f32 %v526, %v527
      %v529 = vrot.slane %v528, 1
      %v530 = vmax.f32 %v528, %v529
      %v531 = vsel %vm523, %v285, -inf
      %v532 = vrot.slane %v531, 4
      %v533 = vmax.f32 %v531, %v532
      %v534 = vrot.slane %v533, 2
      %v535 = vmax.f32 %v533, %v534
      %v536 = vrot.slane %v535, 1
      %v537 = vmax.f32 %v535, %v536
      %v538 = vsel %vm523, %v295, -inf
      %v539 = vrot.slane %v538, 4
      %v540 = vmax.f32 %v538, %v539
      %v541 = vrot.slane %v540, 2
      %v542 = vmax.f32 %v540, %v541
      %v543 = vrot.slane %v542, 1
      %v544 = vmax.f32 %v542, %v543
      %v545 = vsel %vm523, %v305, -inf
      %v546 = vrot.slane %v545, 4
      %v547 = vmax.f32 %v545, %v546
      %v548 = vrot.slane %v547, 2
      %v549 = vmax.f32 %v547, %v548
      %v550 = vrot.slane %v549, 1
      %v551 = vmax.f32 %v549, %v550
      %v552 = vsel %vm523, %v316, -inf
      %v553 = vrot.slane %v552, 4
      %v554 = vmax.f32 %v552, %v553
      %v555 = vrot.slane %v554, 2
      %v556 = vmax.f32 %v554, %v555
      %v557 = vrot.slane %v556, 1
      %v558 = vmax.f32 %v556, %v557
      %v559 = vsel %vm523, %v330, -inf
      %v560 = vrot.slane %v559, 4
      %v561 = vmax.f32 %v559, %v560
      %v562 = vrot.slane %v561, 2
      %v563 = vmax.f32 %v561, %v562
      %v564 = vrot.slane %v563, 1
      %v565 = vmax.f32 %v563, %v564
      %v566 = vsel %vm523, %v340, -inf
      %v567 = vrot.slane %v566, 4
      %v568 = vmax.f32 %v566, %v567
      %v569 = vrot.slane %v568, 2
      %v570 = vmax.f32 %v568, %v569
      %v571 = vrot.slane %v570, 1
      %v572 = vmax.f32 %v570, %v571
      %v573 = vsel %vm523, %v350, -inf
      %v574 = vrot.slane %v573, 4
      %v575 = vmax.f32 %v573, %v574
      %v576 = vrot.slane %v575, 2
      %v577 = vmax.f32 %v575, %v576
      %v578 = vrot.slane %v577, 1
      %v579 = vmax.f32 %v577, %v578
      %v580 = vsel %vm523, %v360, -inf
      %v581 = vrot.slane %v580, 4
      %v582 = vmax.f32 %v580, %v581
      %v583 = vrot.slane %v582, 2
      %v584 = vmax.f32 %v582, %v583
      %v585 = vrot.slane %v584, 1
      %v586 = vmax.f32 %v584, %v585
      %v587 = vsel %vm523, %v371, -inf
      %v588 = vrot.slane %v587, 4
      %v589 = vmax.f32 %v587, %v588
      %v590 = vrot.slane %v589, 2
      %v591 = vmax.f32 %v589, %v590
      %v592 = vrot.slane %v591, 1
      %v593 = vmax.f32 %v591, %v592
      %v594 = vsel %vm523, %v385, -inf
      %v595 = vrot.slane %v594, 4
      %v596 = vmax.f32 %v594, %v595
      %v597 = vrot.slane %v596, 2
      %v598 = vmax.f32 %v596, %v597
      %v599 = vrot.slane %v598, 1
      %v600 = vmax.f32 %v598, %v599
      %v601 = vsel %vm523, %v395, -inf
      %v602 = vrot.slane %v601, 4
      %v603 = vmax.f32 %v601, %v602
      %v604 = vrot.slane %v603, 2
      %v605 = vmax.f32 %v603, %v604
      %v606 = vrot.slane %v605, 1
      %v607 = vmax.f32 %v605, %v606
      %v608 = vsel %vm523, %v405, -inf
      %v609 = vrot.slane %v608, 4
      %v610 = vmax.f32 %v608, %v609
      %v611 = vrot.slane %v610, 2
      %v612 = vmax.f32 %v610, %v611
      %v613 = vrot.slane %v612, 1
      %v614 = vmax.f32 %v612, %v613
      %v615 = vsel %vm523, %v415, -inf
      %v616 = vrot.slane %v615, 4
      %v617 = vmax.f32 %v615, %v616
      %v618 = vrot.slane %v617, 2
      %v619 = vmax.f32 %v617, %v618
      %v620 = vrot.slane %v619, 1
      %v621 = vmax.f32 %v619, %v620
      %vm622 = vcmask 1046532
      %v623 = vsel %vm622, %v273, -inf
      %v624 = vrot.slane %v623, 4
      %v625 = vmax.f32 %v623, %v624
      %v626 = vrot.slane %v625, 2
      %v627 = vmax.f32 %v625, %v626
      %v628 = vrot.slane %v627, 1
      %v629 = vmax.f32 %v627, %v628
      %v630 = vsel %vm622, %v285, -inf
      %v631 = vrot.slane %v630, 4
      %v632 = vmax.f32 %v630, %v631
      %v633 = vrot.slane %v632, 2
      %v634 = vmax.f32 %v632, %v633
      %v635 = vrot.slane %v634, 1
      %v636 = vmax.f32 %v634, %v635
      %v637 = vsel %vm622, %v295, -inf
      %v638 = vrot.slane %v637, 4
      %v639 = vmax.f32 %v637, %v638
      %v640 = vrot.slane %v639, 2
      %v641 = vmax.f32 %v639, %v640
      %v642 = vrot.slane %v641, 1
      %v643 = vmax.f32 %v641, %v642
      %v644 = vsel %vm622, %v305, -inf
      %v645 = vrot.slane %v644, 4
      %v646 = vmax.f32 %v644, %v645
      %v647 = vrot.slane %v646, 2
      %v648 = vmax.f32 %v646, %v647
      %v649 = vrot.slane %v648, 1
      %v650 = vmax.f32 %v648, %v649
      %v651 = vsel %vm622, %v316, -inf
      %v652 = vrot.slane %v651, 4
      %v653 = vmax.f32 %v651, %v652
      %v654 = vrot.slane %v653, 2
      %v655 = vmax.f32 %v653, %v654
      %v656 = vrot.slane %v655, 1
      %v657 = vmax.f32 %v655, %v656
      %v658 = vsel %vm622, %v330, -inf
      %v659 = vrot.slane %v658, 4
      %v660 = vmax.f32 %v658, %v659
      %v661 = vrot.slane %v660, 2
      %v662 = vmax.f32 %v660, %v661
      %v663 = vrot.slane %v662, 1
      %v664 = vmax.f32 %v662, %v663
      %v665 = vsel %vm622, %v340, -inf
      %v666 = vrot.slane %v665, 4
      %v667 = vmax.f32 %v665, %v666
      %v668 = vrot.slane %v667, 2
      %v669 = vmax.f32 %v667, %v668
      %v670 = vrot.slane %v669, 1
      %v671 = vmax.f32 %v669, %v670
      %v672 = vsel %vm622, %v350, -inf
      %v673 = vrot.slane %v672, 4
      %v674 = vmax.f32 %v672, %v673
      %v675 = vrot.slane %v674, 2
      %v676 = vmax.f32 %v674, %v675
      %v677 = vrot.slane %v676, 1
      %v678 = vmax.f32 %v676, %v677
      %v679 = vsel %vm622, %v360, -inf
      %v680 = vrot.slane %v679, 4
      %v681 = vmax.f32 %v679, %v680
      %v682 = vrot.slane %v681, 2
      %v683 = vmax.f32 %v681, %v682
      %v684 = vrot.slane %v683, 1
      %v685 = vmax.f32 %v683, %v684
      %v686 = vsel %vm622, %v371, -inf
      %v687 = vrot.slane %v686, 4
      %v688 = vmax.f32 %v686, %v687
      %v689 = vrot.slane %v688, 2
      %v690 = vmax.f32 %v688, %v689
      %v691 = vrot.slane %v690, 1
      %v692 = vmax.f32 %v690, %v691
      %v693 = vsel %vm622, %v385, -inf
      %v694 = vrot.slane %v693, 4
      %v695 = vmax.f32 %v693, %v694
      %v696 = vrot.slane %v695, 2
      %v697 = vmax.f32 %v695, %v696
      %v698 = vrot.slane %v697, 1
      %v699 = vmax.f32 %v697, %v698
      %v700 = vsel %vm622, %v395, -inf
      %v701 = vrot.slane %v700, 4
      %v702 = vmax.f32 %v700, %v701
      %v703 = vrot.slane %v702, 2
      %v704 = vmax.f32 %v702, %v703
      %v705 = vrot.slane %v704, 1
      %v706 = vmax.f32 %v704, %v705
      %v707 = vsel %vm622, %v405, -inf
      %v708 = vrot.slane %v707, 4
      %v709 = vmax.f32 %v707, %v708
      %v710 = vrot.slane %v709, 2
      %v711 = vmax.f32 %v709, %v710
      %v712 = vrot.slane %v711, 1
      %v713 = vmax.f32 %v711, %v712
      %v714 = vsel %vm622, %v415, -inf
      %v715 = vrot.slane %v714, 4
      %v716 = vmax.f32 %v714, %v715
      %v717 = vrot.slane %v716, 2
      %v718 = vmax.f32 %v716, %v717
      %v719 = vrot.slane %v718, 1
      %v720 = vmax.f32 %v718, %v719
      %vm721 = vcmask 1047558
      %v722 = vsel %vm721, %v273, -inf
      %vm723 = vcmask 1040384
      %v724 = vsel %vm723, %v275, -inf
      %v725 = vmax.f32 %v722, %v724
      %v726 = vrot.slane %v725, 4
      %v727 = vmax.f32 %v725, %v726
      %v728 = vrot.slane %v727, 2
      %v729 = vmax.f32 %v727, %v728
      %v730 = vrot.slane %v729, 1
      %v731 = vmax.f32 %v729, %v730
      %v732 = vsel %vm721, %v285, -inf
      %v733 = vsel %vm723, %v287, -inf
      %v734 = vmax.f32 %v732, %v733
      %v735 = vrot.slane %v734, 4
      %v736 = vmax.f32 %v734, %v735
      %v737 = vrot.slane %v736, 2
      %v738 = vmax.f32 %v736, %v737
      %v739 = vrot.slane %v738, 1
      %v740 = vmax.f32 %v738, %v739
      %v741 = vsel %vm721, %v295, -inf
      %v742 = vsel %vm723, %v297, -inf
      %v743 = vmax.f32 %v741, %v742
      %v744 = vrot.slane %v743, 4
      %v745 = vmax.f32 %v743, %v744
      %v746 = vrot.slane %v745, 2
      %v747 = vmax.f32 %v745, %v746
      %v748 = vrot.slane %v747, 1
      %v749 = vmax.f32 %v747, %v748
      %v750 = vsel %vm721, %v305, -inf
      %v751 = vsel %vm723, %v307, -inf
      %v752 = vmax.f32 %v750, %v751
      %v753 = vrot.slane %v752, 4
      %v754 = vmax.f32 %v752, %v753
      %v755 = vrot.slane %v754, 2
      %v756 = vmax.f32 %v754, %v755
      %v757 = vrot.slane %v756, 1
      %v758 = vmax.f32 %v756, %v757
      %v759 = vsel %vm721, %v316, -inf
      %v760 = vsel %vm723, %v319, -inf
      %v761 = vmax.f32 %v759, %v760
      %v762 = vrot.slane %v761, 4
      %v763 = vmax.f32 %v761, %v762
      %v764 = vrot.slane %v763, 2
      %v765 = vmax.f32 %v763, %v764
      %v766 = vrot.slane %v765, 1
      %v767 = vmax.f32 %v765, %v766
      %v768 = vsel %vm721, %v330, -inf
      %v769 = vsel %vm723, %v332, -inf
      %v770 = vmax.f32 %v768, %v769
      %v771 = vrot.slane %v770, 4
      %v772 = vmax.f32 %v770, %v771
      %v773 = vrot.slane %v772, 2
      %v774 = vmax.f32 %v772, %v773
      %v775 = vrot.slane %v774, 1
      %v776 = vmax.f32 %v774, %v775
      %v777 = vsel %vm721, %v340, -inf
      %v778 = vsel %vm723, %v342, -inf
      %v779 = vmax.f32 %v777, %v778
      %v780 = vrot.slane %v779, 4
      %v781 = vmax.f32 %v779, %v780
      %v782 = vrot.slane %v781, 2
      %v783 = vmax.f32 %v781, %v782
      %v784 = vrot.slane %v783, 1
      %v785 = vmax.f32 %v783, %v784
      %v786 = vsel %vm721, %v350, -inf
      %v787 = vsel %vm723, %v352, -inf
      %v788 = vmax.f32 %v786, %v787
      %v789 = vrot.slane %v788, 4
      %v790 = vmax.f32 %v788, %v789
      %v791 = vrot.slane %v790, 2
      %v792 = vmax.f32 %v790, %v791
      %v793 = vrot.slane %v792, 1
      %v794 = vmax.f32 %v792, %v793
      %v795 = vsel %vm721, %v360, -inf
      %v796 = vsel %vm723, %v362, -inf
      %v797 = vmax.f32 %v795, %v796
      %v798 = vrot.slane %v797, 4
      %v799 = vmax.f32 %v797, %v798
      %v800 = vrot.slane %v799, 2
      %v801 = vmax.f32 %v799, %v800
      %v802 = vrot.slane %v801, 1
      %v803 = vmax.f32 %v801, %v802
      %v804 = vsel %vm721, %v371, -inf
      %v805 = vsel %vm723, %v374, -inf
      %v806 = vmax.f32 %v804, %v805
      %v807 = vrot.slane %v806, 4
      %v808 = vmax.f32 %v806, %v807
      %v809 = vrot.slane %v808, 2
      %v810 = vmax.f32 %v808, %v809
      %v811 = vrot.slane %v810, 1
      %v812 = vmax.f32 %v810, %v811
      %v813 = vsel %vm721, %v385, -inf
      %v814 = vsel %vm723, %v387, -inf
      %v815 = vmax.f32 %v813, %v814
      %v816 = vrot.slane %v815, 4
      %v817 = vmax.f32 %v815, %v816
      %v818 = vrot.slane %v817, 2
      %v819 = vmax.f32 %v817, %v818
      %v820 = vrot.slane %v819, 1
      %v821 = vmax.f32 %v819, %v820
      %v822 = vsel %vm721, %v395, -inf
      %v823 = vsel %vm723, %v397, -inf
      %v824 = vmax.f32 %v822, %v823
      %v825 = vrot.slane %v824, 4
      %v826 = vmax.f32 %v824, %v825
      %v827 = vrot.slane %v826, 2
      %v828 = vmax.f32 %v826, %v827
      %v829 = vrot.slane %v828, 1
      %v830 = vmax.f32 %v828, %v829
      %v831 = vsel %vm721, %v405, -inf
      %v832 = vsel %vm723, %v407, -inf
      %v833 = vmax.f32 %v831, %v832
      %v834 = vrot.slane %v833, 4
      %v835 = vmax.f32 %v833, %v834
      %v836 = vrot.slane %v835, 2
      %v837 = vmax.f32 %v835, %v836
      %v838 = vrot.slane %v837, 1
      %v839 = vmax.f32 %v837, %v838
      %v840 = vsel %vm721, %v415, -inf
      %v841 = vsel %vm723, %v417, -inf
      %v842 = vmax.f32 %v840, %v841
      %v843 = vrot.slane %v842, 4
      %v844 = vmax.f32 %v842, %v843
      %v845 = vrot.slane %v844, 2
      %v846 = vmax.f32 %v844, %v845
      %v847 = vrot.slane %v846, 1
      %v848 = vmax.f32 %v846, %v847
      %vm849 = vcmask 1043456
      %v850 = vsel %vm849, %v275, -inf
      %v851 = vrot.slane %v850, 4
      %v852 = vmax.f32 %v850, %v851
      %v853 = vrot.slane %v852, 2
      %v854 = vmax.f32 %v852, %v853
      %v855 = vrot.slane %v854, 1
      %v856 = vmax.f32 %v854, %v855
      %v857 = vsel %vm849, %v287, -inf
      %v858 = vrot.slane %v857, 4
      %v859 = vmax.f32 %v857, %v858
      %v860 = vrot.slane %v859, 2
      %v861 = vmax.f32 %v859, %v860
      %v862 = vrot.slane %v861, 1
      %v863 = vmax.f32 %v861, %v862
      %v864 = vsel %vm849, %v297, -inf
      %v865 = vrot.slane %v864, 4
      %v866 = vmax.f32 %v864, %v865
      %v867 = vrot.slane %v866, 2
      %v868 = vmax.f32 %v866, %v867
      %v869 = vrot.slane %v868, 1
      %v870 = vmax.f32 %v868, %v869
      %v871 = vsel %vm849, %v307, -inf
      %v872 = vrot.slane %v871, 4
      %v873 = vmax.f32 %v871, %v872
      %v874 = vrot.slane %v873, 2
      %v875 = vmax.f32 %v873, %v874
      %v876 = vrot.slane %v875, 1
      %v877 = vmax.f32 %v875, %v876
      %v878 = vsel %vm849, %v319, -inf
      %v879 = vrot.slane %v878, 4
      %v880 = vmax.f32 %v878, %v879
      %v881 = vrot.slane %v880, 2
      %v882 = vmax.f32 %v880, %v881
      %v883 = vrot.slane %v882, 1
      %v884 = vmax.f32 %v882, %v883
      %v885 = vsel %vm849, %v332, -inf
      %v886 = vrot.slane %v885, 4
      %v887 = vmax.f32 %v885, %v886
      %v888 = vrot.slane %v887, 2
      %v889 = vmax.f32 %v887, %v888
      %v890 = vrot.slane %v889, 1
      %v891 = vmax.f32 %v889, %v890
      %v892 = vsel %vm849, %v342, -inf
      %v893 = vrot.slane %v892, 4
      %v894 = vmax.f32 %v892, %v893
      %v895 = vrot.slane %v894, 2
      %v896 = vmax.f32 %v894, %v895
      %v897 = vrot.slane %v896, 1
      %v898 = vmax.f32 %v896, %v897
      %v899 = vsel %vm849, %v352, -inf
      %v900 = vrot.slane %v899, 4
      %v901 = vmax.f32 %v899, %v900
      %v902 = vrot.slane %v901, 2
      %v903 = vmax.f32 %v901, %v902
      %v904 = vrot.slane %v903, 1
      %v905 = vmax.f32 %v903, %v904
      %v906 = vsel %vm849, %v362, -inf
      %v907 = vrot.slane %v906, 4
      %v908 = vmax.f32 %v906, %v907
      %v909 = vrot.slane %v908, 2
      %v910 = vmax.f32 %v908, %v909
      %v911 = vrot.slane %v910, 1
      %v912 = vmax.f32 %v910, %v911
      %v913 = vsel %vm849, %v374, -inf
      %v914 = vrot.slane %v913, 4
      %v915 = vmax.f32 %v913, %v914
      %v916 = vrot.slane %v915, 2
      %v917 = vmax.f32 %v915, %v916
      %v918 = vrot.slane %v917, 1
      %v919 = vmax.f32 %v917, %v918
      %v920 = vsel %vm849, %v387, -inf
      %v921 = vrot.slane %v920, 4
      %v922 = vmax.f32 %v920, %v921
      %v923 = vrot.slane %v922, 2
      %v924 = vmax.f32 %v922, %v923
      %v925 = vrot.slane %v924, 1
      %v926 = vmax.f32 %v924, %v925
      %v927 = vsel %vm849, %v397, -inf
      %v928 = vrot.slane %v927, 4
      %v929 = vmax.f32 %v927, %v928
      %v930 = vrot.slane %v929, 2
      %v931 = vmax.f32 %v929, %v930
      %v932 = vrot.slane %v931, 1
      %v933 = vmax.f32 %v931, %v932
      %v934 = vsel %vm849, %v407, -inf
      %v935 = vrot.slane %v934, 4
      %v936 = vmax.f32 %v934, %v935
      %v937 = vrot.slane %v936, 2
      %v938 = vmax.f32 %v936, %v937
      %v939 = vrot.slane %v938, 1
      %v940 = vmax.f32 %v938, %v939
      %v941 = vsel %vm849, %v417, -inf
      %v942 = vrot.slane %v941, 4
      %v943 = vmax.f32 %v941, %v942
      %v944 = vrot.slane %v943, 2
      %v945 = vmax.f32 %v943, %v944
      %v946 = vrot.slane %v945, 1
      %v947 = vmax.f32 %v945, %v946
      %vm948 = vcmask 1045507
      %v949 = vsel %vm948, %v275, -inf
      %v950 = vrot.slane %v949, 4
      %v951 = vmax.f32 %v949, %v950
      %v952 = vrot.slane %v951, 2
      %v953 = vmax.f32 %v951, %v952
      %v954 = vrot.slane %v953, 1
      %v955 = vmax.f32 %v953, %v954
      %v956 = vsel %vm948, %v287, -inf
      %v957 = vrot.slane %v956, 4
      %v958 = vmax.f32 %v956, %v957
      %v959 = vrot.slane %v958, 2
      %v960 = vmax.f32 %v958, %v959
      %v961 = vrot.slane %v960, 1
      %v962 = vmax.f32 %v960, %v961
      %v963 = vsel %vm948, %v297, -inf
      %v964 = vrot.slane %v963, 4
      %v965 = vmax.f32 %v963, %v964
      %v966 = vrot.slane %v965, 2
      %v967 = vmax.f32 %v965, %v966
      %v968 = vrot.slane %v967, 1
      %v969 = vmax.f32 %v967, %v968
      %v970 = vsel %vm948, %v307, -inf
      %v971 = vrot.slane %v970, 4
      %v972 = vmax.f32 %v970, %v971
      %v973 = vrot.slane %v972, 2
      %v974 = vmax.f32 %v972, %v973
      %v975 = vrot.slane %v974, 1
      %v976 = vmax.f32 %v974, %v975
      %v977 = vsel %vm948, %v319, -inf
      %v978 = vrot.slane %v977, 4
      %v979 = vmax.f32 %v977, %v978
      %v980 = vrot.slane %v979, 2
      %v981 = vmax.f32 %v979, %v980
      %v982 = vrot.slane %v981, 1
      %v983 = vmax.f32 %v981, %v982
      %v984 = vsel %vm948, %v332, -inf
      %v985 = vrot.slane %v984, 4
      %v986 = vmax.f32 %v984, %v985
      %v987 = vrot.slane %v986, 2
      %v988 = vmax.f32 %v986, %v987
      %v989 = vrot.slane %v988, 1
      %v990 = vmax.f32 %v988, %v989
      %v991 = vsel %vm948, %v342, -inf
      %v992 = vrot.slane %v991, 4
      %v993 = vmax.f32 %v991, %v992
      %v994 = vrot.slane %v993, 2
      %v995 = vmax.f32 %v993, %v994
      %v996 = vrot.slane %v995, 1
      %v997 = vmax.f32 %v995, %v996
      %v998 = vsel %vm948, %v352, -inf
      %v999 = vrot.slane %v998, 4
      %v1000 = vmax.f32 %v998, %v999
      %v1001 = vrot.slane %v1000, 2
      %v1002 = vmax.f32 %v1000, %v1001
      %v1003 = vrot.slane %v1002, 1
      %v1004 = vmax.f32 %v1002, %v1003
      %v1005 = vsel %vm948, %v362, -inf
      %v1006 = vrot.slane %v1005, 4
      %v1007 = vmax.f32 %v1005, %v1006
      %v1008 = vrot.slane %v1007, 2
      %v1009 = vmax.f32 %v1007, %v1008
      %v1010 = vrot.slane %v1009, 1
      %v1011 = vmax.f32 %v1009, %v1010
      %v1012 = vsel %vm948, %v374, -inf
      %v1013 = vrot.slane %v1012, 4
      %v1014 = vmax.f32 %v1012, %v1013
      %v1015 = vrot.slane %v1014, 2
      %v1016 = vmax.f32 %v1014, %v1015
      %v1017 = vrot.slane %v1016, 1
      %v1018 = vmax.f32 %v1016, %v1017
      %v1019 = vsel %vm948, %v387, -inf
      %v1020 = vrot.slane %v1019, 4
      %v1021 = vmax.f32 %v1019, %v1020
      %v1022 = vrot.slane %v1021, 2
      %v1023 = vmax.f32 %v1021, %v1022
      %v1024 = vrot.slane %v1023, 1
      %v1025 = vmax.f32 %v1023, %v1024
      %v1026 = vsel %vm948, %v397, -inf
      %v1027 = vrot.slane %v1026, 4
      %v1028 = vmax.f32 %v1026, %v1027
      %v1029 = vrot.slane %v1028, 2
      %v1030 = vmax.f32 %v1028, %v1029
      %v1031 = vrot.slane %v1030, 1
      %v1032 = vmax.f32 %v1030, %v1031
      %v1033 = vsel %vm948, %v407, -inf
      %v1034 = vrot.slane %v1033, 4
      %v1035 = vmax.f32 %v1033, %v1034
      %v1036 = vrot.slane %v1035, 2
      %v1037 = vmax.f32 %v1035, %v1036
      %v1038 = vrot.slane %v1037, 1
      %v1039 = vmax.f32 %v1037, %v1038
      %v1040 = vsel %vm948, %v417, -inf
      %v1041 = vrot.slane %v1040, 4
      %v1042 = vmax.f32 %v1040, %v1041
      %v1043 = vrot.slane %v1042, 2
      %v1044 = vmax.f32 %v1042, %v1043
      %v1045 = vrot.slane %v1044, 1
      %v1046 = vmax.f32 %v1044, %v1045
      %vm1047 = vcmask 1047557
      %v1048 = vsel %vm1047, %v275, -inf
      %v1049 = vrot.slane %v1048, 4
      %v1050 = vmax.f32 %v1048, %v1049
      %v1051 = vrot.slane %v1050, 2
      %v1052 = vmax.f32 %v1050, %v1051
      %v1053 = vrot.slane %v1052, 1
      %v1054 = vmax.f32 %v1052, %v1053
      %v1055 = vsel %vm1047, %v287, -inf
      %v1056 = vrot.slane %v1055, 4
      %v1057 = vmax.f32 %v1055, %v1056
      %v1058 = vrot.slane %v1057, 2
      %v1059 = vmax.f32 %v1057, %v1058
      %v1060 = vrot.slane %v1059, 1
      %v1061 = vmax.f32 %v1059, %v1060
      %v1062 = vsel %vm1047, %v297, -inf
      %v1063 = vrot.slane %v1062, 4
      %v1064 = vmax.f32 %v1062, %v1063
      %v1065 = vrot.slane %v1064, 2
      %v1066 = vmax.f32 %v1064, %v1065
      %v1067 = vrot.slane %v1066, 1
      %v1068 = vmax.f32 %v1066, %v1067
      %v1069 = vsel %vm1047, %v307, -inf
      %v1070 = vrot.slane %v1069, 4
      %v1071 = vmax.f32 %v1069, %v1070
      %v1072 = vrot.slane %v1071, 2
      %v1073 = vmax.f32 %v1071, %v1072
      %v1074 = vrot.slane %v1073, 1
      %v1075 = vmax.f32 %v1073, %v1074
      %v1076 = vsel %vm1047, %v319, -inf
      %v1077 = vrot.slane %v1076, 4
      %v1078 = vmax.f32 %v1076, %v1077
      %v1079 = vrot.slane %v1078, 2
      %v1080 = vmax.f32 %v1078, %v1079
      %v1081 = vrot.slane %v1080, 1
      %v1082 = vmax.f32 %v1080, %v1081
      %v1083 = vsel %vm1047, %v332, -inf
      %v1084 = vrot.slane %v1083, 4
      %v1085 = vmax.f32 %v1083, %v1084
      %v1086 = vrot.slane %v1085, 2
      %v1087 = vmax.f32 %v1085, %v1086
      %v1088 = vrot.slane %v1087, 1
      %v1089 = vmax.f32 %v1087, %v1088
      %v1090 = vsel %vm1047, %v342, -inf
      %v1091 = vrot.slane %v1090, 4
      %v1092 = vmax.f32 %v1090, %v1091
      %v1093 = vrot.slane %v1092, 2
      %v1094 = vmax.f32 %v1092, %v1093
      %v1095 = vrot.slane %v1094, 1
      %v1096 = vmax.f32 %v1094, %v1095
      %v1097 = vsel %vm1047, %v352, -inf
      %v1098 = vrot.slane %v1097, 4
      %v1099 = vmax.f32 %v1097, %v1098
      %v1100 = vrot.slane %v1099, 2
      %v1101 = vmax.f32 %v1099, %v1100
      %v1102 = vrot.slane %v1101, 1
      %v1103 = vmax.f32 %v1101, %v1102
      %v1104 = vsel %vm1047, %v362, -inf
      %v1105 = vrot.slane %v1104, 4
      %v1106 = vmax.f32 %v1104, %v1105
      %v1107 = vrot.slane %v1106, 2
      %v1108 = vmax.f32 %v1106, %v1107
      %v1109 = vrot.slane %v1108, 1
      %v1110 = vmax.f32 %v1108, %v1109
      %v1111 = vsel %vm1047, %v374, -inf
      %v1112 = vrot.slane %v1111, 4
      %v1113 = vmax.f32 %v1111, %v1112
      %v1114 = vrot.slane %v1113, 2
      %v1115 = vmax.f32 %v1113, %v1114
      %v1116 = vrot.slane %v1115, 1
      %v1117 = vmax.f32 %v1115, %v1116
      %v1118 = vsel %vm1047, %v387, -inf
      %v1119 = vrot.slane %v1118, 4
      %v1120 = vmax.f32 %v1118, %v1119
      %v1121 = vrot.slane %v1120, 2
      %v1122 = vmax.f32 %v1120, %v1121
      %v1123 = vrot.slane %v1122, 1
      %v1124 = vmax.f32 %v1122, %v1123
      %v1125 = vsel %vm1047, %v397, -inf
      %v1126 = vrot.slane %v1125, 4
      %v1127 = vmax.f32 %v1125, %v1126
      %v1128 = vrot.slane %v1127, 2
      %v1129 = vmax.f32 %v1127, %v1128
      %v1130 = vrot.slane %v1129, 1
      %v1131 = vmax.f32 %v1129, %v1130
      %v1132 = vsel %vm1047, %v407, -inf
      %v1133 = vrot.slane %v1132, 4
      %v1134 = vmax.f32 %v1132, %v1133
      %v1135 = vrot.slane %v1134, 2
      %v1136 = vmax.f32 %v1134, %v1135
      %v1137 = vrot.slane %v1136, 1
      %v1138 = vmax.f32 %v1136, %v1137
      %v1139 = vsel %vm1047, %v417, -inf
      %v1140 = vrot.slane %v1139, 4
      %v1141 = vmax.f32 %v1139, %v1140
      %v1142 = vrot.slane %v1141, 2
      %v1143 = vmax.f32 %v1141, %v1142
      %v1144 = vrot.slane %v1143, 1
      %v1145 = vmax.f32 %v1143, %v1144
      %vm1146 = vcmask 1047559
      %v1147 = vsel %vm1146, %v275, -inf
      %vm1148 = vcmask 1041408
      %v1149 = vsel %vm1148, %v277, -inf
      %v1150 = vmax.f32 %v1147, %v1149
      %v1151 = vrot.slane %v1150, 4
      %v1152 = vmax.f32 %v1150, %v1151
      %v1153 = vrot.slane %v1152, 2
      %v1154 = vmax.f32 %v1152, %v1153
      %v1155 = vrot.slane %v1154, 1
      %v1156 = vmax.f32 %v1154, %v1155
      %v1157 = vsel %vm1146, %v287, -inf
      %v1158 = vsel %vm1148, %v289, -inf
      %v1159 = vmax.f32 %v1157, %v1158
      %v1160 = vrot.slane %v1159, 4
      %v1161 = vmax.f32 %v1159, %v1160
      %v1162 = vrot.slane %v1161, 2
      %v1163 = vmax.f32 %v1161, %v1162
      %v1164 = vrot.slane %v1163, 1
      %v1165 = vmax.f32 %v1163, %v1164
      %v1166 = vsel %vm1146, %v297, -inf
      %v1167 = vsel %vm1148, %v299, -inf
      %v1168 = vmax.f32 %v1166, %v1167
      %v1169 = vrot.slane %v1168, 4
      %v1170 = vmax.f32 %v1168, %v1169
      %v1171 = vrot.slane %v1170, 2
      %v1172 = vmax.f32 %v1170, %v1171
      %v1173 = vrot.slane %v1172, 1
      %v1174 = vmax.f32 %v1172, %v1173
      %v1175 = vsel %vm1146, %v307, -inf
      %v1176 = vsel %vm1148, %v309, -inf
      %v1177 = vmax.f32 %v1175, %v1176
      %v1178 = vrot.slane %v1177, 4
      %v1179 = vmax.f32 %v1177, %v1178
      %v1180 = vrot.slane %v1179, 2
      %v1181 = vmax.f32 %v1179, %v1180
      %v1182 = vrot.slane %v1181, 1
      %v1183 = vmax.f32 %v1181, %v1182
      %v1184 = vsel %vm1146, %v319, -inf
      %v1185 = vsel %vm1148, %v322, -inf
      %v1186 = vmax.f32 %v1184, %v1185
      %v1187 = vrot.slane %v1186, 4
      %v1188 = vmax.f32 %v1186, %v1187
      %v1189 = vrot.slane %v1188, 2
      %v1190 = vmax.f32 %v1188, %v1189
      %v1191 = vrot.slane %v1190, 1
      %v1192 = vmax.f32 %v1190, %v1191
      %v1193 = vsel %vm1146, %v332, -inf
      %v1194 = vsel %vm1148, %v334, -inf
      %v1195 = vmax.f32 %v1193, %v1194
      %v1196 = vrot.slane %v1195, 4
      %v1197 = vmax.f32 %v1195, %v1196
      %v1198 = vrot.slane %v1197, 2
      %v1199 = vmax.f32 %v1197, %v1198
      %v1200 = vrot.slane %v1199, 1
      %v1201 = vmax.f32 %v1199, %v1200
      %v1202 = vsel %vm1146, %v342, -inf
      %v1203 = vsel %vm1148, %v344, -inf
      %v1204 = vmax.f32 %v1202, %v1203
      %v1205 = vrot.slane %v1204, 4
      %v1206 = vmax.f32 %v1204, %v1205
      %v1207 = vrot.slane %v1206, 2
      %v1208 = vmax.f32 %v1206, %v1207
      %v1209 = vrot.slane %v1208, 1
      %v1210 = vmax.f32 %v1208, %v1209
      %v1211 = vsel %vm1146, %v352, -inf
      %v1212 = vsel %vm1148, %v354, -inf
      %v1213 = vmax.f32 %v1211, %v1212
      %v1214 = vrot.slane %v1213, 4
      %v1215 = vmax.f32 %v1213, %v1214
      %v1216 = vrot.slane %v1215, 2
      %v1217 = vmax.f32 %v1215, %v1216
      %v1218 = vrot.slane %v1217, 1
      %v1219 = vmax.f32 %v1217, %v1218
      %v1220 = vsel %vm1146, %v362, -inf
      %v1221 = vsel %vm1148, %v364, -inf
      %v1222 = vmax.f32 %v1220, %v1221
      %v1223 = vrot.slane %v1222, 4
      %v1224 = vmax.f32 %v1222, %v1223
      %v1225 = vrot.slane %v1224, 2
      %v1226 = vmax.f32 %v1224, %v1225
      %v1227 = vrot.slane %v1226, 1
      %v1228 = vmax.f32 %v1226, %v1227
      %v1229 = vsel %vm1146, %v374, -inf
      %v1230 = vsel %vm1148, %v377, -inf
      %v1231 = vmax.f32 %v1229, %v1230
      %v1232 = vrot.slane %v1231, 4
      %v1233 = vmax.f32 %v1231, %v1232
      %v1234 = vrot.slane %v1233, 2
      %v1235 = vmax.f32 %v1233, %v1234
      %v1236 = vrot.slane %v1235, 1
      %v1237 = vmax.f32 %v1235, %v1236
      %v1238 = vsel %vm1146, %v387, -inf
      %v1239 = vsel %vm1148, %v389, -inf
      %v1240 = vmax.f32 %v1238, %v1239
      %v1241 = vrot.slane %v1240, 4
      %v1242 = vmax.f32 %v1240, %v1241
      %v1243 = vrot.slane %v1242, 2
      %v1244 = vmax.f32 %v1242, %v1243
      %v1245 = vrot.slane %v1244, 1
      %v1246 = vmax.f32 %v1244, %v1245
      %v1247 = vsel %vm1146, %v397, -inf
      %v1248 = vsel %vm1148, %v399, -inf
      %v1249 = vmax.f32 %v1247, %v1248
      %v1250 = vrot.slane %v1249, 4
      %v1251 = vmax.f32 %v1249, %v1250
      %v1252 = vrot.slane %v1251, 2
      %v1253 = vmax.f32 %v1251, %v1252
      %v1254 = vrot.slane %v1253, 1
      %v1255 = vmax.f32 %v1253, %v1254
      %v1256 = vsel %vm1146, %v407, -inf
      %v1257 = vsel %vm1148, %v409, -inf
      %v1258 = vmax.f32 %v1256, %v1257
      %v1259 = vrot.slane %v1258, 4
      %v1260 = vmax.f32 %v1258, %v1259
      %v1261 = vrot.slane %v1260, 2
      %v1262 = vmax.f32 %v1260, %v1261
      %v1263 = vrot.slane %v1262, 1
      %v1264 = vmax.f32 %v1262, %v1263
      %v1265 = vsel %vm1146, %v417, -inf
      %v1266 = vsel %vm1148, %v419, -inf
      %v1267 = vmax.f32 %v1265, %v1266
      %v1268 = vrot.slane %v1267, 4
      %v1269 = vmax.f32 %v1267, %v1268
      %v1270 = vrot.slane %v1269, 2
      %v1271 = vmax.f32 %v1269, %v1270
      %v1272 = vrot.slane %v1271, 1
      %v1273 = vmax.f32 %v1271, %v1272
      %vm1274 = vcmask 1043457
      %v1275 = vsel %vm1274, %v277, -inf
      %v1276 = vrot.slane %v1275, 4
      %v1277 = vmax.f32 %v1275, %v1276
      %v1278 = vrot.slane %v1277, 2
      %v1279 = vmax.f32 %v1277, %v1278
      %v1280 = vrot.slane %v1279, 1
      %v1281 = vmax.f32 %v1279, %v1280
      %v1282 = vsel %vm1274, %v289, -inf
      %v1283 = vrot.slane %v1282, 4
      %v1284 = vmax.f32 %v1282, %v1283
      %v1285 = vrot.slane %v1284, 2
      %v1286 = vmax.f32 %v1284, %v1285
      %v1287 = vrot.slane %v1286, 1
      %v1288 = vmax.f32 %v1286, %v1287
      %v1289 = vsel %vm1274, %v299, -inf
      %v1290 = vrot.slane %v1289, 4
      %v1291 = vmax.f32 %v1289, %v1290
      %v1292 = vrot.slane %v1291, 2
      %v1293 = vmax.f32 %v1291, %v1292
      %v1294 = vrot.slane %v1293, 1
      %v1295 = vmax.f32 %v1293, %v1294
      %v1296 = vsel %vm1274, %v309, -inf
      %v1297 = vrot.slane %v1296, 4
      %v1298 = vmax.f32 %v1296, %v1297
      %v1299 = vrot.slane %v1298, 2
      %v1300 = vmax.f32 %v1298, %v1299
      %v1301 = vrot.slane %v1300, 1
      %v1302 = vmax.f32 %v1300, %v1301
      %v1303 = vsel %vm1274, %v322, -inf
      %v1304 = vrot.slane %v1303, 4
      %v1305 = vmax.f32 %v1303, %v1304
      %v1306 = vrot.slane %v1305, 2
      %v1307 = vmax.f32 %v1305, %v1306
      %v1308 = vrot.slane %v1307, 1
      %v1309 = vmax.f32 %v1307, %v1308
      %v1310 = vsel %vm1274, %v334, -inf
      %v1311 = vrot.slane %v1310, 4
      %v1312 = vmax.f32 %v1310, %v1311
      %v1313 = vrot.slane %v1312, 2
      %v1314 = vmax.f32 %v1312, %v1313
      %v1315 = vrot.slane %v1314, 1
      %v1316 = vmax.f32 %v1314, %v1315
      %v1317 = vsel %vm1274, %v344, -inf
      %v1318 = vrot.slane %v1317, 4
      %v1319 = vmax.f32 %v1317, %v1318
      %v1320 = vrot.slane %v1319, 2
      %v1321 = vmax.f32 %v1319, %v1320
      %v1322 = vrot.slane %v1321, 1
      %v1323 = vmax.f32 %v1321, %v1322
      %v1324 = vsel %vm1274, %v354, -inf
      %v1325 = vrot.slane %v1324, 4
      %v1326 = vmax.f32 %v1324, %v1325
      %v1327 = vrot.slane %v1326, 2
      %v1328 = vmax.f32 %v1326, %v1327
      %v1329 = vrot.slane %v1328, 1
      %v1330 = vmax.f32 %v1328, %v1329
      %v1331 = vsel %vm1274, %v364, -inf
      %v1332 = vrot.slane %v1331, 4
      %v1333 = vmax.f32 %v1331, %v1332
      %v1334 = vrot.slane %v1333, 2
      %v1335 = vmax.f32 %v1333, %v1334
      %v1336 = vrot.slane %v1335, 1
      %v1337 = vmax.f32 %v1335, %v1336
      %v1338 = vsel %vm1274, %v377, -inf
      %v1339 = vrot.slane %v1338, 4
      %v1340 = vmax.f32 %v1338, %v1339
      %v1341 = vrot.slane %v1340, 2
      %v1342 = vmax.f32 %v1340, %v1341
      %v1343 = vrot.slane %v1342, 1
      %v1344 = vmax.f32 %v1342, %v1343
      %v1345 = vsel %vm1274, %v389, -inf
      %v1346 = vrot.slane %v1345, 4
      %v1347 = vmax.f32 %v1345, %v1346
      %v1348 = vrot.slane %v1347, 2
      %v1349 = vmax.f32 %v1347, %v1348
      %v1350 = vrot.slane %v1349, 1
      %v1351 = vmax.f32 %v1349, %v1350
      %v1352 = vsel %vm1274, %v399, -inf
      %v1353 = vrot.slane %v1352, 4
      %v1354 = vmax.f32 %v1352, %v1353
      %v1355 = vrot.slane %v1354, 2
      %v1356 = vmax.f32 %v1354, %v1355
      %v1357 = vrot.slane %v1356, 1
      %v1358 = vmax.f32 %v1356, %v1357
      %v1359 = vsel %vm1274, %v409, -inf
      %v1360 = vrot.slane %v1359, 4
      %v1361 = vmax.f32 %v1359, %v1360
      %v1362 = vrot.slane %v1361, 2
      %v1363 = vmax.f32 %v1361, %v1362
      %v1364 = vrot.slane %v1363, 1
      %v1365 = vmax.f32 %v1363, %v1364
      %v1366 = vsel %vm1274, %v419, -inf
      %v1367 = vrot.slane %v1366, 4
      %v1368 = vmax.f32 %v1366, %v1367
      %v1369 = vrot.slane %v1368, 2
      %v1370 = vmax.f32 %v1368, %v1369
      %v1371 = vrot.slane %v1370, 1
      %v1372 = vmax.f32 %v1370, %v1371
      %vm1373 = vcmask 1046531
      %v1374 = vsel %vm1373, %v277, -inf
      %v1375 = vrot.slane %v1374, 4
      %v1376 = vmax.f32 %v1374, %v1375
      %v1377 = vrot.slane %v1376, 2
      %v1378 = vmax.f32 %v1376, %v1377
      %v1379 = vrot.slane %v1378, 1
      %v1380 = vmax.f32 %v1378, %v1379
      %v1381 = vsel %vm1373, %v289, -inf
      %v1382 = vrot.slane %v1381, 4
      %v1383 = vmax.f32 %v1381, %v1382
      %v1384 = vrot.slane %v1383, 2
      %v1385 = vmax.f32 %v1383, %v1384
      %v1386 = vrot.slane %v1385, 1
      %v1387 = vmax.f32 %v1385, %v1386
      %v1388 = vsel %vm1373, %v299, -inf
      %v1389 = vrot.slane %v1388, 4
      %v1390 = vmax.f32 %v1388, %v1389
      %v1391 = vrot.slane %v1390, 2
      %v1392 = vmax.f32 %v1390, %v1391
      %v1393 = vrot.slane %v1392, 1
      %v1394 = vmax.f32 %v1392, %v1393
      %v1395 = vsel %vm1373, %v309, -inf
      %v1396 = vrot.slane %v1395, 4
      %v1397 = vmax.f32 %v1395, %v1396
      %v1398 = vrot.slane %v1397, 2
      %v1399 = vmax.f32 %v1397, %v1398
      %v1400 = vrot.slane %v1399, 1
      %v1401 = vmax.f32 %v1399, %v1400
      %v1402 = vsel %vm1373, %v322, -inf
      %v1403 = vrot.slane %v1402, 4
      %v1404 = vmax.f32 %v1402, %v1403
      %v1405 = vrot.slane %v1404, 2
      %v1406 = vmax.f32 %v1404, %v1405
      %v1407 = vrot.slane %v1406, 1
      %v1408 = vmax.f32 %v1406, %v1407
      %v1409 = vsel %vm1373, %v334, -inf
      %v1410 = vrot.slane %v1409, 4
      %v1411 = vmax.f32 %v1409, %v1410
      %v1412 = vrot.slane %v1411, 2
      %v1413 = vmax.f32 %v1411, %v1412
      %v1414 = vrot.slane %v1413, 1
      %v1415 = vmax.f32 %v1413, %v1414
      %v1416 = vsel %vm1373, %v344, -inf
      %v1417 = vrot.slane %v1416, 4
      %v1418 = vmax.f32 %v1416, %v1417
      %v1419 = vrot.slane %v1418, 2
      %v1420 = vmax.f32 %v1418, %v1419
      %v1421 = vrot.slane %v1420, 1
      %v1422 = vmax.f32 %v1420, %v1421
      %v1423 = vsel %vm1373, %v354, -inf
      %v1424 = vrot.slane %v1423, 4
      %v1425 = vmax.f32 %v1423, %v1424
      %v1426 = vrot.slane %v1425, 2
      %v1427 = vmax.f32 %v1425, %v1426
      %v1428 = vrot.slane %v1427, 1
      %v1429 = vmax.f32 %v1427, %v1428
      %v1430 = vsel %vm1373, %v364, -inf
      %v1431 = vrot.slane %v1430, 4
      %v1432 = vmax.f32 %v1430, %v1431
      %v1433 = vrot.slane %v1432, 2
      %v1434 = vmax.f32 %v1432, %v1433
      %v1435 = vrot.slane %v1434, 1
      %v1436 = vmax.f32 %v1434, %v1435
      %v1437 = vsel %vm1373, %v377, -inf
      %v1438 = vrot.slane %v1437, 4
      %v1439 = vmax.f32 %v1437, %v1438
      %v1440 = vrot.slane %v1439, 2
      %v1441 = vmax.f32 %v1439, %v1440
      %v1442 = vrot.slane %v1441, 1
      %v1443 = vmax.f32 %v1441, %v1442
      %v1444 = vsel %vm1373, %v389, -inf
      %v1445 = vrot.slane %v1444, 4
      %v1446 = vmax.f32 %v1444, %v1445
      %v1447 = vrot.slane %v1446, 2
      %v1448 = vmax.f32 %v1446, %v1447
      %v1449 = vrot.slane %v1448, 1
      %v1450 = vmax.f32 %v1448, %v1449
      %v1451 = vsel %vm1373, %v399, -inf
      %v1452 = vrot.slane %v1451, 4
      %v1453 = vmax.f32 %v1451, %v1452
      %v1454 = vrot.slane %v1453, 2
      %v1455 = vmax.f32 %v1453, %v1454
      %v1456 = vrot.slane %v1455, 1
      %v1457 = vmax.f32 %v1455, %v1456
      %v1458 = vsel %vm1373, %v409, -inf
      %v1459 = vrot.slane %v1458, 4
      %v1460 = vmax.f32 %v1458, %v1459
      %v1461 = vrot.slane %v1460, 2
      %v1462 = vmax.f32 %v1460, %v1461
      %v1463 = vrot.slane %v1462, 1
      %v1464 = vmax.f32 %v1462, %v1463
      %v1465 = vsel %vm1373, %v419, -inf
      %v1466 = vrot.slane %v1465, 4
      %v1467 = vmax.f32 %v1465, %v1466
      %v1468 = vrot.slane %v1467, 2
      %v1469 = vmax.f32 %v1467, %v1468
      %v1470 = vrot.slane %v1469, 1
      %v1471 = vmax.f32 %v1469, %v1470
      %v1472 = vsel %vm721, %v277, -inf
      %v1473 = vsel %vm723, %v283, -inf
      %v1474 = vmax.f32 %v1472, %v1473
      %v1475 = vrot.slane %v1474, 4
      %v1476 = vmax.f32 %v1474, %v1475
      %v1477 = vrot.slane %v1476, 2
      %v1478 = vmax.f32 %v1476, %v1477
      %v1479 = vrot.slane %v1478, 1
      %v1480 = vmax.f32 %v1478, %v1479
      %v1481 = vsel %vm721, %v289, -inf
      %v1482 = vsel %vm723, %v293, -inf
      %v1483 = vmax.f32 %v1481, %v1482
      %v1484 = vrot.slane %v1483, 4
      %v1485 = vmax.f32 %v1483, %v1484
      %v1486 = vrot.slane %v1485, 2
      %v1487 = vmax.f32 %v1485, %v1486
      %v1488 = vrot.slane %v1487, 1
      %v1489 = vmax.f32 %v1487, %v1488
      %v1490 = vsel %vm721, %v299, -inf
      %v1491 = vsel %vm723, %v303, -inf
      %v1492 = vmax.f32 %v1490, %v1491
      %v1493 = vrot.slane %v1492, 4
      %v1494 = vmax.f32 %v1492, %v1493
      %v1495 = vrot.slane %v1494, 2
      %v1496 = vmax.f32 %v1494, %v1495
      %v1497 = vrot.slane %v1496, 1
      %v1498 = vmax.f32 %v1496, %v1497
      %v1499 = vsel %vm721, %v309, -inf
      %v1500 = vsel %vm723, %v313, -inf
      %v1501 = vmax.f32 %v1499, %v1500
      %v1502 = vrot.slane %v1501, 4
      %v1503 = vmax.f32 %v1501, %v1502
      %v1504 = vrot.slane %v1503, 2
      %v1505 = vmax.f32 %v1503, %v1504
      %v1506 = vrot.slane %v1505, 1
      %v1507 = vmax.f32 %v1505, %v1506
      %v1508 = vsel %vm721, %v322, -inf
      %v1509 = vsel %vm723, %v328, -inf
      %v1510 = vmax.f32 %v1508, %v1509
      %v1511 = vrot.slane %v1510, 4
      %v1512 = vmax.f32 %v1510, %v1511
      %v1513 = vrot.slane %v1512, 2
      %v1514 = vmax.f32 %v1512, %v1513
      %v1515 = vrot.slane %v1514, 1
      %v1516 = vmax.f32 %v1514, %v1515
      %v1517 = vsel %vm721, %v334, -inf
      %v1518 = vsel %vm723, %v338, -inf
      %v1519 = vmax.f32 %v1517, %v1518
      %v1520 = vrot.slane %v1519, 4
      %v1521 = vmax.f32 %v1519, %v1520
      %v1522 = vrot.slane %v1521, 2
      %v1523 = vmax.f32 %v1521, %v1522
      %v1524 = vrot.slane %v1523, 1
      %v1525 = vmax.f32 %v1523, %v1524
      %v1526 = vsel %vm721, %v344, -inf
      %v1527 = vsel %vm723, %v348, -inf
      %v1528 = vmax.f32 %v1526, %v1527
      %v1529 = vrot.slane %v1528, 4
      %v1530 = vmax.f32 %v1528, %v1529
      %v1531 = vrot.slane %v1530, 2
      %v1532 = vmax.f32 %v1530, %v1531
      %v1533 = vrot.slane %v1532, 1
      %v1534 = vmax.f32 %v1532, %v1533
      %v1535 = vsel %vm721, %v354, -inf
      %v1536 = vsel %vm723, %v358, -inf
      %v1537 = vmax.f32 %v1535, %v1536
      %v1538 = vrot.slane %v1537, 4
      %v1539 = vmax.f32 %v1537, %v1538
      %v1540 = vrot.slane %v1539, 2
      %v1541 = vmax.f32 %v1539, %v1540
      %v1542 = vrot.slane %v1541, 1
      %v1543 = vmax.f32 %v1541, %v1542
      %v1544 = vsel %vm721, %v364, -inf
      %v1545 = vsel %vm723, %v368, -inf
      %v1546 = vmax.f32 %v1544, %v1545
      %v1547 = vrot.slane %v1546, 4
      %v1548 = vmax.f32 %v1546, %v1547
      %v1549 = vrot.slane %v1548, 2
      %v1550 = vmax.f32 %v1548, %v1549
      %v1551 = vrot.slane %v1550, 1
      %v1552 = vmax.f32 %v1550, %v1551
      %v1553 = vsel %vm721, %v377, -inf
      %v1554 = vsel %vm723, %v383, -inf
      %v1555 = vmax.f32 %v1553, %v1554
      %v1556 = vrot.slane %v1555, 4
      %v1557 = vmax.f32 %v1555, %v1556
      %v1558 = vrot.slane %v1557, 2
      %v1559 = vmax.f32 %v1557, %v1558
      %v1560 = vrot.slane %v1559, 1
      %v1561 = vmax.f32 %v1559, %v1560
      %v1562 = vsel %vm721, %v389, -inf
      %v1563 = vsel %vm723, %v393, -inf
      %v1564 = vmax.f32 %v1562, %v1563
      %v1565 = vrot.slane %v1564, 4
      %v1566 = vmax.f32 %v1564, %v1565
      %v1567 = vrot.slane %v1566, 2
      %v1568 = vmax.f32 %v1566, %v1567
      %v1569 = vrot.slane %v1568, 1
      %v1570 = vmax.f32 %v1568, %v1569
      %v1571 = vsel %vm721, %v399, -inf
      %v1572 = vsel %vm723, %v403, -inf
      %v1573 = vmax.f32 %v1571, %v1572
      %v1574 = vrot.slane %v1573, 4
      %v1575 = vmax.f32 %v1573, %v1574
      %v1576 = vrot.slane %v1575, 2
      %v1577 = vmax.f32 %v1575, %v1576
      %v1578 = vrot.slane %v1577, 1
      %v1579 = vmax.f32 %v1577, %v1578
      %v1580 = vsel %vm721, %v409, -inf
      %v1581 = vsel %vm723, %v413, -inf
      %v1582 = vmax.f32 %v1580, %v1581
      %v1583 = vrot.slane %v1582, 4
      %v1584 = vmax.f32 %v1582, %v1583
      %v1585 = vrot.slane %v1584, 2
      %v1586 = vmax.f32 %v1584, %v1585
      %v1587 = vrot.slane %v1586, 1
      %v1588 = vmax.f32 %v1586, %v1587
      %v1589 = vsel %vm721, %v419, -inf
      %v1590 = vsel %vm723, %v423, -inf
      %v1591 = vmax.f32 %v1589, %v1590
      %v1592 = vrot.slane %v1591, 4
      %v1593 = vmax.f32 %v1591, %v1592
      %v1594 = vrot.slane %v1593, 2
      %v1595 = vmax.f32 %v1593, %v1594
      %v1596 = vrot.slane %v1595, 1
      %v1597 = vmax.f32 %v1595, %v1596
      %v1598 = vsel %vm424, %v283, -inf
      %v1599 = vrot.slane %v1598, 4
      %v1600 = vmax.f32 %v1598, %v1599
      %v1601 = vrot.slane %v1600, 2
      %v1602 = vmax.f32 %v1600, %v1601
      %v1603 = vrot.slane %v1602, 1
      %v1604 = vmax.f32 %v1602, %v1603
      %v1605 = vsel %vm424, %v293, -inf
      %v1606 = vrot.slane %v1605, 4
      %v1607 = vmax.f32 %v1605, %v1606
      %v1608 = vrot.slane %v1607, 2
      %v1609 = vmax.f32 %v1607, %v1608
      %v1610 = vrot.slane %v1609, 1
      %v1611 = vmax.f32 %v1609, %v1610
      %v1612 = vsel %vm424, %v303, -inf
      %v1613 = vrot.slane %v1612, 4
      %v1614 = vmax.f32 %v1612, %v1613
      %v1615 = vrot.slane %v1614, 2
      %v1616 = vmax.f32 %v1614, %v1615
      %v1617 = vrot.slane %v1616, 1
      %v1618 = vmax.f32 %v1616, %v1617
      %v1619 = vsel %vm424, %v313, -inf
      %v1620 = vrot.slane %v1619, 4
      %v1621 = vmax.f32 %v1619, %v1620
      %v1622 = vrot.slane %v1621, 2
      %v1623 = vmax.f32 %v1621, %v1622
      %v1624 = vrot.slane %v1623, 1
      %v1625 = vmax.f32 %v1623, %v1624
      %v1626 = vsel %vm424, %v328, -inf
      %v1627 = vrot.slane %v1626, 4
      %v1628 = vmax.f32 %v1626, %v1627
      %v1629 = vrot.slane %v1628, 2
      %v1630 = vmax.f32 %v1628, %v1629
      %v1631 = vrot.slane %v1630, 1
      %v1632 = vmax.f32 %v1630, %v1631
      %v1633 = vsel %vm424, %v338, -inf
      %v1634 = vrot.slane %v1633, 4
      %v1635 = vmax.f32 %v1633, %v1634
      %v1636 = vrot.slane %v1635, 2
      %v1637 = vmax.f32 %v1635, %v1636
      %v1638 = vrot.slane %v1637, 1
      %v1639 = vmax.f32 %v1637, %v1638
      %v1640 = vsel %vm424, %v348, -inf
      %v1641 = vrot.slane %v1640, 4
      %v1642 = vmax.f32 %v1640, %v1641
      %v1643 = vrot.slane %v1642, 2
      %v1644 = vmax.f32 %v1642, %v1643
      %v1645 = vrot.slane %v1644, 1
      %v1646 = vmax.f32 %v1644, %v1645
      %v1647 = vsel %vm424, %v358, -inf
      %v1648 = vrot.slane %v1647, 4
      %v1649 = vmax.f32 %v1647, %v1648
      %v1650 = vrot.slane %v1649, 2
      %v1651 = vmax.f32 %v1649, %v1650
      %v1652 = vrot.slane %v1651, 1
      %v1653 = vmax.f32 %v1651, %v1652
      %v1654 = vsel %vm424, %v368, -inf
      %v1655 = vrot.slane %v1654, 4
      %v1656 = vmax.f32 %v1654, %v1655
      %v1657 = vrot.slane %v1656, 2
      %v1658 = vmax.f32 %v1656, %v1657
      %v1659 = vrot.slane %v1658, 1
      %v1660 = vmax.f32 %v1658, %v1659
      %v1661 = vsel %vm424, %v383, -inf
      %v1662 = vrot.slane %v1661, 4
      %v1663 = vmax.f32 %v1661, %v1662
      %v1664 = vrot.slane %v1663, 2
      %v1665 = vmax.f32 %v1663, %v1664
      %v1666 = vrot.slane %v1665, 1
      %v1667 = vmax.f32 %v1665, %v1666
      %v1668 = vsel %vm424, %v393, -inf
      %v1669 = vrot.slane %v1668, 4
      %v1670 = vmax.f32 %v1668, %v1669
      %v1671 = vrot.slane %v1670, 2
      %v1672 = vmax.f32 %v1670, %v1671
      %v1673 = vrot.slane %v1672, 1
      %v1674 = vmax.f32 %v1672, %v1673
      %v1675 = vsel %vm424, %v403, -inf
      %v1676 = vrot.slane %v1675, 4
      %v1677 = vmax.f32 %v1675, %v1676
      %v1678 = vrot.slane %v1677, 2
      %v1679 = vmax.f32 %v1677, %v1678
      %v1680 = vrot.slane %v1679, 1
      %v1681 = vmax.f32 %v1679, %v1680
      %v1682 = vsel %vm424, %v413, -inf
      %v1683 = vrot.slane %v1682, 4
      %v1684 = vmax.f32 %v1682, %v1683
      %v1685 = vrot.slane %v1684, 2
      %v1686 = vmax.f32 %v1684, %v1685
      %v1687 = vrot.slane %v1686, 1
      %v1688 = vmax.f32 %v1686, %v1687
      %v1689 = vsel %vm424, %v423, -inf
      %v1690 = vrot.slane %v1689, 4
      %v1691 = vmax.f32 %v1689, %v1690
      %v1692 = vrot.slane %v1691, 2
      %v1693 = vmax.f32 %v1691, %v1692
      %v1694 = vrot.slane %v1693, 1
      %v1695 = vmax.f32 %v1693, %v1694
      %v1696 = vsel %vm523, %v283, -inf
      %v1697 = vrot.slane %v1696, 4
      %v1698 = vmax.f32 %v1696, %v1697
      %v1699 = vrot.slane %v1698, 2
      %v1700 = vmax.f32 %v1698, %v1699
      %v1701 = vrot.slane %v1700, 1
      %v1702 = vmax.f32 %v1700, %v1701
      %v1703 = vsel %vm523, %v293, -inf
      %v1704 = vrot.slane %v1703, 4
      %v1705 = vmax.f32 %v1703, %v1704
      %v1706 = vrot.slane %v1705, 2
      %v1707 = vmax.f32 %v1705, %v1706
      %v1708 = vrot.slane %v1707, 1
      %v1709 = vmax.f32 %v1707, %v1708
      %v1710 = vsel %vm523, %v303, -inf
      %v1711 = vrot.slane %v1710, 4
      %v1712 = vmax.f32 %v1710, %v1711
      %v1713 = vrot.slane %v1712, 2
      %v1714 = vmax.f32 %v1712, %v1713
      %v1715 = vrot.slane %v1714, 1
      %v1716 = vmax.f32 %v1714, %v1715
      %v1717 = vsel %vm523, %v313, -inf
      %v1718 = vrot.slane %v1717, 4
      %v1719 = vmax.f32 %v1717, %v1718
      %v1720 = vrot.slane %v1719, 2
      %v1721 = vmax.f32 %v1719, %v1720
      %v1722 = vrot.slane %v1721, 1
      %v1723 = vmax.f32 %v1721, %v1722
      %v1724 = vsel %vm523, %v328, -inf
      %v1725 = vrot.slane %v1724, 4
      %v1726 = vmax.f32 %v1724, %v1725
      %v1727 = vrot.slane %v1726, 2
      %v1728 = vmax.f32 %v1726, %v1727
      %v1729 = vrot.slane %v1728, 1
      %v1730 = vmax.f32 %v1728, %v1729
      %v1731 = vsel %vm523, %v338, -inf
      %v1732 = vrot.slane %v1731, 4
      %v1733 = vmax.f32 %v1731, %v1732
      %v1734 = vrot.slane %v1733, 2
      %v1735 = vmax.f32 %v1733, %v1734
      %v1736 = vrot.slane %v1735, 1
      %v1737 = vmax.f32 %v1735, %v1736
      %v1738 = vsel %vm523, %v348, -inf
      %v1739 = vrot.slane %v1738, 4
      %v1740 = vmax.f32 %v1738, %v1739
      %v1741 = vrot.slane %v1740, 2
      %v1742 = vmax.f32 %v1740, %v1741
      %v1743 = vrot.slane %v1742, 1
      %v1744 = vmax.f32 %v1742, %v1743
      %v1745 = vsel %vm523, %v358, -inf
      %v1746 = vrot.slane %v1745, 4
      %v1747 = vmax.f32 %v1745, %v1746
      %v1748 = vrot.slane %v1747, 2
      %v1749 = vmax.f32 %v1747, %v1748
      %v1750 = vrot.slane %v1749, 1
      %v1751 = vmax.f32 %v1749, %v1750
      %v1752 = vsel %vm523, %v368, -inf
      %v1753 = vrot.slane %v1752, 4
      %v1754 = vmax.f32 %v1752, %v1753
      %v1755 = vrot.slane %v1754, 2
      %v1756 = vmax.f32 %v1754, %v1755
      %v1757 = vrot.slane %v1756, 1
      %v1758 = vmax.f32 %v1756, %v1757
      %v1759 = vsel %vm523, %v383, -inf
      %v1760 = vrot.slane %v1759, 4
      %v1761 = vmax.f32 %v1759, %v1760
      %v1762 = vrot.slane %v1761, 2
      %v1763 = vmax.f32 %v1761, %v1762
      %v1764 = vrot.slane %v1763, 1
      %v1765 = vmax.f32 %v1763, %v1764
      %v1766 = vsel %vm523, %v393, -inf
      %v1767 = vrot.slane %v1766, 4
      %v1768 = vmax.f32 %v1766, %v1767
      %v1769 = vrot.slane %v1768, 2
      %v1770 = vmax.f32 %v1768, %v1769
      %v1771 = vrot.slane %v1770, 1
      %v1772 = vmax.f32 %v1770, %v1771
      %v1773 = vsel %vm523, %v403, -inf
      %v1774 = vrot.slane %v1773, 4
      %v1775 = vmax.f32 %v1773, %v1774
      %v1776 = vrot.slane %v1775, 2
      %v1777 = vmax.f32 %v1775, %v1776
      %v1778 = vrot.slane %v1777, 1
      %v1779 = vmax.f32 %v1777, %v1778
      %v1780 = vsel %vm523, %v413, -inf
      %v1781 = vrot.slane %v1780, 4
      %v1782 = vmax.f32 %v1780, %v1781
      %v1783 = vrot.slane %v1782, 2
      %v1784 = vmax.f32 %v1782, %v1783
      %v1785 = vrot.slane %v1784, 1
      %v1786 = vmax.f32 %v1784, %v1785
      %v1787 = vsel %vm523, %v423, -inf
      %v1788 = vrot.slane %v1787, 4
      %v1789 = vmax.f32 %v1787, %v1788
      %v1790 = vrot.slane %v1789, 2
      %v1791 = vmax.f32 %v1789, %v1790
      %v1792 = vrot.slane %v1791, 1
      %v1793 = vmax.f32 %v1791, %v1792
      %v1794 = vsel %vm622, %v283, -inf
      %v1795 = vrot.slane %v1794, 4
      %v1796 = vmax.f32 %v1794, %v1795
      %v1797 = vrot.slane %v1796, 2
      %v1798 = vmax.f32 %v1796, %v1797
      %v1799 = vrot.slane %v1798, 1
      %v1800 = vmax.f32 %v1798, %v1799
      %v1801 = vsel %vm622, %v293, -inf
      %v1802 = vrot.slane %v1801, 4
      %v1803 = vmax.f32 %v1801, %v1802
      %v1804 = vrot.slane %v1803, 2
      %v1805 = vmax.f32 %v1803, %v1804
      %v1806 = vrot.slane %v1805, 1
      %v1807 = vmax.f32 %v1805, %v1806
      %v1808 = vsel %vm622, %v303, -inf
      %v1809 = vrot.slane %v1808, 4
      %v1810 = vmax.f32 %v1808, %v1809
      %v1811 = vrot.slane %v1810, 2
      %v1812 = vmax.f32 %v1810, %v1811
      %v1813 = vrot.slane %v1812, 1
      %v1814 = vmax.f32 %v1812, %v1813
      %v1815 = vsel %vm622, %v313, -inf
      %v1816 = vrot.slane %v1815, 4
      %v1817 = vmax.f32 %v1815, %v1816
      %v1818 = vrot.slane %v1817, 2
      %v1819 = vmax.f32 %v1817, %v1818
      %v1820 = vrot.slane %v1819, 1
      %v1821 = vmax.f32 %v1819, %v1820
      %v1822 = vsel %vm622, %v328, -inf
      %v1823 = vrot.slane %v1822, 4
      %v1824 = vmax.f32 %v1822, %v1823
      %v1825 = vrot.slane %v1824, 2
      %v1826 = vmax.f32 %v1824, %v1825
      %v1827 = vrot.slane %v1826, 1
      %v1828 = vmax.f32 %v1826, %v1827
      %v1829 = vsel %vm622, %v338, -inf
      %v1830 = vrot.slane %v1829, 4
      %v1831 = vmax.f32 %v1829, %v1830
      %v1832 = vrot.slane %v1831, 2
      %v1833 = vmax.f32 %v1831, %v1832
      %v1834 = vrot.slane %v1833, 1
      %v1835 = vmax.f32 %v1833, %v1834
      %v1836 = vsel %vm622, %v348, -inf
      %v1837 = vrot.slane %v1836, 4
      %v1838 = vmax.f32 %v1836, %v1837
      %v1839 = vrot.slane %v1838, 2
      %v1840 = vmax.f32 %v1838, %v1839
      %v1841 = vrot.slane %v1840, 1
      %v1842 = vmax.f32 %v1840, %v1841
      %v1843 = vsel %vm622, %v358, -inf
      %v1844 = vrot.slane %v1843, 4
      %v1845 = vmax.f32 %v1843, %v1844
      %v1846 = vrot.slane %v1845, 2
      %v1847 = vmax.f32 %v1845, %v1846
      %v1848 = vrot.slane %v1847, 1
      %v1849 = vmax.f32 %v1847, %v1848
      %v1850 = vsel %vm622, %v368, -inf
      %v1851 = vrot.slane %v1850, 4
      %v1852 = vmax.f32 %v1850, %v1851
      %v1853 = vrot.slane %v1852, 2
      %v1854 = vmax.f32 %v1852, %v1853
      %v1855 = vrot.slane %v1854, 1
      %v1856 = vmax.f32 %v1854, %v1855
      %v1857 = vsel %vm622, %v383, -inf
      %v1858 = vrot.slane %v1857, 4
      %v1859 = vmax.f32 %v1857, %v1858
      %v1860 = vrot.slane %v1859, 2
      %v1861 = vmax.f32 %v1859, %v1860
      %v1862 = vrot.slane %v1861, 1
      %v1863 = vmax.f32 %v1861, %v1862
      %v1864 = vsel %vm622, %v393, -inf
      %v1865 = vrot.slane %v1864, 4
      %v1866 = vmax.f32 %v1864, %v1865
      %v1867 = vrot.slane %v1866, 2
      %v1868 = vmax.f32 %v1866, %v1867
      %v1869 = vrot.slane %v1868, 1
      %v1870 = vmax.f32 %v1868, %v1869
      %v1871 = vsel %vm622, %v403, -inf
      %v1872 = vrot.slane %v1871, 4
      %v1873 = vmax.f32 %v1871, %v1872
      %v1874 = vrot.slane %v1873, 2
      %v1875 = vmax.f32 %v1873, %v1874
      %v1876 = vrot.slane %v1875, 1
      %v1877 = vmax.f32 %v1875, %v1876
      %v1878 = vsel %vm622, %v413, -inf
      %v1879 = vrot.slane %v1878, 4
      %v1880 = vmax.f32 %v1878, %v1879
      %v1881 = vrot.slane %v1880, 2
      %v1882 = vmax.f32 %v1880, %v1881
      %v1883 = vrot.slane %v1882, 1
      %v1884 = vmax.f32 %v1882, %v1883
      %v1885 = vsel %vm622, %v423, -inf
      %v1886 = vrot.slane %v1885, 4
      %v1887 = vmax.f32 %v1885, %v1886
      %v1888 = vrot.slane %v1887, 2
      %v1889 = vmax.f32 %v1887, %v1888
      %v1890 = vrot.slane %v1889, 1
      %v1891 = vmax.f32 %v1889, %v1890
      %v1892 = vsel %vm723, %v431, %v530
      %v1893 = vsel %vm723, %v438, %v537
      %v1894 = vsel %vm723, %v445, %v544
      %v1895 = vsel %vm723, %v452, %v551
      %v1896 = vsel %vm723, %v459, %v558
      %v1897 = vsel %vm723, %v466, %v565
      %v1898 = vsel %vm723, %v473, %v572
      %v1899 = vsel %vm723, %v480, %v579
      %v1900 = vsel %vm723, %v487, %v586
      %v1901 = vsel %vm723, %v494, %v593
      %v1902 = vsel %vm723, %v501, %v600
      %v1903 = vsel %vm723, %v508, %v607
      %v1904 = vsel %vm723, %v515, %v614
      %v1905 = vsel %vm723, %v522, %v621
      %v1906 = vsel %vm1148, %v1892, %v629
      %v1907 = vsel %vm1148, %v1893, %v636
      %v1908 = vsel %vm1148, %v1894, %v643
      %v1909 = vsel %vm1148, %v1895, %v650
      %v1910 = vsel %vm1148, %v1896, %v657
      %v1911 = vsel %vm1148, %v1897, %v664
      %v1912 = vsel %vm1148, %v1898, %v671
      %v1913 = vsel %vm1148, %v1899, %v678
      %v1914 = vsel %vm1148, %v1900, %v685
      %v1915 = vsel %vm1148, %v1901, %v692
      %v1916 = vsel %vm1148, %v1902, %v699
      %v1917 = vsel %vm1148, %v1903, %v706
      %v1918 = vsel %vm1148, %v1904, %v713
      %v1919 = vsel %vm1148, %v1905, %v720
      %v1920 = vsel %vm424, %v1906, %v731
      %v1921 = vsel %vm424, %v1907, %v740
      %v1922 = vsel %vm424, %v1908, %v749
      %v1923 = vsel %vm424, %v1909, %v758
      %v1924 = vsel %vm424, %v1910, %v767
      %v1925 = vsel %vm424, %v1911, %v776
      %v1926 = vsel %vm424, %v1912, %v785
      %v1927 = vsel %vm424, %v1913, %v794
      %v1928 = vsel %vm424, %v1914, %v803
      %v1929 = vsel %vm424, %v1915, %v812
      %v1930 = vsel %vm424, %v1916, %v821
      %v1931 = vsel %vm424, %v1917, %v830
      %v1932 = vsel %vm424, %v1918, %v839
      %v1933 = vsel %vm424, %v1919, %v848
      %v1934 = vsel %vm849, %v1920, %v856
      %v1935 = vsel %vm849, %v1921, %v863
      %v1936 = vsel %vm849, %v1922, %v870
      %v1937 = vsel %vm849, %v1923, %v877
      %v1938 = vsel %vm849, %v1924, %v884
      %v1939 = vsel %vm849, %v1925, %v891
      %v1940 = vsel %vm849, %v1926, %v898
      %v1941 = vsel %vm849, %v1927, %v905
      %v1942 = vsel %vm849, %v1928, %v912
      %v1943 = vsel %vm849, %v1929, %v919
      %v1944 = vsel %vm849, %v1930, %v926
      %v1945 = vsel %vm849, %v1931, %v933
      %v1946 = vsel %vm849, %v1932, %v940
      %v1947 = vsel %vm849, %v1933, %v947
      %vm1948 = vcmask 1044480
      %v1949 = vsel %vm1948, %v1934, %v955
      %v1950 = vsel %vm1948, %v1935, %v962
      %v1951 = vsel %vm1948, %v1936, %v969
      %v1952 = vsel %vm1948, %v1937, %v976
      %v1953 = vsel %vm1948, %v1938, %v983
      %v1954 = vsel %vm1948, %v1939, %v990
      %v1955 = vsel %vm1948, %v1940, %v997
      %v1956 = vsel %vm1948, %v1941, %v1004
      %v1957 = vsel %vm1948, %v1942, %v1011
      %v1958 = vsel %vm1948, %v1943, %v1018
      %v1959 = vsel %vm1948, %v1944, %v1025
      %v1960 = vsel %vm1948, %v1945, %v1032
      %v1961 = vsel %vm1948, %v1946, %v1039
      %v1962 = vsel %vm1948, %v1947, %v1046
      %vm1963 = vcmask 1045504
      %v1964 = vsel %vm1963, %v1949, %v1054
      %v1965 = vsel %vm1963, %v1950, %v1061
      %v1966 = vsel %vm1963, %v1951, %v1068
      %v1967 = vsel %vm1963, %v1952, %v1075
      %v1968 = vsel %vm1963, %v1953, %v1082
      %v1969 = vsel %vm1963, %v1954, %v1089
      %v1970 = vsel %vm1963, %v1955, %v1096
      %v1971 = vsel %vm1963, %v1956, %v1103
      %v1972 = vsel %vm1963, %v1957, %v1110
      %v1973 = vsel %vm1963, %v1958, %v1117
      %v1974 = vsel %vm1963, %v1959, %v1124
      %v1975 = vsel %vm1963, %v1960, %v1131
      %v1976 = vsel %vm1963, %v1961, %v1138
      %v1977 = vsel %vm1963, %v1962, %v1145
      %v1978 = vsel %vm278, %v1964, %v1156
      %v1979 = vsel %vm278, %v1965, %v1165
      %v1980 = vsel %vm278, %v1966, %v1174
      %v1981 = vsel %vm278, %v1967, %v1183
      %v1982 = vsel %vm278, %v1968, %v1192
      %v1983 = vsel %vm278, %v1969, %v1201
      %v1984 = vsel %vm278, %v1970, %v1210
      %v1985 = vsel %vm278, %v1971, %v1219
      %v1986 = vsel %vm278, %v1972, %v1228
      %v1987 = vsel %vm278, %v1973, %v1237
      %v1988 = vsel %vm278, %v1974, %v1246
      %v1989 = vsel %vm278, %v1975, %v1255
      %v1990 = vsel %vm278, %v1976, %v1264
      %v1991 = vsel %vm278, %v1977, %v1273
      %v1992 = vsel %vm723, %v1281, %v1380
      %v1993 = vsel %vm723, %v1288, %v1387
      %v1994 = vsel %vm723, %v1295, %v1394
      %v1995 = vsel %vm723, %v1302, %v1401
      %v1996 = vsel %vm723, %v1309, %v1408
      %v1997 = vsel %vm723, %v1316, %v1415
      %v1998 = vsel %vm723, %v1323, %v1422
      %v1999 = vsel %vm723, %v1330, %v1429
      %v2000 = vsel %vm723, %v1337, %v1436
      %v2001 = vsel %vm723, %v1344, %v1443
      %v2002 = vsel %vm723, %v1351, %v1450
      %v2003 = vsel %vm723, %v1358, %v1457
      %v2004 = vsel %vm723, %v1365, %v1464
      %v2005 = vsel %vm723, %v1372, %v1471
      %v2006 = vsel %vm1148, %v1992, %v1480
      %v2007 = vsel %vm1148, %v1993, %v1489
      %v2008 = vsel %vm1148, %v1994, %v1498
      %v2009 = vsel %vm1148, %v1995, %v1507
      %v2010 = vsel %vm1148, %v1996, %v1516
      %v2011 = vsel %vm1148, %v1997, %v1525
      %v2012 = vsel %vm1148, %v1998, %v1534
      %v2013 = vsel %vm1148, %v1999, %v1543
      %v2014 = vsel %vm1148, %v2000, %v1552
      %v2015 = vsel %vm1148, %v2001, %v1561
      %v2016 = vsel %vm1148, %v2002, %v1570
      %v2017 = vsel %vm1148, %v2003, %v1579
      %v2018 = vsel %vm1148, %v2004, %v1588
      %v2019 = vsel %vm1148, %v2005, %v1597
      %v2020 = vsel %vm424, %v2006, %v1604
      %v2021 = vsel %vm424, %v2007, %v1611
      %v2022 = vsel %vm424, %v2008, %v1618
      %v2023 = vsel %vm424, %v2009, %v1625
      %v2024 = vsel %vm424, %v2010, %v1632
      %v2025 = vsel %vm424, %v2011, %v1639
      %v2026 = vsel %vm424, %v2012, %v1646
      %v2027 = vsel %vm424, %v2013, %v1653
      %v2028 = vsel %vm424, %v2014, %v1660
      %v2029 = vsel %vm424, %v2015, %v1667
      %v2030 = vsel %vm424, %v2016, %v1674
      %v2031 = vsel %vm424, %v2017, %v1681
      %v2032 = vsel %vm424, %v2018, %v1688
      %v2033 = vsel %vm424, %v2019, %v1695
      %v2034 = vsel %vm849, %v2020, %v1702
      %v2035 = vsel %vm849, %v2021, %v1709
      %v2036 = vsel %vm849, %v2022, %v1716
      %v2037 = vsel %vm849, %v2023, %v1723
      %v2038 = vsel %vm849, %v2024, %v1730
      %v2039 = vsel %vm849, %v2025, %v1737
      %v2040 = vsel %vm849, %v2026, %v1744
      %v2041 = vsel %vm849, %v2027, %v1751
      %v2042 = vsel %vm849, %v2028, %v1758
      %v2043 = vsel %vm849, %v2029, %v1765
      %v2044 = vsel %vm849, %v2030, %v1772
      %v2045 = vsel %vm849, %v2031, %v1779
      %v2046 = vsel %vm849, %v2032, %v1786
      %v2047 = vsel %vm849, %v2033, %v1793
      %v2048 = vsel %vm1948, %v2034, %v1800
      %v2049 = vsel %vm1948, %v2035, %v1807
      %v2050 = vsel %vm1948, %v2036, %v1814
      %v2051 = vsel %vm1948, %v2037, %v1821
      %v2052 = vsel %vm1948, %v2038, %v1828
      %v2053 = vsel %vm1948, %v2039, %v1835
      %v2054 = vsel %vm1948, %v2040, %v1842
      %v2055 = vsel %vm1948, %v2041, %v1849
      %v2056 = vsel %vm1948, %v2042, %v1856
      %v2057 = vsel %vm1948, %v2043, %v1863
      %v2058 = vsel %vm1948, %v2044, %v1870
      %v2059 = vsel %vm1948, %v2045, %v1877
      %v2060 = vsel %vm1948, %v2046, %v1884
      %v2061 = vsel %vm1948, %v2047, %v1891
      %2062 = vst [vmem:[%s147] sm:$0xff] %v1978
      %2063 = vst [vmem:[%s147 + $0x8] sm:$0x3f] %v2048
      %2064 = vst [vmem:[%s147 + $0x10] sm:$0xff] %v1979
      %2065 = vst [vmem:[%s147 + $0x18] sm:$0x3f] %v2049
      %2066 = vst [vmem:[%s147 + $0x20] sm:$0xff] %v1980
      %2067 = vst [vmem:[%s147 + $0x28] sm:$0x3f] %v2050
      %2068 = vst [vmem:[%s147 + $0x30] sm:$0xff] %v1981
      %2069 = vst [vmem:[%s147 + $0x38] sm:$0x3f] %v2051
      %2070 = vst [vmem:[%s147 + $0x40] sm:$0xff] %v1982
      %2071 = vst [vmem:[%s147 + $0x48] sm:$0x3f] %v2052
      %2072 = vst [vmem:[%s147 + $0x50] sm:$0xff] %v1983
      %2073 = vst [vmem:[%s147 + $0x58] sm:$0x3f] %v2053
      %2074 = vst [vmem:[%s147 + $0x60] sm:$0xff] %v1984
      %2075 = vst [vmem:[%s147 + $0x68] sm:$0x3f] %v2054
      %2076 = vst [vmem:[%s147 + $0x70] sm:$0xff] %v1985
      %2077 = vst [vmem:[%s147 + $0x78] sm:$0x3f] %v2055
      %2078 = vst [vmem:[%s147 + $0x80] sm:$0xff] %v1986
      %2079 = vst [vmem:[%s147 + $0x88] sm:$0x3f] %v2056
      %2080 = vst [vmem:[%s147 + $0x90] sm:$0xff] %v1987
      %2081 = vst [vmem:[%s147 + $0x98] sm:$0x3f] %v2057
      %2082 = vst [vmem:[%s147 + $0xa0] sm:$0xff] %v1988
      %2083 = vst [vmem:[%s147 + $0xa8] sm:$0x3f] %v2058
      %2084 = vst [vmem:[%s147 + $0xb0] sm:$0xff] %v1989
      %2085 = vst [vmem:[%s147 + $0xb8] sm:$0x3f] %v2059
      %2086 = vst [vmem:[%s147 + $0xc0] sm:$0xff] %v1990
      %2087 = vst [vmem:[%s147 + $0xc8] sm:$0x3f] %v2060
      %2088 = vst [vmem:[%s147 + $0xd0] sm:$0xff] %v1991
      %2089 = vst [vmem:[%s147 + $0xd8] sm:$0x3f] %v2061
      %p2090 = scmp.lt.s32.totalorder %s16, 1
      %s2091 = scalar_select %p2090, %s16, 1
      %p2092 = scmp.lt.s32.totalorder %s17, 0
      %s2093 = scalar_select %p2092, %s17, 0
      %s2094 = smul.addr %s2091, 28
      %s2095 = sadd.s32 %s2093, %s2094
      %s2096 = smul.addr %s2095, 8
      %s2097 = scalar_lea.vmem %s1, %s2096
      // Predicated region
      $region25: #{_encoder_forward.3} parent=23 // pred_check
        %p2098 = pneg %p72
      $region26: #{_encoder_forward.3} parent=23 // pred_check_branch
        %2100 = sbr.rel (%p2098) target = $region28
      $region27: #{_encoder_forward.3} parent=23 // pred_region
        _
      $region28: #{_encoder_forward.3} parent=23 // pred_fallthru
        _
    $region24: #{_encoder_forward.3} parent=5 // pred_fallthru
      _
    %p2101 = scmp.le.s32.totalorder 2, %s7
    // Predicated region
    $region29: #{_encoder_forward.3} parent=5 // pred_check
      %p2102 = pneg %p2101
    $region30: #{_encoder_forward.3} parent=5 // pred_check_branch
      %2104 = sbr.rel (%p2102) target = $region32
    $region31: #{_encoder_forward.3} parent=5 // pred_region
      %s2105 = ssub.s32 %s7, 2
      // Predicated region
      $region33: #{_encoder_forward.3} parent=31 // pred_check
        %p2106 = pneg %p78
      $region34: #{_encoder_forward.3} parent=31 // pred_check_branch
        %2108 = sbr.rel (%p2106) target = $region36
      $region35: #{_encoder_forward.3} parent=31 // pred_region
        %p2109 = scmp.lt.s32.totalorder %s18, 1
        %s2110 = scalar_select %p2109, %s18, 1
        %p2111 = scmp.lt.s32.totalorder %s19, 0
        %s2112 = scalar_select %p2111, %s19, 0
        %s2113 = smul.addr %s2110, 28
        %s2114 = sadd.s32 %s2112, %s2113
        %s2115 = smul.addr %s2114, 8
        %s2116 = scalar_lea.vmem %s1, %s2115
      $region36: #{_encoder_forward.3} parent=31 // pred_fallthru
        _
    $region32: #{_encoder_forward.3} parent=5 // pred_fallthru
      _
  $region6: #{_encoder_forward.3} parent=0 // loop_footer
    %s11 = sadd.s32 1, %s7
  $region7: #{_encoder_forward.3} parent=0 // loop_footer_branch
    %6 = sbr.rel target = $region3
  $region8: #{_encoder_forward.3} parent=0 // loop_exit
    _

</llo_original>
